<compile_context>
chip_gen: v6e
topology: v6e:2x2x1
jax: 0.10.0
libtpu: 0.0.40
codegen_flags: <defaults>
</compile_context>

<pallas_src>
import numpy as np
import jax
import jax.numpy as jnp
from jax.experimental import pallas as pl
from jax.experimental.pallas import tpu as pltpu


def _round_up(x, m):
    return (x + m - 1) // m * m


def _make_dense_block_kernel(layer_cp, G_p, H, W, offset, pad_len):
    """Fused DenseBlock kernel body; grid iterates over the batch dim.

    layer_cp[l] = padded input-channel count of layer l (multiple of 8).
    """
    L = len(layer_cp)
    HW = H * W
    C_scr = layer_cp[-1]          # channels consumed by the last layer

    def kernel(*refs):
        x_ref = refs[0]                       # (1, C_in_p, HW)   f32
        ml_ref = refs[1]                      # (1, HW)           f32  (dj=-1 mask)
        mr_ref = refs[2]                      # (1, HW)           f32  (dj=+1 mask)
        param_refs = refs[3:3 + 3 * L]        # per layer: scale, shift, w
        out_ref = refs[3 + 3 * L]             # (1, C_out_p, HW)  f32
        ypad_ref = refs[4 + 3 * L]            # (C_scr, pad_len)  bf16 scratch

        C_in_p = layer_cp[0]

        # Seed the resident activation block with the (channel-padded) input.
        # The growing activation stays in this VMEM block for the whole layer
        # loop; each layer only appends G_p channels.
        out_ref[0, 0:C_in_p, :] = x_ref[0]

        # Zero only the halo regions of the padded scratch (the interior is
        # fully overwritten by every layer before it is read).  Done every
        # grid step on purpose: scratch is per-TensorCore, so a
        # program_id == 0 guard would be wrong under megacore sharding.
        ypad_ref[:, 0:offset] = jnp.zeros((C_scr, offset), jnp.bfloat16)
        ypad_ref[:, offset + HW:pad_len] = jnp.zeros(
            (C_scr, pad_len - offset - HW), jnp.bfloat16)

        mask_l = ml_ref[...]                  # zero where col == 0      (dj=-1)
        mask_r = mr_ref[...]                  # zero where col == W - 1  (dj=+1)

        for l in range(L):
            Cp = layer_cp[l]
            scale = param_refs[3 * l][...]        # (Cp, 1)      f32
            shift = param_refs[3 * l + 1][...]    # (Cp, 1)      f32
            w_ref = param_refs[3 * l + 2]         # (9, G_p, Cp) bf16

            # Folded BatchNorm + ReLU in f32 on the VPU; pack to bf16 only at
            # the single aligned interior write.
            xc = out_ref[0, 0:Cp, :]                               # (Cp, HW)
            y = jnp.maximum(xc * scale + shift, 0.0)
            ypad_ref[0:Cp, offset:offset + HW] = y.astype(jnp.bfloat16)

            # 3x3 conv = 9 MXU dots on shifted windows of the row-padded,
            # flattened activation.  Row shifts come from the zero pad rows;
            # column wrap-around is removed by masking the (G_p, HW) result.
            acc = None
            for di in (-1, 0, 1):
                for dj in (-1, 0, 1):
                    t = (di + 1) * 3 + (dj + 1)
                    start = offset + di * W + dj
                    y_win = ypad_ref[0:Cp, start:start + HW]       # (Cp, HW) bf16
                    part = jnp.dot(w_ref[t], y_win,
                                   preferred_element_type=jnp.float32)
                    if dj == -1:
                        part = part * mask_l
                    elif dj == 1:
                        part = part * mask_r
                    acc = part if acc is None else acc + part

            # Append this layer's (padded) growth channels: sublane-aligned,
            # lane-dense, unmasked store.
            out_ref[0, Cp:Cp + G_p, :] = acc
            # TODO(synk): dropout (dropRate > 0) would go here; default 0.0.

    return kernel


def dense_block_pallas(x_nchw, params):
    """Fused DenseBlock: x (N, C_in, H, W) f32 -> (N, C_in + L*G, H, W) f32."""
    N, C_in, H, W = x_nchw.shape
    HW = H * W
    L = len(params)
    G = params[0][2].shape[-1]

    C_in_p = _round_up(C_in, 8)
    G_p = _round_up(G, 8)
    C_out_p = C_in_p + L * G_p
    layer_cp = tuple(C_in_p + l * G_p for l in range(L))
    C_scr = layer_cp[-1]

    # Flattened-spatial padded buffer geometry: image pixel (i, j) lives at
    # lane  offset + i*W + j ; one zero row above/below handles the kh shifts.
    offset = _round_up(W + 1, 128)
    pad_len = _round_up(offset + HW + W + 1, 128)

    def pad_pos(c):
        # real concatenated channel -> position in the sublane-padded layout
        if c < C_in:
            return c
        lo, r = divmod(c - C_in, G)
        return C_in_p + lo * G_p + r

    # Column-wrap masks (constant, built on host, lane-dense).
    col = np.arange(HW, dtype=np.int32) % W
    mask_l = jnp.asarray((col != 0).astype(np.float32)).reshape(1, HW)
    mask_r = jnp.asarray((col != W - 1).astype(np.float32)).reshape(1, HW)

    in_specs = [
        pl.BlockSpec((1, C_in_p, HW), lambda n: (n, 0, 0)),
        pl.BlockSpec((1, HW), lambda n: (0, 0)),
        pl.BlockSpec((1, HW), lambda n: (0, 0)),
    ]
    flat_params = []
    flops = 0
    bytes_accessed = N * HW * (C_in_p + C_out_p) * 4

    for l, (scale, shift, w_flat) in enumerate(params):
        C = C_in + l * G
        Cp = layer_cp[l]

        inv = np.zeros((Cp,), np.int32)
        valid = np.zeros((Cp,), np.float32)
        for c in range(C):
            p = pad_pos(c)
            inv[p] = c
            valid[p] = 1.0
        inv = jnp.asarray(inv)
        valid = jnp.asarray(valid)

        scale_p = (scale[inv] * valid).reshape(Cp, 1).astype(jnp.float32)
        shift_p = (shift[inv] * valid).reshape(Cp, 1).astype(jnp.float32)
        w_t = jnp.transpose(w_flat, (0, 2, 1))                    # (9, G, C)
        w_p = w_t[:, :, inv] * valid                              # (9, G, Cp)
        w_p = jnp.pad(w_p, ((0, 0), (0, G_p - G), (0, 0))).astype(jnp.bfloat16)

        flat_params += [scale_p, shift_p, w_p]
        in_specs += [
            pl.BlockSpec((Cp, 1), lambda n: (0, 0)),
            pl.BlockSpec((Cp, 1), lambda n: (0, 0)),
            pl.BlockSpec((9, G_p, Cp), lambda n: (0, 0, 0)),
        ]
        flops += 2 * N * HW * 9 * Cp * G_p
        bytes_accessed += scale_p.size * 4 + shift_p.size * 4 + w_p.size * 2

    # NCHW -> (N, C_in_p, H*W): spatial on lanes, channels on sublanes.
    x = x_nchw.reshape(N, C_in, HW)
    x = jnp.pad(x, ((0, 0), (0, C_in_p - C_in), (0, 0)))

    kernel = _make_dense_block_kernel(layer_cp, G_p, H, W, offset, pad_len)

    out_p = pl.pallas_call(
        kernel,
        out_shape=jax.ShapeDtypeStruct((N, C_out_p, HW), jnp.float32),
        grid=(N,),
        in_specs=in_specs,
        out_specs=pl.BlockSpec((1, C_out_p, HW), lambda n: (n, 0, 0)),
        scratch_shapes=[pltpu.VMEM((C_scr, pad_len), jnp.bfloat16)],
        compiler_params=pltpu.CompilerParams(
            dimension_semantics=("parallel",),       # shard batch across TCs
            vmem_limit_bytes=32 * 1024 * 1024),
        cost_estimate=pl.CostEstimate(
            flops=flops, transcendentals=0, bytes_accessed=bytes_accessed),
    )(x, mask_l, mask_r, *flat_params)

    # Strip sublane channel padding and restore NCHW.
    out_idx = jnp.asarray(
        np.array([pad_pos(c) for c in range(C_in + L * G)], np.int32))
    out = out_p[:, out_idx, :]
    return out.reshape(N, C_in + L * G, H, W)


@jax.jit
def dense_block_forward(x_nchw, params):
    return dense_block_pallas(x_nchw, params)


def init_params(key, in_planes, growth_rate, nb_layers):
    """Deterministic synthetic parameters (BN folded + conv weights, f32)."""
    params = []
    C = in_planes
    eps = 1e-5
    for _ in range(nb_layers):
        key, k1, k2, k3, k4, kw = jax.random.split(key, 6)
        gamma = 1.0 + 0.1 * jax.random.normal(k1, (C,), jnp.float32)
        beta = 0.1 * jax.random.normal(k2, (C,), jnp.float32)
        running_mean = 0.1 * jax.random.normal(k3, (C,), jnp.float32)
        running_var = jnp.abs(1.0 + 0.1 * jax.random.normal(k4, (C,), jnp.float32))
        scale = gamma / jnp.sqrt(running_var + eps)
        shift = beta - running_mean * scale
        # Kaiming-style init: n = k*k*out_planes, std = sqrt(2/n)  (OIHW)
        n = 3 * 3 * growth_rate
        w_oihw = jax.random.normal(kw, (growth_rate, C, 3, 3), jnp.float32) \
            * jnp.sqrt(2.0 / n)
        w_hwio = jnp.transpose(w_oihw, (2, 3, 1, 0))             # (3,3,C,G)
        w_flat = w_hwio.reshape(9, C, growth_rate)               # (9,C,G)
        params.append((scale, shift, w_flat))
        C += growth_rate
    return params


def reference_forward(x_nchw, params):
    """Pure-JAX reference using the same precision policy as the kernel
    (f32 BN/ReLU, bf16 matmul operands, f32 accumulation)."""
    x = jnp.transpose(x_nchw, (0, 2, 3, 1))
    for scale, shift, w_flat in params:
        C = x.shape[-1]
        G = w_flat.shape[-1]
        y = jnp.maximum(x * scale + shift, 0.0)
        w_hwio = w_flat.reshape(3, 3, C, G).astype(jnp.bfloat16)
        out = jax.lax.conv_general_dilated(
            y.astype(jnp.bfloat16), w_hwio, window_strides=(1, 1),
            padding="SAME", dimension_numbers=("NHWC", "HWIO", "NHWC"),
            preferred_element_type=jnp.float32)
        x = jnp.concatenate([x, out.astype(jnp.float32)], axis=-1)
    return jnp.transpose(x, (0, 3, 1, 2))


if __name__ == "__main__":
    key = jax.random.PRNGKey(0)
    kx, kp = jax.random.split(key)

    N, C_in, H, W = 2, 4, 16, 16
    growth_rate, nb_layers = 4, 3

    x = jax.random.normal(kx, (N, C_in, H, W), jnp.float32)
    params = init_params(kp, C_in, growth_rate, nb_layers)

    out = jax.block_until_ready(dense_block_forward(x, params))

    assert out.shape == (N, C_in + nb_layers * growth_rate, H, W), out.shape
    ref = reference_forward(x, params)
    max_err = float(jnp.max(jnp.abs(out - ref)))
    assert jnp.allclose(out, ref, atol=2e-2, rtol=2e-2), max_err

    print("KERNEL_OK")
</pallas_src>

<mosaic_0001>
module attributes {stable_mosaic.version = 11 : i64} {
  func.func @kernel(%arg0: i32, %arg1: memref<1x8x256xf32, #tpu.memory_space<vmem>>, %arg2: memref<1x256xf32, #tpu.memory_space<vmem>>, %arg3: memref<1x256xf32, #tpu.memory_space<vmem>>, %arg4: memref<8x1xf32, #tpu.memory_space<vmem>>, %arg5: memref<8x1xf32, #tpu.memory_space<vmem>>, %arg6: memref<9x8x8xbf16, #tpu.memory_space<vmem>>, %arg7: memref<16x1xf32, #tpu.memory_space<vmem>>, %arg8: memref<16x1xf32, #tpu.memory_space<vmem>>, %arg9: memref<9x8x16xbf16, #tpu.memory_space<vmem>>, %arg10: memref<24x1xf32, #tpu.memory_space<vmem>>, %arg11: memref<24x1xf32, #tpu.memory_space<vmem>>, %arg12: memref<9x8x24xbf16, #tpu.memory_space<vmem>>, %arg13: memref<1x32x256xf32, #tpu.memory_space<vmem>>, %arg14: memref<24x512xbf16, #tpu.memory_space<vmem>>) attributes {dimension_semantics = [#tpu.dimension_semantics<parallel>], iteration_bounds = array<i64: 2>, scalar_prefetch = 0 : i64, scratch_operands = 1 : i64, tpu.core_type = #tpu.core_type<tc>, window_params = [{transform_indices = @transform_0, window_bounds = array<i64: 1, 8, 256>}, {pipeline_mode = #tpu.pipeline_mode<synchronous>, transform_indices = @transform_1, window_bounds = array<i64: 1, 256>}, {pipeline_mode = #tpu.pipeline_mode<synchronous>, transform_indices = @transform_2, window_bounds = array<i64: 1, 256>}, {pipeline_mode = #tpu.pipeline_mode<synchronous>, transform_indices = @transform_3, window_bounds = array<i64: 8, 1>}, {pipeline_mode = #tpu.pipeline_mode<synchronous>, transform_indices = @transform_4, window_bounds = array<i64: 8, 1>}, {pipeline_mode = #tpu.pipeline_mode<synchronous>, transform_indices = @transform_5, window_bounds = array<i64: 9, 8, 8>}, {pipeline_mode = #tpu.pipeline_mode<synchronous>, transform_indices = @transform_6, window_bounds = array<i64: 16, 1>}, {pipeline_mode = #tpu.pipeline_mode<synchronous>, transform_indices = @transform_7, window_bounds = array<i64: 16, 1>}, {pipeline_mode = #tpu.pipeline_mode<synchronous>, transform_indices = @transform_8, window_bounds = array<i64: 9, 8, 16>}, {pipeline_mode = #tpu.pipeline_mode<synchronous>, transform_indices = @transform_9, window_bounds = array<i64: 24, 1>}, {pipeline_mode = #tpu.pipeline_mode<synchronous>, transform_indices = @transform_10, window_bounds = array<i64: 24, 1>}, {pipeline_mode = #tpu.pipeline_mode<synchronous>, transform_indices = @transform_11, window_bounds = array<i64: 9, 8, 24>}, {transform_indices = @transform_12, window_bounds = array<i64: 1, 32, 256>}]} {
    %c0 = arith.constant 0 : index
    %c0_0 = arith.constant 0 : index
    %c0_1 = arith.constant 0 : index
    %0 = vector.load %arg1[%c0, %c0_0, %c0_1] : memref<1x8x256xf32, #tpu.memory_space<vmem>>, vector<1x8x256xf32>
    %1 = vector.shape_cast %0 : vector<1x8x256xf32> to vector<8x256xf32>
    %c0_2 = arith.constant 0 : index
    %c0_3 = arith.constant 0 : index
    %c0_4 = arith.constant 0 : index
    %2 = vector.load %arg13[%c0_2, %c0_3, %c0_4] : memref<1x32x256xf32, #tpu.memory_space<vmem>>, vector<1x8x256xf32>
    %3 = vector.shape_cast %2 : vector<1x8x256xf32> to vector<8x256xf32>
    %4 = vector.shape_cast %1 : vector<8x256xf32> to vector<1x8x256xf32>
    tpu.vector_store %arg13[%c0_2, %c0_3, %c0_4], %4 {strides = array<i32>} : memref<1x32x256xf32, #tpu.memory_space<vmem>>, vector<1x8x256xf32>,
    %cst = arith.constant 0.000000e+00 : bf16
    %5 = vector.broadcast %cst : bf16 to vector<24x128xbf16>
    %c0_5 = arith.constant 0 : index
    %c0_6 = arith.constant 0 : index
    %6 = vector.load %arg14[%c0_5, %c0_6] : memref<24x512xbf16, #tpu.memory_space<vmem>>, vector<24x128xbf16>
    tpu.vector_store %arg14[%c0_5, %c0_6], %5 {strides = array<i32>} : memref<24x512xbf16, #tpu.memory_space<vmem>>, vector<24x128xbf16>,
    %cst_7 = arith.constant 0.000000e+00 : bf16
    %7 = vector.broadcast %cst_7 : bf16 to vector<24x128xbf16>
    %c0_8 = arith.constant 0 : index
    %c384 = arith.constant 384 : index
    %8 = vector.load %arg14[%c0_8, %c384] : memref<24x512xbf16, #tpu.memory_space<vmem>>, vector<24x128xbf16>
    tpu.vector_store %arg14[%c0_8, %c384], %7 {strides = array<i32>} : memref<24x512xbf16, #tpu.memory_space<vmem>>, vector<24x128xbf16>,
    %c0_9 = arith.constant 0 : index
    %c0_10 = arith.constant 0 : index
    %9 = vector.load %arg2[%c0_9, %c0_10] : memref<1x256xf32, #tpu.memory_space<vmem>>, vector<1x256xf32>
    %c0_11 = arith.constant 0 : index
    %c0_12 = arith.constant 0 : index
    %10 = vector.load %arg3[%c0_11, %c0_12] : memref<1x256xf32, #tpu.memory_space<vmem>>, vector<1x256xf32>
    %c0_13 = arith.constant 0 : index
    %c0_14 = arith.constant 0 : index
    %11 = vector.load %arg4[%c0_13, %c0_14] : memref<8x1xf32, #tpu.memory_space<vmem>>, vector<8x1xf32>
    %c0_15 = arith.constant 0 : index
    %c0_16 = arith.constant 0 : index
    %12 = vector.load %arg5[%c0_15, %c0_16] : memref<8x1xf32, #tpu.memory_space<vmem>>, vector<8x1xf32>
    %c0_17 = arith.constant 0 : index
    %c0_18 = arith.constant 0 : index
    %c0_19 = arith.constant 0 : index
    %13 = vector.load %arg13[%c0_17, %c0_18, %c0_19] : memref<1x32x256xf32, #tpu.memory_space<vmem>>, vector<1x8x256xf32>
    %14 = vector.shape_cast %13 : vector<1x8x256xf32> to vector<8x256xf32>
    %15 = vector.broadcast %11 : vector<8x1xf32> to vector<8x256xf32>
    %16 = arith.mulf %14, %15 : vector<8x256xf32>
    %17 = vector.broadcast %12 : vector<8x1xf32> to vector<8x256xf32>
    %18 = arith.addf %16, %17 : vector<8x256xf32>
    %cst_20 = arith.constant 0.000000e+00 : f32
    %19 = vector.broadcast %cst_20 : f32 to vector<8x256xf32>
    %20 = arith.maximumf %18, %19 : vector<8x256xf32>
    %21 = arith.truncf %20 : vector<8x256xf32> to vector<8x256xbf16>
    %c0_21 = arith.constant 0 : index
    %c128 = arith.constant 128 : index
    %22 = vector.load %arg14[%c0_21, %c128] : memref<24x512xbf16, #tpu.memory_space<vmem>>, vector<8x256xbf16>
    tpu.vector_store %arg14[%c0_21, %c128], %21 {strides = array<i32>} : memref<24x512xbf16, #tpu.memory_space<vmem>>, vector<8x256xbf16>,
    %c0_22 = arith.constant 0 : index
    %c111 = arith.constant 111 : index
    %23 = vector.load %arg14[%c0_22, %c111] : memref<24x512xbf16, #tpu.memory_space<vmem>>, vector<8x256xbf16>
    %c0_23 = arith.constant 0 : index
    %c0_24 = arith.constant 0 : index
    %c0_25 = arith.constant 0 : index
    %24 = vector.load %arg6[%c0_23, %c0_24, %c0_25] : memref<9x8x8xbf16, #tpu.memory_space<vmem>>, vector<1x8x8xbf16>
    %25 = vector.shape_cast %24 : vector<1x8x8xbf16> to vector<8x8xbf16>
    %cst_26 = arith.constant dense<0.000000e+00> : vector<8x256xf32>
    %26 = tpu.matmul %25, %23, %cst_26 {dimension_numbers = #tpu.dot_dimension_numbers<[1], [0], [0], [1], [0, 0, 1, 1], [], []>} : vector<8x8xbf16>, vector<8x256xbf16>, vector<8x256xf32> -> vector<8x256xf32>
    %27 = vector.broadcast %9 : vector<1x256xf32> to vector<8x256xf32>
    %28 = arith.mulf %26, %27 : vector<8x256xf32>
    %c0_27 = arith.constant 0 : index
    %c112 = arith.constant 112 : index
    %29 = vector.load %arg14[%c0_27, %c112] : memref<24x512xbf16, #tpu.memory_space<vmem>>, vector<8x256xbf16>
    %c1 = arith.constant 1 : index
    %c0_28 = arith.constant 0 : index
    %c0_29 = arith.constant 0 : index
    %30 = vector.load %arg6[%c1, %c0_28, %c0_29] : memref<9x8x8xbf16, #tpu.memory_space<vmem>>, vector<1x8x8xbf16>
    %31 = vector.shape_cast %30 : vector<1x8x8xbf16> to vector<8x8xbf16>
    %cst_30 = arith.constant dense<0.000000e+00> : vector<8x256xf32>
    %32 = tpu.matmul %31, %29, %cst_30 {dimension_numbers = #tpu.dot_dimension_numbers<[1], [0], [0], [1], [0, 0, 1, 1], [], []>} : vector<8x8xbf16>, vector<8x256xbf16>, vector<8x256xf32> -> vector<8x256xf32>
    %33 = arith.addf %28, %32 : vector<8x256xf32>
    %c0_31 = arith.constant 0 : index
    %c113 = arith.constant 113 : index
    %34 = vector.load %arg14[%c0_31, %c113] : memref<24x512xbf16, #tpu.memory_space<vmem>>, vector<8x256xbf16>
    %c2 = arith.constant 2 : index
    %c0_32 = arith.constant 0 : index
    %c0_33 = arith.constant 0 : index
    %35 = vector.load %arg6[%c2, %c0_32, %c0_33] : memref<9x8x8xbf16, #tpu.memory_space<vmem>>, vector<1x8x8xbf16>
    %36 = vector.shape_cast %35 : vector<1x8x8xbf16> to vector<8x8xbf16>
    %cst_34 = arith.constant dense<0.000000e+00> : vector<8x256xf32>
    %37 = tpu.matmul %36, %34, %cst_34 {dimension_numbers = #tpu.dot_dimension_numbers<[1], [0], [0], [1], [0, 0, 1, 1], [], []>} : vector<8x8xbf16>, vector<8x256xbf16>, vector<8x256xf32> -> vector<8x256xf32>
    %38 = vector.broadcast %10 : vector<1x256xf32> to vector<8x256xf32>
    %39 = arith.mulf %37, %38 : vector<8x256xf32>
    %40 = arith.addf %33, %39 : vector<8x256xf32>
    %c0_35 = arith.constant 0 : index
    %c127 = arith.constant 127 : index
    %41 = vector.load %arg14[%c0_35, %c127] : memref<24x512xbf16, #tpu.memory_space<vmem>>, vector<8x256xbf16>
    %c3 = arith.constant 3 : index
    %c0_36 = arith.constant 0 : index
    %c0_37 = arith.constant 0 : index
    %42 = vector.load %arg6[%c3, %c0_36, %c0_37] : memref<9x8x8xbf16, #tpu.memory_space<vmem>>, vector<1x8x8xbf16>
    %43 = vector.shape_cast %42 : vector<1x8x8xbf16> to vector<8x8xbf16>
    %cst_38 = arith.constant dense<0.000000e+00> : vector<8x256xf32>
    %44 = tpu.matmul %43, %41, %cst_38 {dimension_numbers = #tpu.dot_dimension_numbers<[1], [0], [0], [1], [0, 0, 1, 1], [], []>} : vector<8x8xbf16>, vector<8x256xbf16>, vector<8x256xf32> -> vector<8x256xf32>
    %45 = vector.broadcast %9 : vector<1x256xf32> to vector<8x256xf32>
    %46 = arith.mulf %44, %45 : vector<8x256xf32>
    %47 = arith.addf %40, %46 : vector<8x256xf32>
    %c0_39 = arith.constant 0 : index
    %c128_40 = arith.constant 128 : index
    %48 = vector.load %arg14[%c0_39, %c128_40] : memref<24x512xbf16, #tpu.memory_space<vmem>>, vector<8x256xbf16>
    %c4 = arith.constant 4 : index
    %c0_41 = arith.constant 0 : index
    %c0_42 = arith.constant 0 : index
    %49 = vector.load %arg6[%c4, %c0_41, %c0_42] : memref<9x8x8xbf16, #tpu.memory_space<vmem>>, vector<1x8x8xbf16>
    %50 = vector.shape_cast %49 : vector<1x8x8xbf16> to vector<8x8xbf16>
    %cst_43 = arith.constant dense<0.000000e+00> : vector<8x256xf32>
    %51 = tpu.matmul %50, %48, %cst_43 {dimension_numbers = #tpu.dot_dimension_numbers<[1], [0], [0], [1], [0, 0, 1, 1], [], []>} : vector<8x8xbf16>, vector<8x256xbf16>, vector<8x256xf32> -> vector<8x256xf32>
    %52 = arith.addf %47, %51 : vector<8x256xf32>
    %c0_44 = arith.constant 0 : index
    %c129 = arith.constant 129 : index
    %53 = vector.load %arg14[%c0_44, %c129] : memref<24x512xbf16, #tpu.memory_space<vmem>>, vector<8x256xbf16>
    %c5 = arith.constant 5 : index
    %c0_45 = arith.constant 0 : index
    %c0_46 = arith.constant 0 : index
    %54 = vector.load %arg6[%c5, %c0_45, %c0_46] : memref<9x8x8xbf16, #tpu.memory_space<vmem>>, vector<1x8x8xbf16>
    %55 = vector.shape_cast %54 : vector<1x8x8xbf16> to vector<8x8xbf16>
    %cst_47 = arith.constant dense<0.000000e+00> : vector<8x256xf32>
    %56 = tpu.matmul %55, %53, %cst_47 {dimension_numbers = #tpu.dot_dimension_numbers<[1], [0], [0], [1], [0, 0, 1, 1], [], []>} : vector<8x8xbf16>, vector<8x256xbf16>, vector<8x256xf32> -> vector<8x256xf32>
    %57 = vector.broadcast %10 : vector<1x256xf32> to vector<8x256xf32>
    %58 = arith.mulf %56, %57 : vector<8x256xf32>
    %59 = arith.addf %52, %58 : vector<8x256xf32>
    %c0_48 = arith.constant 0 : index
    %c143 = arith.constant 143 : index
    %60 = vector.load %arg14[%c0_48, %c143] : memref<24x512xbf16, #tpu.memory_space<vmem>>, vector<8x256xbf16>
    %c6 = arith.constant 6 : index
    %c0_49 = arith.constant 0 : index
    %c0_50 = arith.constant 0 : index
    %61 = vector.load %arg6[%c6, %c0_49, %c0_50] : memref<9x8x8xbf16, #tpu.memory_space<vmem>>, vector<1x8x8xbf16>
    %62 = vector.shape_cast %61 : vector<1x8x8xbf16> to vector<8x8xbf16>
    %cst_51 = arith.constant dense<0.000000e+00> : vector<8x256xf32>
    %63 = tpu.matmul %62, %60, %cst_51 {dimension_numbers = #tpu.dot_dimension_numbers<[1], [0], [0], [1], [0, 0, 1, 1], [], []>} : vector<8x8xbf16>, vector<8x256xbf16>, vector<8x256xf32> -> vector<8x256xf32>
    %64 = vector.broadcast %9 : vector<1x256xf32> to vector<8x256xf32>
    %65 = arith.mulf %63, %64 : vector<8x256xf32>
    %66 = arith.addf %59, %65 : vector<8x256xf32>
    %c0_52 = arith.constant 0 : index
    %c144 = arith.constant 144 : index
    %67 = vector.load %arg14[%c0_52, %c144] : memref<24x512xbf16, #tpu.memory_space<vmem>>, vector<8x256xbf16>
    %c7 = arith.constant 7 : index
    %c0_53 = arith.constant 0 : index
    %c0_54 = arith.constant 0 : index
    %68 = vector.load %arg6[%c7, %c0_53, %c0_54] : memref<9x8x8xbf16, #tpu.memory_space<vmem>>, vector<1x8x8xbf16>
    %69 = vector.shape_cast %68 : vector<1x8x8xbf16> to vector<8x8xbf16>
    %cst_55 = arith.constant dense<0.000000e+00> : vector<8x256xf32>
    %70 = tpu.matmul %69, %67, %cst_55 {dimension_numbers = #tpu.dot_dimension_numbers<[1], [0], [0], [1], [0, 0, 1, 1], [], []>} : vector<8x8xbf16>, vector<8x256xbf16>, vector<8x256xf32> -> vector<8x256xf32>
    %71 = arith.addf %66, %70 : vector<8x256xf32>
    %c0_56 = arith.constant 0 : index
    %c145 = arith.constant 145 : index
    %72 = vector.load %arg14[%c0_56, %c145] : memref<24x512xbf16, #tpu.memory_space<vmem>>, vector<8x256xbf16>
    %c8 = arith.constant 8 : index
    %c0_57 = arith.constant 0 : index
    %c0_58 = arith.constant 0 : index
    %73 = vector.load %arg6[%c8, %c0_57, %c0_58] : memref<9x8x8xbf16, #tpu.memory_space<vmem>>, vector<1x8x8xbf16>
    %74 = vector.shape_cast %73 : vector<1x8x8xbf16> to vector<8x8xbf16>
    %cst_59 = arith.constant dense<0.000000e+00> : vector<8x256xf32>
    %75 = tpu.matmul %74, %72, %cst_59 {dimension_numbers = #tpu.dot_dimension_numbers<[1], [0], [0], [1], [0, 0, 1, 1], [], []>} : vector<8x8xbf16>, vector<8x256xbf16>, vector<8x256xf32> -> vector<8x256xf32>
    %76 = vector.broadcast %10 : vector<1x256xf32> to vector<8x256xf32>
    %77 = arith.mulf %75, %76 : vector<8x256xf32>
    %78 = arith.addf %71, %77 : vector<8x256xf32>
    %c0_60 = arith.constant 0 : index
    %c8_61 = arith.constant 8 : index
    %c0_62 = arith.constant 0 : index
    %79 = vector.load %arg13[%c0_60, %c8_61, %c0_62] : memref<1x32x256xf32, #tpu.memory_space<vmem>>, vector<1x8x256xf32>
    %80 = vector.shape_cast %79 : vector<1x8x256xf32> to vector<8x256xf32>
    %81 = vector.shape_cast %78 : vector<8x256xf32> to vector<1x8x256xf32>
    tpu.vector_store %arg13[%c0_60, %c8_61, %c0_62], %81 {strides = array<i32>} : memref<1x32x256xf32, #tpu.memory_space<vmem>>, vector<1x8x256xf32>,
    %c0_63 = arith.constant 0 : index
    %c0_64 = arith.constant 0 : index
    %82 = vector.load %arg7[%c0_63, %c0_64] : memref<16x1xf32, #tpu.memory_space<vmem>>, vector<16x1xf32>
    %c0_65 = arith.constant 0 : index
    %c0_66 = arith.constant 0 : index
    %83 = vector.load %arg8[%c0_65, %c0_66] : memref<16x1xf32, #tpu.memory_space<vmem>>, vector<16x1xf32>
    %c0_67 = arith.constant 0 : index
    %c0_68 = arith.constant 0 : index
    %c0_69 = arith.constant 0 : index
    %84 = vector.load %arg13[%c0_67, %c0_68, %c0_69] : memref<1x32x256xf32, #tpu.memory_space<vmem>>, vector<1x16x256xf32>
    %85 = vector.shape_cast %84 : vector<1x16x256xf32> to vector<16x256xf32>
    %86 = vector.broadcast %82 : vector<16x1xf32> to vector<16x256xf32>
    %87 = arith.mulf %85, %86 : vector<16x256xf32>
    %88 = vector.broadcast %83 : vector<16x1xf32> to vector<16x256xf32>
    %89 = arith.addf %87, %88 : vector<16x256xf32>
    %cst_70 = arith.constant 0.000000e+00 : f32
    %90 = vector.broadcast %cst_70 : f32 to vector<16x256xf32>
    %91 = arith.maximumf %89, %90 : vector<16x256xf32>
    %92 = arith.truncf %91 : vector<16x256xf32> to vector<16x256xbf16>
    %c0_71 = arith.constant 0 : index
    %c128_72 = arith.constant 128 : index
    %93 = vector.load %arg14[%c0_71, %c128_72] : memref<24x512xbf16, #tpu.memory_space<vmem>>, vector<16x256xbf16>
    tpu.vector_store %arg14[%c0_71, %c128_72], %92 {strides = array<i32>} : memref<24x512xbf16, #tpu.memory_space<vmem>>, vector<16x256xbf16>,
    %c0_73 = arith.constant 0 : index
    %c111_74 = arith.constant 111 : index
    %94 = vector.load %arg14[%c0_73, %c111_74] : memref<24x512xbf16, #tpu.memory_space<vmem>>, vector<16x256xbf16>
    %c0_75 = arith.constant 0 : index
    %c0_76 = arith.constant 0 : index
    %c0_77 = arith.constant 0 : index
    %95 = vector.load %arg9[%c0_75, %c0_76, %c0_77] : memref<9x8x16xbf16, #tpu.memory_space<vmem>>, vector<1x8x16xbf16>
    %96 = vector.shape_cast %95 : vector<1x8x16xbf16> to vector<8x16xbf16>
    %cst_78 = arith.constant dense<0.000000e+00> : vector<8x256xf32>
    %97 = tpu.matmul %96, %94, %cst_78 {dimension_numbers = #tpu.dot_dimension_numbers<[1], [0], [0], [1], [0, 0, 1, 1], [], []>} : vector<8x16xbf16>, vector<16x256xbf16>, vector<8x256xf32> -> vector<8x256xf32>
    %98 = vector.broadcast %9 : vector<1x256xf32> to vector<8x256xf32>
    %99 = arith.mulf %97, %98 : vector<8x256xf32>
    %c0_79 = arith.constant 0 : index
    %c112_80 = arith.constant 112 : index
    %100 = vector.load %arg14[%c0_79, %c112_80] : memref<24x512xbf16, #tpu.memory_space<vmem>>, vector<16x256xbf16>
    %c1_81 = arith.constant 1 : index
    %c0_82 = arith.constant 0 : index
    %c0_83 = arith.constant 0 : index
    %101 = vector.load %arg9[%c1_81, %c0_82, %c0_83] : memref<9x8x16xbf16, #tpu.memory_space<vmem>>, vector<1x8x16xbf16>
    %102 = vector.shape_cast %101 : vector<1x8x16xbf16> to vector<8x16xbf16>
    %cst_84 = arith.constant dense<0.000000e+00> : vector<8x256xf32>
    %103 = tpu.matmul %102, %100, %cst_84 {dimension_numbers = #tpu.dot_dimension_numbers<[1], [0], [0], [1], [0, 0, 1, 1], [], []>} : vector<8x16xbf16>, vector<16x256xbf16>, vector<8x256xf32> -> vector<8x256xf32>
    %104 = arith.addf %99, %103 : vector<8x256xf32>
    %c0_85 = arith.constant 0 : index
    %c113_86 = arith.constant 113 : index
    %105 = vector.load %arg14[%c0_85, %c113_86] : memref<24x512xbf16, #tpu.memory_space<vmem>>, vector<16x256xbf16>
    %c2_87 = arith.constant 2 : index
    %c0_88 = arith.constant 0 : index
    %c0_89 = arith.constant 0 : index
    %106 = vector.load %arg9[%c2_87, %c0_88, %c0_89] : memref<9x8x16xbf16, #tpu.memory_space<vmem>>, vector<1x8x16xbf16>
    %107 = vector.shape_cast %106 : vector<1x8x16xbf16> to vector<8x16xbf16>
    %cst_90 = arith.constant dense<0.000000e+00> : vector<8x256xf32>
    %108 = tpu.matmul %107, %105, %cst_90 {dimension_numbers = #tpu.dot_dimension_numbers<[1], [0], [0], [1], [0, 0, 1, 1], [], []>} : vector<8x16xbf16>, vector<16x256xbf16>, vector<8x256xf32> -> vector<8x256xf32>
    %109 = vector.broadcast %10 : vector<1x256xf32> to vector<8x256xf32>
    %110 = arith.mulf %108, %109 : vector<8x256xf32>
    %111 = arith.addf %104, %110 : vector<8x256xf32>
    %c0_91 = arith.constant 0 : index
    %c127_92 = arith.constant 127 : index
    %112 = vector.load %arg14[%c0_91, %c127_92] : memref<24x512xbf16, #tpu.memory_space<vmem>>, vector<16x256xbf16>
    %c3_93 = arith.constant 3 : index
    %c0_94 = arith.constant 0 : index
    %c0_95 = arith.constant 0 : index
    %113 = vector.load %arg9[%c3_93, %c0_94, %c0_95] : memref<9x8x16xbf16, #tpu.memory_space<vmem>>, vector<1x8x16xbf16>
    %114 = vector.shape_cast %113 : vector<1x8x16xbf16> to vector<8x16xbf16>
    %cst_96 = arith.constant dense<0.000000e+00> : vector<8x256xf32>
    %115 = tpu.matmul %114, %112, %cst_96 {dimension_numbers = #tpu.dot_dimension_numbers<[1], [0], [0], [1], [0, 0, 1, 1], [], []>} : vector<8x16xbf16>, vector<16x256xbf16>, vector<8x256xf32> -> vector<8x256xf32>
    %116 = vector.broadcast %9 : vector<1x256xf32> to vector<8x256xf32>
    %117 = arith.mulf %115, %116 : vector<8x256xf32>
    %118 = arith.addf %111, %117 : vector<8x256xf32>
    %c0_97 = arith.constant 0 : index
    %c128_98 = arith.constant 128 : index
    %119 = vector.load %arg14[%c0_97, %c128_98] : memref<24x512xbf16, #tpu.memory_space<vmem>>, vector<16x256xbf16>
    %c4_99 = arith.constant 4 : index
    %c0_100 = arith.constant 0 : index
    %c0_101 = arith.constant 0 : index
    %120 = vector.load %arg9[%c4_99, %c0_100, %c0_101] : memref<9x8x16xbf16, #tpu.memory_space<vmem>>, vector<1x8x16xbf16>
    %121 = vector.shape_cast %120 : vector<1x8x16xbf16> to vector<8x16xbf16>
    %cst_102 = arith.constant dense<0.000000e+00> : vector<8x256xf32>
    %122 = tpu.matmul %121, %119, %cst_102 {dimension_numbers = #tpu.dot_dimension_numbers<[1], [0], [0], [1], [0, 0, 1, 1], [], []>} : vector<8x16xbf16>, vector<16x256xbf16>, vector<8x256xf32> -> vector<8x256xf32>
    %123 = arith.addf %118, %122 : vector<8x256xf32>
    %c0_103 = arith.constant 0 : index
    %c129_104 = arith.constant 129 : index
    %124 = vector.load %arg14[%c0_103, %c129_104] : memref<24x512xbf16, #tpu.memory_space<vmem>>, vector<16x256xbf16>
    %c5_105 = arith.constant 5 : index
    %c0_106 = arith.constant 0 : index
    %c0_107 = arith.constant 0 : index
    %125 = vector.load %arg9[%c5_105, %c0_106, %c0_107] : memref<9x8x16xbf16, #tpu.memory_space<vmem>>, vector<1x8x16xbf16>
    %126 = vector.shape_cast %125 : vector<1x8x16xbf16> to vector<8x16xbf16>
    %cst_108 = arith.constant dense<0.000000e+00> : vector<8x256xf32>
    %127 = tpu.matmul %126, %124, %cst_108 {dimension_numbers = #tpu.dot_dimension_numbers<[1], [0], [0], [1], [0, 0, 1, 1], [], []>} : vector<8x16xbf16>, vector<16x256xbf16>, vector<8x256xf32> -> vector<8x256xf32>
    %128 = vector.broadcast %10 : vector<1x256xf32> to vector<8x256xf32>
    %129 = arith.mulf %127, %128 : vector<8x256xf32>
    %130 = arith.addf %123, %129 : vector<8x256xf32>
    %c0_109 = arith.constant 0 : index
    %c143_110 = arith.constant 143 : index
    %131 = vector.load %arg14[%c0_109, %c143_110] : memref<24x512xbf16, #tpu.memory_space<vmem>>, vector<16x256xbf16>
    %c6_111 = arith.constant 6 : index
    %c0_112 = arith.constant 0 : index
    %c0_113 = arith.constant 0 : index
    %132 = vector.load %arg9[%c6_111, %c0_112, %c0_113] : memref<9x8x16xbf16, #tpu.memory_space<vmem>>, vector<1x8x16xbf16>
    %133 = vector.shape_cast %132 : vector<1x8x16xbf16> to vector<8x16xbf16>
    %cst_114 = arith.constant dense<0.000000e+00> : vector<8x256xf32>
    %134 = tpu.matmul %133, %131, %cst_114 {dimension_numbers = #tpu.dot_dimension_numbers<[1], [0], [0], [1], [0, 0, 1, 1], [], []>} : vector<8x16xbf16>, vector<16x256xbf16>, vector<8x256xf32> -> vector<8x256xf32>
    %135 = vector.broadcast %9 : vector<1x256xf32> to vector<8x256xf32>
    %136 = arith.mulf %134, %135 : vector<8x256xf32>
    %137 = arith.addf %130, %136 : vector<8x256xf32>
    %c0_115 = arith.constant 0 : index
    %c144_116 = arith.constant 144 : index
    %138 = vector.load %arg14[%c0_115, %c144_116] : memref<24x512xbf16, #tpu.memory_space<vmem>>, vector<16x256xbf16>
    %c7_117 = arith.constant 7 : index
    %c0_118 = arith.constant 0 : index
    %c0_119 = arith.constant 0 : index
    %139 = vector.load %arg9[%c7_117, %c0_118, %c0_119] : memref<9x8x16xbf16, #tpu.memory_space<vmem>>, vector<1x8x16xbf16>
    %140 = vector.shape_cast %139 : vector<1x8x16xbf16> to vector<8x16xbf16>
    %cst_120 = arith.constant dense<0.000000e+00> : vector<8x256xf32>
    %141 = tpu.matmul %140, %138, %cst_120 {dimension_numbers = #tpu.dot_dimension_numbers<[1], [0], [0], [1], [0, 0, 1, 1], [], []>} : vector<8x16xbf16>, vector<16x256xbf16>, vector<8x256xf32> -> vector<8x256xf32>
    %142 = arith.addf %137, %141 : vector<8x256xf32>
    %c0_121 = arith.constant 0 : index
    %c145_122 = arith.constant 145 : index
    %143 = vector.load %arg14[%c0_121, %c145_122] : memref<24x512xbf16, #tpu.memory_space<vmem>>, vector<16x256xbf16>
    %c8_123 = arith.constant 8 : index
    %c0_124 = arith.constant 0 : index
    %c0_125 = arith.constant 0 : index
    %144 = vector.load %arg9[%c8_123, %c0_124, %c0_125] : memref<9x8x16xbf16, #tpu.memory_space<vmem>>, vector<1x8x16xbf16>
    %145 = vector.shape_cast %144 : vector<1x8x16xbf16> to vector<8x16xbf16>
    %cst_126 = arith.constant dense<0.000000e+00> : vector<8x256xf32>
    %146 = tpu.matmul %145, %143, %cst_126 {dimension_numbers = #tpu.dot_dimension_numbers<[1], [0], [0], [1], [0, 0, 1, 1], [], []>} : vector<8x16xbf16>, vector<16x256xbf16>, vector<8x256xf32> -> vector<8x256xf32>
    %147 = vector.broadcast %10 : vector<1x256xf32> to vector<8x256xf32>
    %148 = arith.mulf %146, %147 : vector<8x256xf32>
    %149 = arith.addf %142, %148 : vector<8x256xf32>
    %c0_127 = arith.constant 0 : index
    %c16 = arith.constant 16 : index
    %c0_128 = arith.constant 0 : index
    %150 = vector.load %arg13[%c0_127, %c16, %c0_128] : memref<1x32x256xf32, #tpu.memory_space<vmem>>, vector<1x8x256xf32>
    %151 = vector.shape_cast %150 : vector<1x8x256xf32> to vector<8x256xf32>
    %152 = vector.shape_cast %149 : vector<8x256xf32> to vector<1x8x256xf32>
    tpu.vector_store %arg13[%c0_127, %c16, %c0_128], %152 {strides = array<i32>} : memref<1x32x256xf32, #tpu.memory_space<vmem>>, vector<1x8x256xf32>,
    %c0_129 = arith.constant 0 : index
    %c0_130 = arith.constant 0 : index
    %153 = vector.load %arg10[%c0_129, %c0_130] : memref<24x1xf32, #tpu.memory_space<vmem>>, vector<24x1xf32>
    %c0_131 = arith.constant 0 : index
    %c0_132 = arith.constant 0 : index
    %154 = vector.load %arg11[%c0_131, %c0_132] : memref<24x1xf32, #tpu.memory_space<vmem>>, vector<24x1xf32>
    %c0_133 = arith.constant 0 : index
    %c0_134 = arith.constant 0 : index
    %c0_135 = arith.constant 0 : index
    %155 = vector.load %arg13[%c0_133, %c0_134, %c0_135] : memref<1x32x256xf32, #tpu.memory_space<vmem>>, vector<1x24x256xf32>
    %156 = vector.shape_cast %155 : vector<1x24x256xf32> to vector<24x256xf32>
    %157 = vector.broadcast %153 : vector<24x1xf32> to vector<24x256xf32>
    %158 = arith.mulf %156, %157 : vector<24x256xf32>
    %159 = vector.broadcast %154 : vector<24x1xf32> to vector<24x256xf32>
    %160 = arith.addf %158, %159 : vector<24x256xf32>
    %cst_136 = arith.constant 0.000000e+00 : f32
    %161 = vector.broadcast %cst_136 : f32 to vector<24x256xf32>
    %162 = arith.maximumf %160, %161 : vector<24x256xf32>
    %163 = arith.truncf %162 : vector<24x256xf32> to vector<24x256xbf16>
    %c0_137 = arith.constant 0 : index
    %c128_138 = arith.constant 128 : index
    %164 = vector.load %arg14[%c0_137, %c128_138] : memref<24x512xbf16, #tpu.memory_space<vmem>>, vector<24x256xbf16>
    tpu.vector_store %arg14[%c0_137, %c128_138], %163 {strides = array<i32>} : memref<24x512xbf16, #tpu.memory_space<vmem>>, vector<24x256xbf16>,
    %c0_139 = arith.constant 0 : index
    %c111_140 = arith.constant 111 : index
    %165 = vector.load %arg14[%c0_139, %c111_140] : memref<24x512xbf16, #tpu.memory_space<vmem>>, vector<24x256xbf16>
    %c0_141 = arith.constant 0 : index
    %c0_142 = arith.constant 0 : index
    %c0_143 = arith.constant 0 : index
    %166 = vector.load %arg12[%c0_141, %c0_142, %c0_143] : memref<9x8x24xbf16, #tpu.memory_space<vmem>>, vector<1x8x24xbf16>
    %167 = vector.shape_cast %166 : vector<1x8x24xbf16> to vector<8x24xbf16>
    %cst_144 = arith.constant dense<0.000000e+00> : vector<8x256xf32>
    %168 = tpu.matmul %167, %165, %cst_144 {dimension_numbers = #tpu.dot_dimension_numbers<[1], [0], [0], [1], [0, 0, 1, 1], [], []>} : vector<8x24xbf16>, vector<24x256xbf16>, vector<8x256xf32> -> vector<8x256xf32>
    %169 = vector.broadcast %9 : vector<1x256xf32> to vector<8x256xf32>
    %170 = arith.mulf %168, %169 : vector<8x256xf32>
    %c0_145 = arith.constant 0 : index
    %c112_146 = arith.constant 112 : index
    %171 = vector.load %arg14[%c0_145, %c112_146] : memref<24x512xbf16, #tpu.memory_space<vmem>>, vector<24x256xbf16>
    %c1_147 = arith.constant 1 : index
    %c0_148 = arith.constant 0 : index
    %c0_149 = arith.constant 0 : index
    %172 = vector.load %arg12[%c1_147, %c0_148, %c0_149] : memref<9x8x24xbf16, #tpu.memory_space<vmem>>, vector<1x8x24xbf16>
    %173 = vector.shape_cast %172 : vector<1x8x24xbf16> to vector<8x24xbf16>
    %cst_150 = arith.constant dense<0.000000e+00> : vector<8x256xf32>
    %174 = tpu.matmul %173, %171, %cst_150 {dimension_numbers = #tpu.dot_dimension_numbers<[1], [0], [0], [1], [0, 0, 1, 1], [], []>} : vector<8x24xbf16>, vector<24x256xbf16>, vector<8x256xf32> -> vector<8x256xf32>
    %175 = arith.addf %170, %174 : vector<8x256xf32>
    %c0_151 = arith.constant 0 : index
    %c113_152 = arith.constant 113 : index
    %176 = vector.load %arg14[%c0_151, %c113_152] : memref<24x512xbf16, #tpu.memory_space<vmem>>, vector<24x256xbf16>
    %c2_153 = arith.constant 2 : index
    %c0_154 = arith.constant 0 : index
    %c0_155 = arith.constant 0 : index
    %177 = vector.load %arg12[%c2_153, %c0_154, %c0_155] : memref<9x8x24xbf16, #tpu.memory_space<vmem>>, vector<1x8x24xbf16>
    %178 = vector.shape_cast %177 : vector<1x8x24xbf16> to vector<8x24xbf16>
    %cst_156 = arith.constant dense<0.000000e+00> : vector<8x256xf32>
    %179 = tpu.matmul %178, %176, %cst_156 {dimension_numbers = #tpu.dot_dimension_numbers<[1], [0], [0], [1], [0, 0, 1, 1], [], []>} : vector<8x24xbf16>, vector<24x256xbf16>, vector<8x256xf32> -> vector<8x256xf32>
    %180 = vector.broadcast %10 : vector<1x256xf32> to vector<8x256xf32>
    %181 = arith.mulf %179, %180 : vector<8x256xf32>
    %182 = arith.addf %175, %181 : vector<8x256xf32>
    %c0_157 = arith.constant 0 : index
    %c127_158 = arith.constant 127 : index
    %183 = vector.load %arg14[%c0_157, %c127_158] : memref<24x512xbf16, #tpu.memory_space<vmem>>, vector<24x256xbf16>
    %c3_159 = arith.constant 3 : index
    %c0_160 = arith.constant 0 : index
    %c0_161 = arith.constant 0 : index
    %184 = vector.load %arg12[%c3_159, %c0_160, %c0_161] : memref<9x8x24xbf16, #tpu.memory_space<vmem>>, vector<1x8x24xbf16>
    %185 = vector.shape_cast %184 : vector<1x8x24xbf16> to vector<8x24xbf16>
    %cst_162 = arith.constant dense<0.000000e+00> : vector<8x256xf32>
    %186 = tpu.matmul %185, %183, %cst_162 {dimension_numbers = #tpu.dot_dimension_numbers<[1], [0], [0], [1], [0, 0, 1, 1], [], []>} : vector<8x24xbf16>, vector<24x256xbf16>, vector<8x256xf32> -> vector<8x256xf32>
    %187 = vector.broadcast %9 : vector<1x256xf32> to vector<8x256xf32>
    %188 = arith.mulf %186, %187 : vector<8x256xf32>
    %189 = arith.addf %182, %188 : vector<8x256xf32>
    %c0_163 = arith.constant 0 : index
    %c128_164 = arith.constant 128 : index
    %190 = vector.load %arg14[%c0_163, %c128_164] : memref<24x512xbf16, #tpu.memory_space<vmem>>, vector<24x256xbf16>
    %c4_165 = arith.constant 4 : index
    %c0_166 = arith.constant 0 : index
    %c0_167 = arith.constant 0 : index
    %191 = vector.load %arg12[%c4_165, %c0_166, %c0_167] : memref<9x8x24xbf16, #tpu.memory_space<vmem>>, vector<1x8x24xbf16>
    %192 = vector.shape_cast %191 : vector<1x8x24xbf16> to vector<8x24xbf16>
    %cst_168 = arith.constant dense<0.000000e+00> : vector<8x256xf32>
    %193 = tpu.matmul %192, %190, %cst_168 {dimension_numbers = #tpu.dot_dimension_numbers<[1], [0], [0], [1], [0, 0, 1, 1], [], []>} : vector<8x24xbf16>, vector<24x256xbf16>, vector<8x256xf32> -> vector<8x256xf32>
    %194 = arith.addf %189, %193 : vector<8x256xf32>
    %c0_169 = arith.constant 0 : index
    %c129_170 = arith.constant 129 : index
    %195 = vector.load %arg14[%c0_169, %c129_170] : memref<24x512xbf16, #tpu.memory_space<vmem>>, vector<24x256xbf16>
    %c5_171 = arith.constant 5 : index
    %c0_172 = arith.constant 0 : index
    %c0_173 = arith.constant 0 : index
    %196 = vector.load %arg12[%c5_171, %c0_172, %c0_173] : memref<9x8x24xbf16, #tpu.memory_space<vmem>>, vector<1x8x24xbf16>
    %197 = vector.shape_cast %196 : vector<1x8x24xbf16> to vector<8x24xbf16>
    %cst_174 = arith.constant dense<0.000000e+00> : vector<8x256xf32>
    %198 = tpu.matmul %197, %195, %cst_174 {dimension_numbers = #tpu.dot_dimension_numbers<[1], [0], [0], [1], [0, 0, 1, 1], [], []>} : vector<8x24xbf16>, vector<24x256xbf16>, vector<8x256xf32> -> vector<8x256xf32>
    %199 = vector.broadcast %10 : vector<1x256xf32> to vector<8x256xf32>
    %200 = arith.mulf %198, %199 : vector<8x256xf32>
    %201 = arith.addf %194, %200 : vector<8x256xf32>
    %c0_175 = arith.constant 0 : index
    %c143_176 = arith.constant 143 : index
    %202 = vector.load %arg14[%c0_175, %c143_176] : memref<24x512xbf16, #tpu.memory_space<vmem>>, vector<24x256xbf16>
    %c6_177 = arith.constant 6 : index
    %c0_178 = arith.constant 0 : index
    %c0_179 = arith.constant 0 : index
    %203 = vector.load %arg12[%c6_177, %c0_178, %c0_179] : memref<9x8x24xbf16, #tpu.memory_space<vmem>>, vector<1x8x24xbf16>
    %204 = vector.shape_cast %203 : vector<1x8x24xbf16> to vector<8x24xbf16>
    %cst_180 = arith.constant dense<0.000000e+00> : vector<8x256xf32>
    %205 = tpu.matmul %204, %202, %cst_180 {dimension_numbers = #tpu.dot_dimension_numbers<[1], [0], [0], [1], [0, 0, 1, 1], [], []>} : vector<8x24xbf16>, vector<24x256xbf16>, vector<8x256xf32> -> vector<8x256xf32>
    %206 = vector.broadcast %9 : vector<1x256xf32> to vector<8x256xf32>
    %207 = arith.mulf %205, %206 : vector<8x256xf32>
    %208 = arith.addf %201, %207 : vector<8x256xf32>
    %c0_181 = arith.constant 0 : index
    %c144_182 = arith.constant 144 : index
    %209 = vector.load %arg14[%c0_181, %c144_182] : memref<24x512xbf16, #tpu.memory_space<vmem>>, vector<24x256xbf16>
    %c7_183 = arith.constant 7 : index
    %c0_184 = arith.constant 0 : index
    %c0_185 = arith.constant 0 : index
    %210 = vector.load %arg12[%c7_183, %c0_184, %c0_185] : memref<9x8x24xbf16, #tpu.memory_space<vmem>>, vector<1x8x24xbf16>
    %211 = vector.shape_cast %210 : vector<1x8x24xbf16> to vector<8x24xbf16>
    %cst_186 = arith.constant dense<0.000000e+00> : vector<8x256xf32>
    %212 = tpu.matmul %211, %209, %cst_186 {dimension_numbers = #tpu.dot_dimension_numbers<[1], [0], [0], [1], [0, 0, 1, 1], [], []>} : vector<8x24xbf16>, vector<24x256xbf16>, vector<8x256xf32> -> vector<8x256xf32>
    %213 = arith.addf %208, %212 : vector<8x256xf32>
    %c0_187 = arith.constant 0 : index
    %c145_188 = arith.constant 145 : index
    %214 = vector.load %arg14[%c0_187, %c145_188] : memref<24x512xbf16, #tpu.memory_space<vmem>>, vector<24x256xbf16>
    %c8_189 = arith.constant 8 : index
    %c0_190 = arith.constant 0 : index
    %c0_191 = arith.constant 0 : index
    %215 = vector.load %arg12[%c8_189, %c0_190, %c0_191] : memref<9x8x24xbf16, #tpu.memory_space<vmem>>, vector<1x8x24xbf16>
    %216 = vector.shape_cast %215 : vector<1x8x24xbf16> to vector<8x24xbf16>
    %cst_192 = arith.constant dense<0.000000e+00> : vector<8x256xf32>
    %217 = tpu.matmul %216, %214, %cst_192 {dimension_numbers = #tpu.dot_dimension_numbers<[1], [0], [0], [1], [0, 0, 1, 1], [], []>} : vector<8x24xbf16>, vector<24x256xbf16>, vector<8x256xf32> -> vector<8x256xf32>
    %218 = vector.broadcast %10 : vector<1x256xf32> to vector<8x256xf32>
    %219 = arith.mulf %217, %218 : vector<8x256xf32>
    %220 = arith.addf %213, %219 : vector<8x256xf32>
    %c0_193 = arith.constant 0 : index
    %c24 = arith.constant 24 : index
    %c0_194 = arith.constant 0 : index
    %221 = vector.load %arg13[%c0_193, %c24, %c0_194] : memref<1x32x256xf32, #tpu.memory_space<vmem>>, vector<1x8x256xf32>
    %222 = vector.shape_cast %221 : vector<1x8x256xf32> to vector<8x256xf32>
    %223 = vector.shape_cast %220 : vector<8x256xf32> to vector<1x8x256xf32>
    tpu.vector_store %arg13[%c0_193, %c24, %c0_194], %223 {strides = array<i32>} : memref<1x32x256xf32, #tpu.memory_space<vmem>>, vector<1x8x256xf32>,
    return
  }
  func.func @transform_0(%arg0: i32) -> (i32, i32, i32) {
    %c0_i32 = arith.constant 0 : i32
    %c0_i32_0 = arith.constant 0 : i32
    %c0_i32_1 = arith.constant 0 : i32
    return %arg0, %c0_i32, %c0_i32_0 : i32, i32, i32
  }
  func.func @transform_1(%arg0: i32) -> (i32, i32) {
    %c0_i32 = arith.constant 0 : i32
    %c0_i32_0 = arith.constant 0 : i32
    %c0_i32_1 = arith.constant 0 : i32
    return %c0_i32, %c0_i32_0 : i32, i32
  }
  func.func @transform_2(%arg0: i32) -> (i32, i32) {
    %c0_i32 = arith.constant 0 : i32
    %c0_i32_0 = arith.constant 0 : i32
    %c0_i32_1 = arith.constant 0 : i32
    return %c0_i32, %c0_i32_0 : i32, i32
  }
  func.func @transform_3(%arg0: i32) -> (i32, i32) {
    %c0_i32 = arith.constant 0 : i32
    %c0_i32_0 = arith.constant 0 : i32
    %c0_i32_1 = arith.constant 0 : i32
    return %c0_i32, %c0_i32_0 : i32, i32
  }
  func.func @transform_4(%arg0: i32) -> (i32, i32) {
    %c0_i32 = arith.constant 0 : i32
    %c0_i32_0 = arith.constant 0 : i32
    %c0_i32_1 = arith.constant 0 : i32
    return %c0_i32, %c0_i32_0 : i32, i32
  }
  func.func @transform_5(%arg0: i32) -> (i32, i32, i32) {
    %c0_i32 = arith.constant 0 : i32
    %c0_i32_0 = arith.constant 0 : i32
    %c0_i32_1 = arith.constant 0 : i32
    %c0_i32_2 = arith.constant 0 : i32
    return %c0_i32, %c0_i32_0, %c0_i32_1 : i32, i32, i32
  }
  func.func @transform_6(%arg0: i32) -> (i32, i32) {
    %c0_i32 = arith.constant 0 : i32
    %c0_i32_0 = arith.constant 0 : i32
    %c0_i32_1 = arith.constant 0 : i32
    return %c0_i32, %c0_i32_0 : i32, i32
  }
  func.func @transform_7(%arg0: i32) -> (i32, i32) {
    %c0_i32 = arith.constant 0 : i32
    %c0_i32_0 = arith.constant 0 : i32
    %c0_i32_1 = arith.constant 0 : i32
    return %c0_i32, %c0_i32_0 : i32, i32
  }
  func.func @transform_8(%arg0: i32) -> (i32, i32, i32) {
    %c0_i32 = arith.constant 0 : i32
    %c0_i32_0 = arith.constant 0 : i32
    %c0_i32_1 = arith.constant 0 : i32
    %c0_i32_2 = arith.constant 0 : i32
    return %c0_i32, %c0_i32_0, %c0_i32_1 : i32, i32, i32
  }
  func.func @transform_9(%arg0: i32) -> (i32, i32) {
    %c0_i32 = arith.constant 0 : i32
    %c0_i32_0 = arith.constant 0 : i32
    %c0_i32_1 = arith.constant 0 : i32
    return %c0_i32, %c0_i32_0 : i32, i32
  }
  func.func @transform_10(%arg0: i32) -> (i32, i32) {
    %c0_i32 = arith.constant 0 : i32
    %c0_i32_0 = arith.constant 0 : i32
    %c0_i32_1 = arith.constant 0 : i32
    return %c0_i32, %c0_i32_0 : i32, i32
  }
  func.func @transform_11(%arg0: i32) -> (i32, i32, i32) {
    %c0_i32 = arith.constant 0 : i32
    %c0_i32_0 = arith.constant 0 : i32
    %c0_i32_1 = arith.constant 0 : i32
    %c0_i32_2 = arith.constant 0 : i32
    return %c0_i32, %c0_i32_0, %c0_i32_1 : i32, i32, i32
  }
  func.func @transform_12(%arg0: i32) -> (i32, i32, i32) {
    %c0_i32 = arith.constant 0 : i32
    %c0_i32_0 = arith.constant 0 : i32
    %c0_i32_1 = arith.constant 0 : i32
    return %arg0, %c0_i32, %c0_i32_0 : i32, i32, i32
  }
}

</mosaic_0001>

<llo_original>
// kernel: dense_block_forward.1
$region0: #{dense_block_forward.1}
  #allocation0 [shape = 'u32[]', space=smem, size = 0x4, offset = 0x4, fixed_abs, tag = 'smem constant byte address 0x4 - core index']
  #allocation1 [shape = 'u32[144,128]{1,0:T(1,128)}', space=vmem, size = 0x12000, scoped, tag = 'internal scratch']
  #allocation2 [shape = 'bf16[24,512]{1,0:T(8,128)(2,1)}', space=vmem, size = 0x6000, scoped, tag = 'scratch operand']
  %s0 = inlined_call_operand.vmem [shape: f32[2,8,256], index: 0, kind: input, shape index: {}]
  %s1 = inlined_call_operand.vmem [shape: f32[1,256], index: 1, kind: input, shape index: {}]
  %s2 = inlined_call_operand.vmem [shape: f32[1,256], index: 2, kind: input, shape index: {}]
  %s3 = inlined_call_operand.vmem [shape: f32[8,1], index: 3, kind: input, shape index: {}]
  %s4 = inlined_call_operand.vmem [shape: f32[8,1], index: 4, kind: input, shape index: {}]
  %s5 = inlined_call_operand.vmem [shape: bf16[9,8,8], index: 5, kind: input, shape index: {}]
  %s6 = inlined_call_operand.vmem [shape: f32[16,1], index: 6, kind: input, shape index: {}]
  %s7 = inlined_call_operand.vmem [shape: f32[16,1], index: 7, kind: input, shape index: {}]
  %s8 = inlined_call_operand.vmem [shape: bf16[9,8,16], index: 8, kind: input, shape index: {}]
  %s9 = inlined_call_operand.vmem [shape: f32[24,1], index: 9, kind: input, shape index: {}]
  %s10 = inlined_call_operand.vmem [shape: f32[24,1], index: 10, kind: input, shape index: {}]
  %s11 = inlined_call_operand.vmem [shape: bf16[9,8,24], index: 11, kind: input, shape index: {}]
  %s12 = inlined_call_operand.vmem [shape: f32[2,32,256], index: 12, kind: output, shape index: {}]
  %s13 = sld [smem:[#allocation0]]
  $region81: #{dense_block_forward.1} parent=0
    _
  %s15 = ssub.s32 1, %s13
  %s16 = scalar_select 0, %s15, %s13
  loop: start=0, step=1, limit=4
  $region2: #{dense_block_forward.1} parent=0 // loop_pre_header
    _
  $region3: #{dense_block_forward.1} parent=0 // loop_header
    %s18 = sphi 0, %s22
    %p19 = scmp.ge.s32.totalorder %s18, 4
    %s28 = sphi 0, %s30
    %s31 = sphi 0, %s28
    %s32 = sphi 0, %s31
    %s48 = sphi 0, %s32
    %s52 = sphi 0, %s52
    %s54 = sphi 0, %s52
    %s55 = sphi 0, %s54
    %s69 = sphi 0, %s55
    %s73 = sphi 0, %s73
    %s75 = sphi 0, %s73
    %s76 = sphi 0, %s75
    %s90 = sphi 0, %s76
    %s94 = sphi 0, %s94
    %s96 = sphi 0, %s94
    %s97 = sphi 0, %s96
    %s111 = sphi 0, %s97
    %s115 = sphi 0, %s115
    %s117 = sphi 0, %s115
    %s118 = sphi 0, %s117
    %s132 = sphi 0, %s118
    %s136 = sphi 0, %s136
    %s138 = sphi 0, %s136
    %s139 = sphi 0, %s138
    %s153 = sphi 0, %s139
    %s157 = sphi 0, %s157
    %s159 = sphi 0, %s157
    %s160 = sphi 0, %s159
    %s174 = sphi 0, %s160
    %s178 = sphi 0, %s178
    %s180 = sphi 0, %s178
    %s181 = sphi 0, %s180
    %s195 = sphi 0, %s181
    %s199 = sphi 0, %s199
    %s201 = sphi 0, %s199
    %s202 = sphi 0, %s201
    %s216 = sphi 0, %s202
    %s220 = sphi 0, %s220
    %s222 = sphi 0, %s220
    %s223 = sphi 0, %s222
    %s237 = sphi 0, %s223
    %s241 = sphi 0, %s241
    %s243 = sphi 0, %s241
    %s244 = sphi 0, %s243
    %s258 = sphi 0, %s244
    %s262 = sphi 0, %s262
    %s264 = sphi 0, %s262
    %s265 = sphi 0, %s264
    %s279 = sphi 0, %s265
    %s285 = sphi 0, %s287
    %s288 = sphi 0, %s285
    %s289 = sphi 0, %s288
    %s305 = sphi 0, %s289
  $region4: #{dense_block_forward.1} parent=0 // loop_header_branch
    %21 = sbr.rel (%p19) target = $region8
  $region5: #{dense_block_forward.1} parent=0 // loop_body
    %s23 = ssub.s32 %s18, 1
    %s24 = ssub.s32 %s18, 2
    %s25 = sadd.s32 %s18, 1
    %s26 = ssub.s32 %s18, %s25
    %p27 = scmp.eq.s32.totalorder %s26, 0
    %s29 = sadd.s32 %s28, 1
    %s30 = scalar_select %p27, %s28, %s29
    %p33 = pneg %p27
    %p34 = scmp.eq.s32.totalorder %s18, 1
    %p35 = por %p33, %p34
    %p36 = scmp.ne.s32.totalorder %s28, %s31
    %p37 = scmp.eq.s32.totalorder %s18, 0
    %p38 = por %p36, %p37
    %p39 = scmp.ne.s32.totalorder %s28, %s31
    %p40 = scmp.eq.s32.totalorder %s23, 1
    %p41 = por %p39, %p40
    %p42 = scmp.ne.s32.totalorder %s31, %s32
    %p43 = scmp.eq.s32.totalorder %s23, 0
    %p44 = por %p42, %p43
    %p45 = scmp.ne.s32.totalorder %s31, %s32
    %p46 = scmp.eq.s32.totalorder %s24, 1
    %p47 = por %p45, %p46
    %p49 = scmp.ne.s32.totalorder %s32, %s48
    %p50 = scmp.eq.s32.totalorder %s24, 0
    %p51 = por %p49, %p50
    %s53 = sadd.s32 %s52, 1
    %p56 = scmp.eq.s32.totalorder %s18, 1
    %p57 = scmp.ne.s32.totalorder %s52, %s54
    %p58 = scmp.eq.s32.totalorder %s18, 0
    %p59 = por %p57, %p58
    %p60 = scmp.ne.s32.totalorder %s52, %s54
    %p61 = scmp.eq.s32.totalorder %s23, 1
    %p62 = por %p60, %p61
    %p63 = scmp.ne.s32.totalorder %s54, %s55
    %p64 = scmp.eq.s32.totalorder %s23, 0
    %p65 = por %p63, %p64
    %p66 = scmp.ne.s32.totalorder %s54, %s55
    %p67 = scmp.eq.s32.totalorder %s24, 1
    %p68 = por %p66, %p67
    %p70 = scmp.ne.s32.totalorder %s55, %s69
    %p71 = scmp.eq.s32.totalorder %s24, 0
    %p72 = por %p70, %p71
    %s74 = sadd.s32 %s73, 1
    %p77 = scmp.eq.s32.totalorder %s18, 1
    %p78 = scmp.ne.s32.totalorder %s73, %s75
    %p79 = scmp.eq.s32.totalorder %s18, 0
    %p80 = por %p78, %p79
    %p81 = scmp.ne.s32.totalorder %s73, %s75
    %p82 = scmp.eq.s32.totalorder %s23, 1
    %p83 = por %p81, %p82
    %p84 = scmp.ne.s32.totalorder %s75, %s76
    %p85 = scmp.eq.s32.totalorder %s23, 0
    %p86 = por %p84, %p85
    %p87 = scmp.ne.s32.totalorder %s75, %s76
    %p88 = scmp.eq.s32.totalorder %s24, 1
    %p89 = por %p87, %p88
    %p91 = scmp.ne.s32.totalorder %s76, %s90
    %p92 = scmp.eq.s32.totalorder %s24, 0
    %p93 = por %p91, %p92
    %s95 = sadd.s32 %s94, 1
    %p98 = scmp.eq.s32.totalorder %s18, 1
    %p99 = scmp.ne.s32.totalorder %s94, %s96
    %p100 = scmp.eq.s32.totalorder %s18, 0
    %p101 = por %p99, %p100
    %p102 = scmp.ne.s32.totalorder %s94, %s96
    %p103 = scmp.eq.s32.totalorder %s23, 1
    %p104 = por %p102, %p103
    %p105 = scmp.ne.s32.totalorder %s96, %s97
    %p106 = scmp.eq.s32.totalorder %s23, 0
    %p107 = por %p105, %p106
    %p108 = scmp.ne.s32.totalorder %s96, %s97
    %p109 = scmp.eq.s32.totalorder %s24, 1
    %p110 = por %p108, %p109
    %p112 = scmp.ne.s32.totalorder %s97, %s111
    %p113 = scmp.eq.s32.totalorder %s24, 0
    %p114 = por %p112, %p113
    %s116 = sadd.s32 %s115, 1
    %p119 = scmp.eq.s32.totalorder %s18, 1
    %p120 = scmp.ne.s32.totalorder %s115, %s117
    %p121 = scmp.eq.s32.totalorder %s18, 0
    %p122 = por %p120, %p121
    %p123 = scmp.ne.s32.totalorder %s115, %s117
    %p124 = scmp.eq.s32.totalorder %s23, 1
    %p125 = por %p123, %p124
    %p126 = scmp.ne.s32.totalorder %s117, %s118
    %p127 = scmp.eq.s32.totalorder %s23, 0
    %p128 = por %p126, %p127
    %p129 = scmp.ne.s32.totalorder %s117, %s118
    %p130 = scmp.eq.s32.totalorder %s24, 1
    %p131 = por %p129, %p130
    %p133 = scmp.ne.s32.totalorder %s118, %s132
    %p134 = scmp.eq.s32.totalorder %s24, 0
    %p135 = por %p133, %p134
    %s137 = sadd.s32 %s136, 1
    %p140 = scmp.eq.s32.totalorder %s18, 1
    %p141 = scmp.ne.s32.totalorder %s136, %s138
    %p142 = scmp.eq.s32.totalorder %s18, 0
    %p143 = por %p141, %p142
    %p144 = scmp.ne.s32.totalorder %s136, %s138
    %p145 = scmp.eq.s32.totalorder %s23, 1
    %p146 = por %p144, %p145
    %p147 = scmp.ne.s32.totalorder %s138, %s139
    %p148 = scmp.eq.s32.totalorder %s23, 0
    %p149 = por %p147, %p148
    %p150 = scmp.ne.s32.totalorder %s138, %s139
    %p151 = scmp.eq.s32.totalorder %s24, 1
    %p152 = por %p150, %p151
    %p154 = scmp.ne.s32.totalorder %s139, %s153
    %p155 = scmp.eq.s32.totalorder %s24, 0
    %p156 = por %p154, %p155
    %s158 = sadd.s32 %s157, 1
    %p161 = scmp.eq.s32.totalorder %s18, 1
    %p162 = scmp.ne.s32.totalorder %s157, %s159
    %p163 = scmp.eq.s32.totalorder %s18, 0
    %p164 = por %p162, %p163
    %p165 = scmp.ne.s32.totalorder %s157, %s159
    %p166 = scmp.eq.s32.totalorder %s23, 1
    %p167 = por %p165, %p166
    %p168 = scmp.ne.s32.totalorder %s159, %s160
    %p169 = scmp.eq.s32.totalorder %s23, 0
    %p170 = por %p168, %p169
    %p171 = scmp.ne.s32.totalorder %s159, %s160
    %p172 = scmp.eq.s32.totalorder %s24, 1
    %p173 = por %p171, %p172
    %p175 = scmp.ne.s32.totalorder %s160, %s174
    %p176 = scmp.eq.s32.totalorder %s24, 0
    %p177 = por %p175, %p176
    %s179 = sadd.s32 %s178, 1
    %p182 = scmp.eq.s32.totalorder %s18, 1
    %p183 = scmp.ne.s32.totalorder %s178, %s180
    %p184 = scmp.eq.s32.totalorder %s18, 0
    %p185 = por %p183, %p184
    %p186 = scmp.ne.s32.totalorder %s178, %s180
    %p187 = scmp.eq.s32.totalorder %s23, 1
    %p188 = por %p186, %p187
    %p189 = scmp.ne.s32.totalorder %s180, %s181
    %p190 = scmp.eq.s32.totalorder %s23, 0
    %p191 = por %p189, %p190
    %p192 = scmp.ne.s32.totalorder %s180, %s181
    %p193 = scmp.eq.s32.totalorder %s24, 1
    %p194 = por %p192, %p193
    %p196 = scmp.ne.s32.totalorder %s181, %s195
    %p197 = scmp.eq.s32.totalorder %s24, 0
    %p198 = por %p196, %p197
    %s200 = sadd.s32 %s199, 1
    %p203 = scmp.eq.s32.totalorder %s18, 1
    %p204 = scmp.ne.s32.totalorder %s199, %s201
    %p205 = scmp.eq.s32.totalorder %s18, 0
    %p206 = por %p204, %p205
    %p207 = scmp.ne.s32.totalorder %s199, %s201
    %p208 = scmp.eq.s32.totalorder %s23, 1
    %p209 = por %p207, %p208
    %p210 = scmp.ne.s32.totalorder %s201, %s202
    %p211 = scmp.eq.s32.totalorder %s23, 0
    %p212 = por %p210, %p211
    %p213 = scmp.ne.s32.totalorder %s201, %s202
    %p214 = scmp.eq.s32.totalorder %s24, 1
    %p215 = por %p213, %p214
    %p217 = scmp.ne.s32.totalorder %s202, %s216
    %p218 = scmp.eq.s32.totalorder %s24, 0
    %p219 = por %p217, %p218
    %s221 = sadd.s32 %s220, 1
    %p224 = scmp.eq.s32.totalorder %s18, 1
    %p225 = scmp.ne.s32.totalorder %s220, %s222
    %p226 = scmp.eq.s32.totalorder %s18, 0
    %p227 = por %p225, %p226
    %p228 = scmp.ne.s32.totalorder %s220, %s222
    %p229 = scmp.eq.s32.totalorder %s23, 1
    %p230 = por %p228, %p229
    %p231 = scmp.ne.s32.totalorder %s222, %s223
    %p232 = scmp.eq.s32.totalorder %s23, 0
    %p233 = por %p231, %p232
    %p234 = scmp.ne.s32.totalorder %s222, %s223
    %p235 = scmp.eq.s32.totalorder %s24, 1
    %p236 = por %p234, %p235
    %p238 = scmp.ne.s32.totalorder %s223, %s237
    %p239 = scmp.eq.s32.totalorder %s24, 0
    %p240 = por %p238, %p239
    %s242 = sadd.s32 %s241, 1
    %p245 = scmp.eq.s32.totalorder %s18, 1
    %p246 = scmp.ne.s32.totalorder %s241, %s243
    %p247 = scmp.eq.s32.totalorder %s18, 0
    %p248 = por %p246, %p247
    %p249 = scmp.ne.s32.totalorder %s241, %s243
    %p250 = scmp.eq.s32.totalorder %s23, 1
    %p251 = por %p249, %p250
    %p252 = scmp.ne.s32.totalorder %s243, %s244
    %p253 = scmp.eq.s32.totalorder %s23, 0
    %p254 = por %p252, %p253
    %p255 = scmp.ne.s32.totalorder %s243, %s244
    %p256 = scmp.eq.s32.totalorder %s24, 1
    %p257 = por %p255, %p256
    %p259 = scmp.ne.s32.totalorder %s244, %s258
    %p260 = scmp.eq.s32.totalorder %s24, 0
    %p261 = por %p259, %p260
    %s263 = sadd.s32 %s262, 1
    %p266 = scmp.eq.s32.totalorder %s18, 1
    %p267 = scmp.ne.s32.totalorder %s262, %s264
    %p268 = scmp.eq.s32.totalorder %s18, 0
    %p269 = por %p267, %p268
    %p270 = scmp.ne.s32.totalorder %s262, %s264
    %p271 = scmp.eq.s32.totalorder %s23, 1
    %p272 = por %p270, %p271
    %p273 = scmp.ne.s32.totalorder %s264, %s265
    %p274 = scmp.eq.s32.totalorder %s23, 0
    %p275 = por %p273, %p274
    %p276 = scmp.ne.s32.totalorder %s264, %s265
    %p277 = scmp.eq.s32.totalorder %s24, 1
    %p278 = por %p276, %p277
    %p280 = scmp.ne.s32.totalorder %s265, %s279
    %p281 = scmp.eq.s32.totalorder %s24, 0
    %p282 = por %p280, %p281
    %s283 = ssub.s32 %s18, %s25
    %p284 = scmp.eq.s32.totalorder %s283, 0
    %s286 = sadd.s32 %s285, 1
    %s287 = scalar_select %p284, %s285, %s286
    %p290 = pneg %p284
    %p291 = scmp.eq.s32.totalorder %s18, 1
    %p292 = por %p290, %p291
    %p293 = scmp.ne.s32.totalorder %s285, %s288
    %p294 = scmp.eq.s32.totalorder %s18, 0
    %p295 = por %p293, %p294
    %p296 = scmp.ne.s32.totalorder %s285, %s288
    %p297 = scmp.eq.s32.totalorder %s23, 1
    %p298 = por %p296, %p297
    %p299 = scmp.ne.s32.totalorder %s288, %s289
    %p300 = scmp.eq.s32.totalorder %s23, 0
    %p301 = por %p299, %p300
    %p302 = scmp.ne.s32.totalorder %s288, %s289
    %p303 = scmp.eq.s32.totalorder %s24, 1
    %p304 = por %p302, %p303
    %p306 = scmp.ne.s32.totalorder %s289, %s305
    %p307 = scmp.eq.s32.totalorder %s24, 0
    %p308 = por %p306, %p307
    %p309 = scmp.le.s32.totalorder 1, %s18
    %p310 = scmp.lt.s32.totalorder %s18, 3
    %p311 = pnand %p309, %p310
    %p312 = pneg %p311
    // Predicated region
    $region9: #{dense_block_forward.1} parent=5 // pred_check
      _
    $region10: #{dense_block_forward.1} parent=5 // pred_check_branch
      %314 = sbr.rel (%p311) target = $region12
    $region11: #{dense_block_forward.1} parent=5 // pred_region
      %s315 = ssub.s32 %s18, 1
      // Predicated region
      $region13: #{dense_block_forward.1} parent=11 // pred_check
        %p316 = pneg %p65
      $region14: #{dense_block_forward.1} parent=11 // pred_check_branch
        %318 = sbr.rel (%p316) target = $region16
      $region15: #{dense_block_forward.1} parent=11 // pred_region
        _
      $region16: #{dense_block_forward.1} parent=11 // pred_fallthru
        _
      // Predicated region
      $region17: #{dense_block_forward.1} parent=11 // pred_check
        %p319 = pneg %p86
      $region18: #{dense_block_forward.1} parent=11 // pred_check_branch
        %321 = sbr.rel (%p319) target = $region20
      $region19: #{dense_block_forward.1} parent=11 // pred_region
        _
      $region20: #{dense_block_forward.1} parent=11 // pred_fallthru
        _
      // Predicated region
      $region21: #{dense_block_forward.1} parent=11 // pred_check
        %p322 = pneg %p107
      $region22: #{dense_block_forward.1} parent=11 // pred_check_branch
        %324 = sbr.rel (%p322) target = $region24
      $region23: #{dense_block_forward.1} parent=11 // pred_region
        _
      $region24: #{dense_block_forward.1} parent=11 // pred_fallthru
        _
      // Predicated region
      $region25: #{dense_block_forward.1} parent=11 // pred_check
        %p325 = pneg %p128
      $region26: #{dense_block_forward.1} parent=11 // pred_check_branch
        %327 = sbr.rel (%p325) target = $region28
      $region27: #{dense_block_forward.1} parent=11 // pred_region
        _
      $region28: #{dense_block_forward.1} parent=11 // pred_fallthru
        _
      // Predicated region
      $region29: #{dense_block_forward.1} parent=11 // pred_check
        %p328 = pneg %p149
      $region30: #{dense_block_forward.1} parent=11 // pred_check_branch
        %330 = sbr.rel (%p328) target = $region32
      $region31: #{dense_block_forward.1} parent=11 // pred_region
        _
      $region32: #{dense_block_forward.1} parent=11 // pred_fallthru
        _
      // Predicated region
      $region33: #{dense_block_forward.1} parent=11 // pred_check
        %p331 = pneg %p170
      $region34: #{dense_block_forward.1} parent=11 // pred_check_branch
        %333 = sbr.rel (%p331) target = $region36
      $region35: #{dense_block_forward.1} parent=11 // pred_region
        _
      $region36: #{dense_block_forward.1} parent=11 // pred_fallthru
        _
      // Predicated region
      $region37: #{dense_block_forward.1} parent=11 // pred_check
        %p334 = pneg %p191
      $region38: #{dense_block_forward.1} parent=11 // pred_check_branch
        %336 = sbr.rel (%p334) target = $region40
      $region39: #{dense_block_forward.1} parent=11 // pred_region
        _
      $region40: #{dense_block_forward.1} parent=11 // pred_fallthru
        _
      // Predicated region
      $region41: #{dense_block_forward.1} parent=11 // pred_check
        %p337 = pneg %p212
      $region42: #{dense_block_forward.1} parent=11 // pred_check_branch
        %339 = sbr.rel (%p337) target = $region44
      $region43: #{dense_block_forward.1} parent=11 // pred_region
        _
      $region44: #{dense_block_forward.1} parent=11 // pred_fallthru
        _
      // Predicated region
      $region45: #{dense_block_forward.1} parent=11 // pred_check
        %p340 = pneg %p233
      $region46: #{dense_block_forward.1} parent=11 // pred_check_branch
        %342 = sbr.rel (%p340) target = $region48
      $region47: #{dense_block_forward.1} parent=11 // pred_region
        _
      $region48: #{dense_block_forward.1} parent=11 // pred_fallthru
        _
      // Predicated region
      $region49: #{dense_block_forward.1} parent=11 // pred_check
        %p343 = pneg %p254
      $region50: #{dense_block_forward.1} parent=11 // pred_check_branch
        %345 = sbr.rel (%p343) target = $region52
      $region51: #{dense_block_forward.1} parent=11 // pred_region
        _
      $region52: #{dense_block_forward.1} parent=11 // pred_fallthru
        _
      // Predicated region
      $region53: #{dense_block_forward.1} parent=11 // pred_check
        %p346 = pneg %p275
      $region54: #{dense_block_forward.1} parent=11 // pred_check_branch
        %348 = sbr.rel (%p346) target = $region56
      $region55: #{dense_block_forward.1} parent=11 // pred_region
        _
      $region56: #{dense_block_forward.1} parent=11 // pred_fallthru
        _
    $region12: #{dense_block_forward.1} parent=5 // pred_fallthru
      _
    %p349 = scmp.lt.s32.totalorder %s18, 2
    // Predicated region
    $region57: #{dense_block_forward.1} parent=5 // pred_check
      %p350 = pneg %p349
    $region58: #{dense_block_forward.1} parent=5 // pred_check_branch
      %352 = sbr.rel (%p350) target = $region60
    $region59: #{dense_block_forward.1} parent=5 // pred_region
      // Predicated region
      $region61: #{dense_block_forward.1} parent=59 // pred_check
        %p353 = pneg %p38
      $region62: #{dense_block_forward.1} parent=59 // pred_check_branch
        %355 = sbr.rel (%p353) target = $region64
      $region63: #{dense_block_forward.1} parent=59 // pred_region
        %p356 = scmp.lt.s32.totalorder %s18, 1
        %s357 = scalar_select %p356, %s18, 1
        %s358 = smul.addr %s357, 2
        %s359 = smul.addr %s358, 8
        %s360 = scalar_lea.vmem %s0, %s359
      $region64: #{dense_block_forward.1} parent=59 // pred_fallthru
        _
    $region60: #{dense_block_forward.1} parent=5 // pred_fallthru
      _
    %p361 = scmp.le.s32.totalorder 1, %s18
    %p362 = scmp.lt.s32.totalorder %s18, 3
    %p363 = pnand %p361, %p362
    %p364 = pneg %p363
    // Predicated region
    $region65: #{dense_block_forward.1} parent=5 // pred_check
      _
    $region66: #{dense_block_forward.1} parent=5 // pred_check_branch
      %366 = sbr.rel (%p363) target = $region68
    $region67: #{dense_block_forward.1} parent=5 // pred_region
      %s367 = ssub.s32 %s18, 1
      %p368 = scmp.lt.s32.totalorder %s23, 1
      %s369 = scalar_select %p368, %s23, 1
      %s370 = smul.addr %s369, 2
      %s371 = smul.addr %s370, 8
      %s372 = scalar_lea.vmem %s0, %s371
      %p373 = pneg %p44
      %p374 = pneg %p41
      %p375 = pneg %p65
      %p376 = pneg %p62
      %p377 = pneg %p86
      %p378 = pneg %p83
      %p379 = pneg %p107
      %p380 = pneg %p104
      %p381 = pneg %p128
      %p382 = pneg %p125
      %p383 = pneg %p149
      %p384 = pneg %p146
      %p385 = pneg %p170
      %p386 = pneg %p167
      %p387 = pneg %p191
      %p388 = pneg %p188
      %p389 = pneg %p212
      %p390 = pneg %p209
      %p391 = pneg %p233
      %p392 = pneg %p230
      %p393 = pneg %p254
      %p394 = pneg %p251
      %p395 = pneg %p275
      %p396 = pneg %p272
      %p397 = pneg %p301
      %p398 = pneg %p298
      %p399 = scmp.lt.s32.totalorder %s23, 1
      %s400 = scalar_select %p399, %s23, 1
      %s401 = smul.addr %s400, 8
      %s402 = smul.addr %s401, 8
      %s403 = scalar_lea.vmem %s12, %s402
      %p404 = scmp.lt.s32.totalorder %s23, 1
      %s405 = scalar_select %p404, %s23, 1
      %s406 = smul.addr %s405, 2
      %s407 = smul.addr %s406, 8
      %s408 = scalar_lea.vmem %s0, %s407
      %p409 = scmp.lt.s32.totalorder %s23, 1
      %s410 = scalar_select %p409, %s23, 1
      %s411 = smul.addr %s410, 8
      %s412 = smul.addr %s411, 8
      %s413 = scalar_lea.vmem %s12, %s412
      %v415 = vld [vmem:[%s408] sm:$0xff]
      %v416 = vld [vmem:[%s408 + $0x8] sm:$0xff]
      %417 = vst [vmem:[%s413] sm:$0xff] %v415
      %418 = vst [vmem:[%s413 + $0x8] sm:$0xff] %v416
      %419 = vst [vmem:[#allocation2] sm:$0xf] 0
      %420 = vst [vmem:[#allocation2 + $0x10] sm:$0xf] 0
      %421 = vst [vmem:[#allocation2 + $0x20] sm:$0xf] 0
      %422 = vst [vmem:[#allocation2 + $0xc] sm:$0xf] 0
      %423 = vst [vmem:[#allocation2 + $0x1c] sm:$0xf] 0
      %424 = vst [vmem:[#allocation2 + $0x2c] sm:$0xf] 0
      %v425 = vld [vmem:[%s1] sm:$0x3]
      %v426 = vld [vmem:[%s2] sm:$0x3]
      %v427 = vld [vmem:[%s3] sm:$0xff]
      %v428 = vld [vmem:[%s4] sm:$0xff]
      %v429 = vld [vmem:[%s413] sm:$0xff]
      %v430 = vld [vmem:[%s413 + $0x8] sm:$0xff]
      %432 = vset.pattern.permute.xlu0 0
      %433 = vperm.xlu0 %432, %v427
      %v434 = vpop.permute.xlu0 %433
      %v436 = vmul.f32 %v429, %v434
      %v437 = vmul.f32 %v430, %v434
      %439 = vset.pattern.permute.xlu0 0
      %440 = vperm.xlu0 %439, %v428
      %v441 = vpop.permute.xlu0 %440
      %v443 = vadd.f32 %v436, %v441
      %v444 = vadd.f32 %v437, %v441
      %v445 = vmax.f32 %v443, 0.0
      %v446 = vmax.f32 %v444, 0.0
      %v447 = vpack.c.bf16 %v445, %v445
      %v448 = vpack.c.bf16 %v446, %v446
      %v451 = vunpack.c.l.b16 %v447
      %v452 = vunpack.c.l.b16 %v448
      %v453 = vpack.c.b16 %v452, %v451
      %455 = vst [vmem:[#allocation2 + $0x4] sm:$0xff] %v453
      %v456 = vld [vmem:[#allocation2] sm:$0xff]
      %v457 = vld [vmem:[#allocation2 + $0x8] sm:$0xf]
      %v458 = vld [vmem:[%s5] sm:$0xf]
      %v461 = vunpack.c.l.b16 %v456
      %v462 = vunpack.c.h.b16 %v456
      %v463 = vunpack.c.l.b16 %v457
      %v464 = vpack.c.b16 %v461, %v461
      %v465 = vpack.c.b16 %v462, %v462
      %v466 = vpack.c.b16 %v463, %v463
      %467 = vrot.lane.b32.xlu0 %v464, 17
      %v468 = vpop.permute.xlu0 %467
      %469 = vrot.lane.b32.xlu0 %v465, 17
      %v470 = vpop.permute.xlu0 %469
      %471 = vrot.lane.b32.xlu0 %v466, 17
      %v472 = vpop.permute.xlu0 %471
      %vm473 = vcmask 138240
      %v474 = vsel %vm473, %v468, %v470
      %v475 = vsel %vm473, %v470, %v472
      %vm476 = vcmask 64512
      %v478 = vsel %vm476, %v458, 0
      %vm480 = vcmask 1043456
      %v482 = vsel %vm480, %v474, 0
      %v485 = vsel %vm480, %v475, 0
      %487 = vmatprep.subr.bf16.mxu0 0
      %488 = vmatpush1.bf16.msra.mxu0 0
      %489 = vmatprep.subr.bf16.mxu0 0
      %490 = vmatpush1.bf16.msra.mxu0 0
      %491 = vmatprep.subr.bf16.mxu0 0
      %492 = vmatpush1.bf16.msra.mxu0 0
      %493 = vmatprep.subr.bf16.mxu0 0
      %494 = vmatpush1.bf16.msra.mxu0 0
      %495 = vmatprep.subr.bf16.mxu0 0
      %496 = vmatpush1.bf16.msra.mxu0 0
      %497 = vmatprep.subr.bf16.mxu0 0
      %498 = vmatpush1.bf16.msra.mxu0 0
      %499 = vmatprep.subr.bf16.mxu0 0
      %500 = vmatpush1.bf16.msra.mxu0 0
      %501 = vmatprep.subr.bf16.mxu0 %v485
      %502 = vmatpush1.bf16.msra.mxu0 %v482
      %503 = vmatprep.subr.bf16.mxu0 0
      %504 = vmatpush2.bf16.msra.mxu0 0
      %505 = vmatprep.subr.bf16.mxu0 0
      %506 = vmatpush2.bf16.msra.mxu0 0
      %507 = vmatprep.subr.bf16.mxu0 0
      %508 = vmatpush2.bf16.msra.mxu0 0
      %509 = vmatprep.subr.bf16.mxu0 0
      %510 = vmatpush2.bf16.msra.mxu0 0
      %511 = vmatprep.subr.bf16.mxu0 0
      %512 = vmatpush2.bf16.msra.mxu0 0
      %513 = vmatprep.subr.bf16.mxu0 0
      %514 = vmatpush2.bf16.msra.mxu0 0
      %515 = vmatprep.subr.bf16.mxu0 0
      %516 = vmatpush2.bf16.msra.mxu0 0
      %517 = vmatprep.subr.bf16.mxu0 0
      %518 = vmatpush2.bf16.msra.mxu0 0
      %519 = vmatprep.mubr.bf16.mxu0 0
      %520 = vmatmul.mubr.bf16.gmra.mxu0 %v478
      %v521 = vpop.f32.mrf.mxu0
      %v522 = vadd.f32 0.0, %v521
      %v523 = vpop.f32.mrf.mxu0
      %v524 = vadd.f32 0.0, %v523
      %v525 = vpop.f32.mrf.mxu0
      %v526 = vpop.f32.mrf.mxu0
      %527 = vdwg.mxu0
      %v529 = vlaneseq
      %v530 = vshrl.u32 %v529, 7
      %v531 = vsub.s32 0, %v530
      %v532 = vrot.slane %v425, %v531
      %v533 = vlaneseq
      %v534 = vshrl.u32 %v533, 7
      %v535 = vsub.s32 1, %v534
      %v536 = vrot.slane %v425, %v535
      %v539 = vmul.f32 %v522, %v532
      %v540 = vmul.f32 %v524, %v536
      %s541 = scalar_lea.vmem %s5, 4
      %v542 = vld [vmem:[%s541] sm:$0xf]
      %543 = vrot.lane.b32.xlu0 %v464, 16
      %v544 = vpop.permute.xlu0 %543
      %545 = vrot.lane.b32.xlu0 %v465, 16
      %v546 = vpop.permute.xlu0 %545
      %547 = vrot.lane.b32.xlu0 %v466, 16
      %v548 = vpop.permute.xlu0 %547
      %vm549 = vcmask 130048
      %v550 = vsel %vm549, %v544, %v546
      %v551 = vsel %vm549, %v546, %v548
      %v553 = vsel %vm476, %v542, 0
      %v556 = vsel %vm480, %v550, 0
      %v559 = vsel %vm480, %v551, 0
      %561 = vmatprep.subr.bf16.mxu0 0
      %562 = vmatpush1.bf16.msra.mxu0 0
      %563 = vmatprep.subr.bf16.mxu0 0
      %564 = vmatpush1.bf16.msra.mxu0 0
      %565 = vmatprep.subr.bf16.mxu0 0
      %566 = vmatpush1.bf16.msra.mxu0 0
      %567 = vmatprep.subr.bf16.mxu0 0
      %568 = vmatpush1.bf16.msra.mxu0 0
      %569 = vmatprep.subr.bf16.mxu0 0
      %570 = vmatpush1.bf16.msra.mxu0 0
      %571 = vmatprep.subr.bf16.mxu0 0
      %572 = vmatpush1.bf16.msra.mxu0 0
      %573 = vmatprep.subr.bf16.mxu0 0
      %574 = vmatpush1.bf16.msra.mxu0 0
      %575 = vmatprep.subr.bf16.mxu0 %v559
      %576 = vmatpush1.bf16.msra.mxu0 %v556
      %577 = vmatprep.subr.bf16.mxu0 0
      %578 = vmatpush2.bf16.msra.mxu0 0
      %579 = vmatprep.subr.bf16.mxu0 0
      %580 = vmatpush2.bf16.msra.mxu0 0
      %581 = vmatprep.subr.bf16.mxu0 0
      %582 = vmatpush2.bf16.msra.mxu0 0
      %583 = vmatprep.subr.bf16.mxu0 0
      %584 = vmatpush2.bf16.msra.mxu0 0
      %585 = vmatprep.subr.bf16.mxu0 0
      %586 = vmatpush2.bf16.msra.mxu0 0
      %587 = vmatprep.subr.bf16.mxu0 0
      %588 = vmatpush2.bf16.msra.mxu0 0
      %589 = vmatprep.subr.bf16.mxu0 0
      %590 = vmatpush2.bf16.msra.mxu0 0
      %591 = vmatprep.subr.bf16.mxu0 0
      %592 = vmatpush2.bf16.msra.mxu0 0
      %593 = vmatprep.mubr.bf16.mxu0 0
      %594 = vmatmul.mubr.bf16.gmra.mxu0 %v553
      %v595 = vpop.f32.mrf.mxu0
      %v596 = vadd.f32 0.0, %v595
      %v597 = vpop.f32.mrf.mxu0
      %v598 = vadd.f32 0.0, %v597
      %v599 = vpop.f32.mrf.mxu0
      %v600 = vpop.f32.mrf.mxu0
      %601 = vdwg.mxu0
      %v602 = vadd.f32 %v539, %v596
      %v603 = vadd.f32 %v540, %v598
      %s604 = scalar_lea.vmem %s5, 8
      %v605 = vld [vmem:[%s604] sm:$0xf]
      %606 = vrot.lane.b32.xlu0 %v464, 15
      %v607 = vpop.permute.xlu0 %606
      %608 = vrot.lane.b32.xlu0 %v465, 15
      %v609 = vpop.permute.xlu0 %608
      %610 = vrot.lane.b32.xlu0 %v466, 15
      %v611 = vpop.permute.xlu0 %610
      %vm612 = vcmask 121856
      %v613 = vsel %vm612, %v607, %v609
      %v614 = vsel %vm612, %v609, %v611
      %v616 = vsel %vm476, %v605, 0
      %v619 = vsel %vm480, %v613, 0
      %v622 = vsel %vm480, %v614, 0
      %624 = vmatprep.subr.bf16.mxu0 0
      %625 = vmatpush1.bf16.msra.mxu0 0
      %626 = vmatprep.subr.bf16.mxu0 0
      %627 = vmatpush1.bf16.msra.mxu0 0
      %628 = vmatprep.subr.bf16.mxu0 0
      %629 = vmatpush1.bf16.msra.mxu0 0
      %630 = vmatprep.subr.bf16.mxu0 0
      %631 = vmatpush1.bf16.msra.mxu0 0
      %632 = vmatprep.subr.bf16.mxu0 0
      %633 = vmatpush1.bf16.msra.mxu0 0
      %634 = vmatprep.subr.bf16.mxu0 0
      %635 = vmatpush1.bf16.msra.mxu0 0
      %636 = vmatprep.subr.bf16.mxu0 0
      %637 = vmatpush1.bf16.msra.mxu0 0
      %638 = vmatprep.subr.bf16.mxu0 %v622
      %639 = vmatpush1.bf16.msra.mxu0 %v619
      %640 = vmatprep.subr.bf16.mxu0 0
      %641 = vmatpush2.bf16.msra.mxu0 0
      %642 = vmatprep.subr.bf16.mxu0 0
      %643 = vmatpush2.bf16.msra.mxu0 0
      %644 = vmatprep.subr.bf16.mxu0 0
      %645 = vmatpush2.bf16.msra.mxu0 0
      %646 = vmatprep.subr.bf16.mxu0 0
      %647 = vmatpush2.bf16.msra.mxu0 0
      %648 = vmatprep.subr.bf16.mxu0 0
      %649 = vmatpush2.bf16.msra.mxu0 0
      %650 = vmatprep.subr.bf16.mxu0 0
      %651 = vmatpush2.bf16.msra.mxu0 0
      %652 = vmatprep.subr.bf16.mxu0 0
      %653 = vmatpush2.bf16.msra.mxu0 0
      %654 = vmatprep.subr.bf16.mxu0 0
      %655 = vmatpush2.bf16.msra.mxu0 0
      %656 = vmatprep.mubr.bf16.mxu0 0
      %657 = vmatmul.mubr.bf16.gmra.mxu0 %v616
      %v658 = vpop.f32.mrf.mxu0
      %v659 = vadd.f32 0.0, %v658
      %v660 = vpop.f32.mrf.mxu0
      %v661 = vadd.f32 0.0, %v660
      %v662 = vpop.f32.mrf.mxu0
      %v663 = vpop.f32.mrf.mxu0
      %664 = vdwg.mxu0
      %v666 = vlaneseq
      %v667 = vshrl.u32 %v666, 7
      %v668 = vsub.s32 0, %v667
      %v669 = vrot.slane %v426, %v668
      %v670 = vlaneseq
      %v671 = vshrl.u32 %v670, 7
      %v672 = vsub.s32 1, %v671
      %v673 = vrot.slane %v426, %v672
      %v676 = vmul.f32 %v659, %v669
      %v677 = vmul.f32 %v661, %v673
      %v678 = vadd.f32 %v602, %v676
      %v679 = vadd.f32 %v603, %v677
      %s680 = scalar_lea.vmem %s5, 12
      %v681 = vld [vmem:[%s680] sm:$0xf]
      %682 = vrot.lane.b32.xlu0 %v464, 1
      %v683 = vpop.permute.xlu0 %682
      %684 = vrot.lane.b32.xlu0 %v465, 1
      %v685 = vpop.permute.xlu0 %684
      %686 = vrot.lane.b32.xlu0 %v466, 1
      %v687 = vpop.permute.xlu0 %686
      %vm688 = vcmask 7168
      %v689 = vsel %vm688, %v683, %v685
      %v690 = vsel %vm688, %v685, %v687
      %v692 = vsel %vm476, %v681, 0
      %v695 = vsel %vm480, %v689, 0
      %v698 = vsel %vm480, %v690, 0
      %700 = vmatprep.subr.bf16.mxu0 0
      %701 = vmatpush1.bf16.msra.mxu0 0
      %702 = vmatprep.subr.bf16.mxu0 0
      %703 = vmatpush1.bf16.msra.mxu0 0
      %704 = vmatprep.subr.bf16.mxu0 0
      %705 = vmatpush1.bf16.msra.mxu0 0
      %706 = vmatprep.subr.bf16.mxu0 0
      %707 = vmatpush1.bf16.msra.mxu0 0
      %708 = vmatprep.subr.bf16.mxu0 0
      %709 = vmatpush1.bf16.msra.mxu0 0
      %710 = vmatprep.subr.bf16.mxu0 0
      %711 = vmatpush1.bf16.msra.mxu0 0
      %712 = vmatprep.subr.bf16.mxu0 0
      %713 = vmatpush1.bf16.msra.mxu0 0
      %714 = vmatprep.subr.bf16.mxu0 %v698
      %715 = vmatpush1.bf16.msra.mxu0 %v695
      %716 = vmatprep.subr.bf16.mxu0 0
      %717 = vmatpush2.bf16.msra.mxu0 0
      %718 = vmatprep.subr.bf16.mxu0 0
      %719 = vmatpush2.bf16.msra.mxu0 0
      %720 = vmatprep.subr.bf16.mxu0 0
      %721 = vmatpush2.bf16.msra.mxu0 0
      %722 = vmatprep.subr.bf16.mxu0 0
      %723 = vmatpush2.bf16.msra.mxu0 0
      %724 = vmatprep.subr.bf16.mxu0 0
      %725 = vmatpush2.bf16.msra.mxu0 0
      %726 = vmatprep.subr.bf16.mxu0 0
      %727 = vmatpush2.bf16.msra.mxu0 0
      %728 = vmatprep.subr.bf16.mxu0 0
      %729 = vmatpush2.bf16.msra.mxu0 0
      %730 = vmatprep.subr.bf16.mxu0 0
      %731 = vmatpush2.bf16.msra.mxu0 0
      %732 = vmatprep.mubr.bf16.mxu0 0
      %733 = vmatmul.mubr.bf16.gmra.mxu0 %v692
      %v734 = vpop.f32.mrf.mxu0
      %v735 = vadd.f32 0.0, %v734
      %v736 = vpop.f32.mrf.mxu0
      %v737 = vadd.f32 0.0, %v736
      %v738 = vpop.f32.mrf.mxu0
      %v739 = vpop.f32.mrf.mxu0
      %740 = vdwg.mxu0
      %v741 = vmul.f32 %v735, %v532
      %v742 = vmul.f32 %v737, %v536
      %v743 = vadd.f32 %v678, %v741
      %v744 = vadd.f32 %v679, %v742
      %v745 = vld [vmem:[#allocation2 + $0x4] sm:$0xff]
      %s746 = scalar_lea.vmem %s5, 16
      %v747 = vld [vmem:[%s746] sm:$0xf]
      %v749 = vunpack.c.l.b16 %v745
      %v750 = vunpack.c.h.b16 %v745
      %v751 = vpack.c.b16 %v749, %v749
      %v752 = vpack.c.b16 %v750, %v750
      %v754 = vsel %vm476, %v747, 0
      %v757 = vsel %vm480, %v751, 0
      %v760 = vsel %vm480, %v752, 0
      %762 = vmatprep.subr.bf16.mxu0 0
      %763 = vmatpush1.bf16.msra.mxu0 0
      %764 = vmatprep.subr.bf16.mxu0 0
      %765 = vmatpush1.bf16.msra.mxu0 0
      %766 = vmatprep.subr.bf16.mxu0 0
      %767 = vmatpush1.bf16.msra.mxu0 0
      %768 = vmatprep.subr.bf16.mxu0 0
      %769 = vmatpush1.bf16.msra.mxu0 0
      %770 = vmatprep.subr.bf16.mxu0 0
      %771 = vmatpush1.bf16.msra.mxu0 0
      %772 = vmatprep.subr.bf16.mxu0 0
      %773 = vmatpush1.bf16.msra.mxu0 0
      %774 = vmatprep.subr.bf16.mxu0 0
      %775 = vmatpush1.bf16.msra.mxu0 0
      %776 = vmatprep.subr.bf16.mxu0 %v760
      %777 = vmatpush1.bf16.msra.mxu0 %v757
      %778 = vmatprep.subr.bf16.mxu0 0
      %779 = vmatpush2.bf16.msra.mxu0 0
      %780 = vmatprep.subr.bf16.mxu0 0
      %781 = vmatpush2.bf16.msra.mxu0 0
      %782 = vmatprep.subr.bf16.mxu0 0
      %783 = vmatpush2.bf16.msra.mxu0 0
      %784 = vmatprep.subr.bf16.mxu0 0
      %785 = vmatpush2.bf16.msra.mxu0 0
      %786 = vmatprep.subr.bf16.mxu0 0
      %787 = vmatpush2.bf16.msra.mxu0 0
      %788 = vmatprep.subr.bf16.mxu0 0
      %789 = vmatpush2.bf16.msra.mxu0 0
      %790 = vmatprep.subr.bf16.mxu0 0
      %791 = vmatpush2.bf16.msra.mxu0 0
      %792 = vmatprep.subr.bf16.mxu0 0
      %793 = vmatpush2.bf16.msra.mxu0 0
      %794 = vmatprep.mubr.bf16.mxu0 0
      %795 = vmatmul.mubr.bf16.gmra.mxu0 %v754
      %v796 = vpop.f32.mrf.mxu0
      %v797 = vadd.f32 0.0, %v796
      %v798 = vpop.f32.mrf.mxu0
      %v799 = vadd.f32 0.0, %v798
      %v800 = vpop.f32.mrf.mxu0
      %v801 = vpop.f32.mrf.mxu0
      %802 = vdwg.mxu0
      %v803 = vadd.f32 %v743, %v797
      %v804 = vadd.f32 %v744, %v799
      %v805 = vld [vmem:[#allocation2 + $0x4] sm:$0xff]
      %v806 = vld [vmem:[#allocation2 + $0xc] sm:$0xf]
      %s807 = scalar_lea.vmem %s5, 20
      %v808 = vld [vmem:[%s807] sm:$0xf]
      %v811 = vunpack.c.l.b16 %v805
      %v812 = vunpack.c.h.b16 %v805
      %v813 = vunpack.c.l.b16 %v806
      %v814 = vpack.c.b16 %v811, %v811
      %v815 = vpack.c.b16 %v812, %v812
      %v816 = vpack.c.b16 %v813, %v813
      %817 = vrot.lane.b32.xlu0 %v814, 127
      %v818 = vpop.permute.xlu0 %817
      %819 = vrot.lane.b32.xlu0 %v815, 127
      %v820 = vpop.permute.xlu0 %819
      %821 = vrot.lane.b32.xlu0 %v816, 127
      %v822 = vpop.permute.xlu0 %821
      %vm823 = vcmask 1039360
      %v824 = vsel %vm823, %v818, %v820
      %v825 = vsel %vm823, %v820, %v822
      %v827 = vsel %vm476, %v808, 0
      %v830 = vsel %vm480, %v824, 0
      %v833 = vsel %vm480, %v825, 0
      %835 = vmatprep.subr.bf16.mxu0 0
      %836 = vmatpush1.bf16.msra.mxu0 0
      %837 = vmatprep.subr.bf16.mxu0 0
      %838 = vmatpush1.bf16.msra.mxu0 0
      %839 = vmatprep.subr.bf16.mxu0 0
      %840 = vmatpush1.bf16.msra.mxu0 0
      %841 = vmatprep.subr.bf16.mxu0 0
      %842 = vmatpush1.bf16.msra.mxu0 0
      %843 = vmatprep.subr.bf16.mxu0 0
      %844 = vmatpush1.bf16.msra.mxu0 0
      %845 = vmatprep.subr.bf16.mxu0 0
      %846 = vmatpush1.bf16.msra.mxu0 0
      %847 = vmatprep.subr.bf16.mxu0 0
      %848 = vmatpush1.bf16.msra.mxu0 0
      %849 = vmatprep.subr.bf16.mxu0 %v833
      %850 = vmatpush1.bf16.msra.mxu0 %v830
      %851 = vmatprep.subr.bf16.mxu0 0
      %852 = vmatpush2.bf16.msra.mxu0 0
      %853 = vmatprep.subr.bf16.mxu0 0
      %854 = vmatpush2.bf16.msra.mxu0 0
      %855 = vmatprep.subr.bf16.mxu0 0
      %856 = vmatpush2.bf16.msra.mxu0 0
      %857 = vmatprep.subr.bf16.mxu0 0
      %858 = vmatpush2.bf16.msra.mxu0 0
      %859 = vmatprep.subr.bf16.mxu0 0
      %860 = vmatpush2.bf16.msra.mxu0 0
      %861 = vmatprep.subr.bf16.mxu0 0
      %862 = vmatpush2.bf16.msra.mxu0 0
      %863 = vmatprep.subr.bf16.mxu0 0
      %864 = vmatpush2.bf16.msra.mxu0 0
      %865 = vmatprep.subr.bf16.mxu0 0
      %866 = vmatpush2.bf16.msra.mxu0 0
      %867 = vmatprep.mubr.bf16.mxu0 0
      %868 = vmatmul.mubr.bf16.gmra.mxu0 %v827
      %v869 = vpop.f32.mrf.mxu0
      %v870 = vadd.f32 0.0, %v869
      %v871 = vpop.f32.mrf.mxu0
      %v872 = vadd.f32 0.0, %v871
      %v873 = vpop.f32.mrf.mxu0
      %v874 = vpop.f32.mrf.mxu0
      %875 = vdwg.mxu0
      %v876 = vmul.f32 %v870, %v669
      %v877 = vmul.f32 %v872, %v673
      %v878 = vadd.f32 %v803, %v876
      %v879 = vadd.f32 %v804, %v877
      %s880 = scalar_lea.vmem %s5, 24
      %v881 = vld [vmem:[%s880] sm:$0xf]
      %882 = vrot.lane.b32.xlu0 %v814, 113
      %v883 = vpop.permute.xlu0 %882
      %884 = vrot.lane.b32.xlu0 %v815, 113
      %v885 = vpop.permute.xlu0 %884
      %886 = vrot.lane.b32.xlu0 %v816, 113
      %v887 = vpop.permute.xlu0 %886
      %vm888 = vcmask 924672
      %v889 = vsel %vm888, %v883, %v885
      %v890 = vsel %vm888, %v885, %v887
      %v892 = vsel %vm476, %v881, 0
      %v895 = vsel %vm480, %v889, 0
      %v898 = vsel %vm480, %v890, 0
      %900 = vmatprep.subr.bf16.mxu0 0
      %901 = vmatpush1.bf16.msra.mxu0 0
      %902 = vmatprep.subr.bf16.mxu0 0
      %903 = vmatpush1.bf16.msra.mxu0 0
      %904 = vmatprep.subr.bf16.mxu0 0
      %905 = vmatpush1.bf16.msra.mxu0 0
      %906 = vmatprep.subr.bf16.mxu0 0
      %907 = vmatpush1.bf16.msra.mxu0 0
      %908 = vmatprep.subr.bf16.mxu0 0
      %909 = vmatpush1.bf16.msra.mxu0 0
      %910 = vmatprep.subr.bf16.mxu0 0
      %911 = vmatpush1.bf16.msra.mxu0 0
      %912 = vmatprep.subr.bf16.mxu0 0
      %913 = vmatpush1.bf16.msra.mxu0 0
      %914 = vmatprep.subr.bf16.mxu0 %v898
      %915 = vmatpush1.bf16.msra.mxu0 %v895
      %916 = vmatprep.subr.bf16.mxu0 0
      %917 = vmatpush2.bf16.msra.mxu0 0
      %918 = vmatprep.subr.bf16.mxu0 0
      %919 = vmatpush2.bf16.msra.mxu0 0
      %920 = vmatprep.subr.bf16.mxu0 0
      %921 = vmatpush2.bf16.msra.mxu0 0
      %922 = vmatprep.subr.bf16.mxu0 0
      %923 = vmatpush2.bf16.msra.mxu0 0
      %924 = vmatprep.subr.bf16.mxu0 0
      %925 = vmatpush2.bf16.msra.mxu0 0
      %926 = vmatprep.subr.bf16.mxu0 0
      %927 = vmatpush2.bf16.msra.mxu0 0
      %928 = vmatprep.subr.bf16.mxu0 0
      %929 = vmatpush2.bf16.msra.mxu0 0
      %930 = vmatprep.subr.bf16.mxu0 0
      %931 = vmatpush2.bf16.msra.mxu0 0
      %932 = vmatprep.mubr.bf16.mxu0 0
      %933 = vmatmul.mubr.bf16.gmra.mxu0 %v892
      %v934 = vpop.f32.mrf.mxu0
      %v935 = vadd.f32 0.0, %v934
      %v936 = vpop.f32.mrf.mxu0
      %v937 = vadd.f32 0.0, %v936
      %v938 = vpop.f32.mrf.mxu0
      %v939 = vpop.f32.mrf.mxu0
      %940 = vdwg.mxu0
      %v941 = vmul.f32 %v935, %v532
      %v942 = vmul.f32 %v937, %v536
      %v943 = vadd.f32 %v878, %v941
      %v944 = vadd.f32 %v879, %v942
      %s945 = scalar_lea.vmem %s5, 28
      %v946 = vld [vmem:[%s945] sm:$0xf]
      %947 = vrot.lane.b32.xlu0 %v814, 112
      %v948 = vpop.permute.xlu0 %947
      %949 = vrot.lane.b32.xlu0 %v815, 112
      %v950 = vpop.permute.xlu0 %949
      %951 = vrot.lane.b32.xlu0 %v816, 112
      %v952 = vpop.permute.xlu0 %951
      %vm953 = vcmask 916480
      %v954 = vsel %vm953, %v948, %v950
      %v955 = vsel %vm953, %v950, %v952
      %v957 = vsel %vm476, %v946, 0
      %v960 = vsel %vm480, %v954, 0
      %v963 = vsel %vm480, %v955, 0
      %965 = vmatprep.subr.bf16.mxu0 0
      %966 = vmatpush1.bf16.msra.mxu0 0
      %967 = vmatprep.subr.bf16.mxu0 0
      %968 = vmatpush1.bf16.msra.mxu0 0
      %969 = vmatprep.subr.bf16.mxu0 0
      %970 = vmatpush1.bf16.msra.mxu0 0
      %971 = vmatprep.subr.bf16.mxu0 0
      %972 = vmatpush1.bf16.msra.mxu0 0
      %973 = vmatprep.subr.bf16.mxu0 0
      %974 = vmatpush1.bf16.msra.mxu0 0
      %975 = vmatprep.subr.bf16.mxu0 0
      %976 = vmatpush1.bf16.msra.mxu0 0
      %977 = vmatprep.subr.bf16.mxu0 0
      %978 = vmatpush1.bf16.msra.mxu0 0
      %979 = vmatprep.subr.bf16.mxu0 %v963
      %980 = vmatpush1.bf16.msra.mxu0 %v960
      %981 = vmatprep.subr.bf16.mxu0 0
      %982 = vmatpush2.bf16.msra.mxu0 0
      %983 = vmatprep.subr.bf16.mxu0 0
      %984 = vmatpush2.bf16.msra.mxu0 0
      %985 = vmatprep.subr.bf16.mxu0 0
      %986 = vmatpush2.bf16.msra.mxu0 0
      %987 = vmatprep.subr.bf16.mxu0 0
      %988 = vmatpush2.bf16.msra.mxu0 0
      %989 = vmatprep.subr.bf16.mxu0 0
      %990 = vmatpush2.bf16.msra.mxu0 0
      %991 = vmatprep.subr.bf16.mxu0 0
      %992 = vmatpush2.bf16.msra.mxu0 0
      %993 = vmatprep.subr.bf16.mxu0 0
      %994 = vmatpush2.bf16.msra.mxu0 0
      %995 = vmatprep.subr.bf16.mxu0 0
      %996 = vmatpush2.bf16.msra.mxu0 0
      %997 = vmatprep.mubr.bf16.mxu0 0
      %998 = vmatmul.mubr.bf16.gmra.mxu0 %v957
      %v999 = vpop.f32.mrf.mxu0
      %v1000 = vadd.f32 0.0, %v999
      %v1001 = vpop.f32.mrf.mxu0
      %v1002 = vadd.f32 0.0, %v1001
      %v1003 = vpop.f32.mrf.mxu0
      %v1004 = vpop.f32.mrf.mxu0
      %1005 = vdwg.mxu0
      %v1006 = vadd.f32 %v943, %v1000
      %v1007 = vadd.f32 %v944, %v1002
      %s1008 = scalar_lea.vmem %s5, 32
      %v1009 = vld [vmem:[%s1008] sm:$0xf]
      %1010 = vrot.lane.b32.xlu0 %v814, 111
      %v1011 = vpop.permute.xlu0 %1010
      %1012 = vrot.lane.b32.xlu0 %v815, 111
      %v1013 = vpop.permute.xlu0 %1012
      %1014 = vrot.lane.b32.xlu0 %v816, 111
      %v1015 = vpop.permute.xlu0 %1014
      %vm1016 = vcmask 908288
      %v1017 = vsel %vm1016, %v1011, %v1013
      %v1018 = vsel %vm1016, %v1013, %v1015
      %v1020 = vsel %vm476, %v1009, 0
      %v1023 = vsel %vm480, %v1017, 0
      %v1026 = vsel %vm480, %v1018, 0
      %1028 = vmatprep.subr.bf16.mxu0 0
      %1029 = vmatpush1.bf16.msra.mxu0 0
      %1030 = vmatprep.subr.bf16.mxu0 0
      %1031 = vmatpush1.bf16.msra.mxu0 0
      %1032 = vmatprep.subr.bf16.mxu0 0
      %1033 = vmatpush1.bf16.msra.mxu0 0
      %1034 = vmatprep.subr.bf16.mxu0 0
      %1035 = vmatpush1.bf16.msra.mxu0 0
      %1036 = vmatprep.subr.bf16.mxu0 0
      %1037 = vmatpush1.bf16.msra.mxu0 0
      %1038 = vmatprep.subr.bf16.mxu0 0
      %1039 = vmatpush1.bf16.msra.mxu0 0
      %1040 = vmatprep.subr.bf16.mxu0 0
      %1041 = vmatpush1.bf16.msra.mxu0 0
      %1042 = vmatprep.subr.bf16.mxu0 %v1026
      %1043 = vmatpush1.bf16.msra.mxu0 %v1023
      %1044 = vmatprep.subr.bf16.mxu0 0
      %1045 = vmatpush2.bf16.msra.mxu0 0
      %1046 = vmatprep.subr.bf16.mxu0 0
      %1047 = vmatpush2.bf16.msra.mxu0 0
      %1048 = vmatprep.subr.bf16.mxu0 0
      %1049 = vmatpush2.bf16.msra.mxu0 0
      %1050 = vmatprep.subr.bf16.mxu0 0
      %1051 = vmatpush2.bf16.msra.mxu0 0
      %1052 = vmatprep.subr.bf16.mxu0 0
      %1053 = vmatpush2.bf16.msra.mxu0 0
      %1054 = vmatprep.subr.bf16.mxu0 0
      %1055 = vmatpush2.bf16.msra.mxu0 0
      %1056 = vmatprep.subr.bf16.mxu0 0
      %1057 = vmatpush2.bf16.msra.mxu0 0
      %1058 = vmatprep.subr.bf16.mxu0 0
      %1059 = vmatpush2.bf16.msra.mxu0 0
      %1060 = vmatprep.mubr.bf16.mxu0 0
      %1061 = vmatmul.mubr.bf16.gmra.mxu0 %v1020
      %v1062 = vpop.f32.mrf.mxu0
      %v1063 = vadd.f32 0.0, %v1062
      %v1064 = vpop.f32.mrf.mxu0
      %v1065 = vadd.f32 0.0, %v1064
      %v1066 = vpop.f32.mrf.mxu0
      %v1067 = vpop.f32.mrf.mxu0
      %1068 = vdwg.mxu0
      %v1069 = vmul.f32 %v1063, %v669
      %v1070 = vmul.f32 %v1065, %v673
      %v1071 = vadd.f32 %v1006, %v1069
      %v1072 = vadd.f32 %v1007, %v1070
      %1073 = vst [vmem:[%s413 + $0x10] sm:$0xff] %v1071
      %1074 = vst [vmem:[%s413 + $0x18] sm:$0xff] %v1072
      %v1075 = vld [vmem:[%s6] sm:$0xff]
      %v1076 = vld [vmem:[%s6 + $0x8] sm:$0xff]
      %v1077 = vld [vmem:[%s7] sm:$0xff]
      %v1078 = vld [vmem:[%s7 + $0x8] sm:$0xff]
      %v1079 = vld [vmem:[%s413] sm:$0xff]
      %v1080 = vld [vmem:[%s413 + $0x8] sm:$0xff]
      %v1081 = vld [vmem:[%s413 + $0x10] sm:$0xff]
      %v1082 = vld [vmem:[%s413 + $0x18] sm:$0xff]
      %1084 = vset.pattern.permute.xlu0 0
      %1085 = vperm.xlu0 %1084, %v1075
      %v1086 = vpop.permute.xlu0 %1085
      %1089 = vset.pattern.permute.xlu0 0
      %1090 = vperm.xlu0 %1089, %v1076
      %v1091 = vpop.permute.xlu0 %1090
      %v1093 = vmul.f32 %v1079, %v1086
      %v1094 = vmul.f32 %v1080, %v1086
      %v1095 = vmul.f32 %v1081, %v1091
      %v1096 = vmul.f32 %v1082, %v1091
      %1098 = vset.pattern.permute.xlu0 0
      %1099 = vperm.xlu0 %1098, %v1077
      %v1100 = vpop.permute.xlu0 %1099
      %1103 = vset.pattern.permute.xlu0 0
      %1104 = vperm.xlu0 %1103, %v1078
      %v1105 = vpop.permute.xlu0 %1104
      %v1107 = vadd.f32 %v1093, %v1100
      %v1108 = vadd.f32 %v1094, %v1100
      %v1109 = vadd.f32 %v1095, %v1105
      %v1110 = vadd.f32 %v1096, %v1105
      %v1111 = vmax.f32 %v1107, 0.0
      %v1112 = vmax.f32 %v1108, 0.0
      %v1113 = vmax.f32 %v1109, 0.0
      %v1114 = vmax.f32 %v1110, 0.0
      %v1115 = vpack.c.bf16 %v1113, %v1111
      %v1116 = vpack.c.bf16 %v1114, %v1112
      %v1119 = vunpack.c.l.b16 %v1115
      %v1120 = vunpack.c.l.b16 %v1116
      %v1121 = vunpack.c.h.b16 %v1115
      %v1122 = vunpack.c.h.b16 %v1116
      %v1123 = vpack.c.b16 %v1120, %v1119
      %v1124 = vpack.c.b16 %v1122, %v1121
      %1127 = vst [vmem:[#allocation2 + $0x4] sm:$0xff] %v1123
      %1128 = vst [vmem:[#allocation2 + $0x14] sm:$0xff] %v1124
      %v1129 = vld [vmem:[#allocation2] sm:$0xff]
      %v1130 = vld [vmem:[#allocation2 + $0x8] sm:$0xf]
      %v1131 = vld [vmem:[#allocation2 + $0x10] sm:$0xff]
      %v1132 = vld [vmem:[#allocation2 + $0x18] sm:$0xf]
      %v1133 = vld [vmem:[%s8] sm:$0xf]
      %v1138 = vunpack.c.l.b16 %v1129
      %v1139 = vunpack.c.h.b16 %v1129
      %v1140 = vunpack.c.l.b16 %v1130
      %v1141 = vunpack.c.l.b16 %v1131
      %v1142 = vunpack.c.h.b16 %v1131
      %v1143 = vunpack.c.l.b16 %v1132
      %v1144 = vpack.c.b16 %v1141, %v1138
      %v1145 = vpack.c.b16 %v1142, %v1139
      %v1146 = vpack.c.b16 %v1143, %v1140
      %1147 = vrot.lane.b32.xlu0 %v1144, 17
      %v1148 = vpop.permute.xlu0 %1147
      %1149 = vrot.lane.b32.xlu0 %v1145, 17
      %v1150 = vpop.permute.xlu0 %1149
      %1151 = vrot.lane.b32.xlu0 %v1146, 17
      %v1152 = vpop.permute.xlu0 %1151
      %v1153 = vsel %vm473, %v1148, %v1150
      %v1154 = vsel %vm473, %v1150, %v1152
      %vm1157 = vcmask 130048
      %v1159 = vsel %vm1157, %v1133, 0
      %1161 = vmatprep.subr.bf16.mxu0 0
      %1162 = vmatpush1.bf16.msra.mxu0 0
      %1163 = vmatprep.subr.bf16.mxu0 0
      %1164 = vmatpush1.bf16.msra.mxu0 0
      %1165 = vmatprep.subr.bf16.mxu0 0
      %1166 = vmatpush1.bf16.msra.mxu0 0
      %1167 = vmatprep.subr.bf16.mxu0 0
      %1168 = vmatpush1.bf16.msra.mxu0 0
      %1169 = vmatprep.subr.bf16.mxu0 0
      %1170 = vmatpush1.bf16.msra.mxu0 0
      %1171 = vmatprep.subr.bf16.mxu0 0
      %1172 = vmatpush1.bf16.msra.mxu0 0
      %1173 = vmatprep.subr.bf16.mxu0 0
      %1174 = vmatpush1.bf16.msra.mxu0 0
      %1175 = vmatprep.subr.bf16.mxu0 %v1154
      %1176 = vmatpush1.bf16.msra.mxu0 %v1153
      %1177 = vmatprep.subr.bf16.mxu0 0
      %1178 = vmatpush2.bf16.msra.mxu0 0
      %1179 = vmatprep.subr.bf16.mxu0 0
      %1180 = vmatpush2.bf16.msra.mxu0 0
      %1181 = vmatprep.subr.bf16.mxu0 0
      %1182 = vmatpush2.bf16.msra.mxu0 0
      %1183 = vmatprep.subr.bf16.mxu0 0
      %1184 = vmatpush2.bf16.msra.mxu0 0
      %1185 = vmatprep.subr.bf16.mxu0 0
      %1186 = vmatpush2.bf16.msra.mxu0 0
      %1187 = vmatprep.subr.bf16.mxu0 0
      %1188 = vmatpush2.bf16.msra.mxu0 0
      %1189 = vmatprep.subr.bf16.mxu0 0
      %1190 = vmatpush2.bf16.msra.mxu0 0
      %1191 = vmatprep.subr.bf16.mxu0 0
      %1192 = vmatpush2.bf16.msra.mxu0 0
      %1193 = vmatprep.mubr.bf16.mxu0 0
      %1194 = vmatmul.mubr.bf16.gmra.mxu0 %v1159
      %v1195 = vpop.f32.mrf.mxu0
      %v1196 = vadd.f32 0.0, %v1195
      %v1197 = vpop.f32.mrf.mxu0
      %v1198 = vadd.f32 0.0, %v1197
      %v1199 = vpop.f32.mrf.mxu0
      %v1200 = vpop.f32.mrf.mxu0
      %1201 = vdwg.mxu0
      %v1202 = vmul.f32 %v1196, %v532
      %v1203 = vmul.f32 %v1198, %v536
      %s1204 = scalar_lea.vmem %s8, 4
      %v1205 = vld [vmem:[%s1204] sm:$0xf]
      %1206 = vrot.lane.b32.xlu0 %v1144, 16
      %v1207 = vpop.permute.xlu0 %1206
      %1208 = vrot.lane.b32.xlu0 %v1145, 16
      %v1209 = vpop.permute.xlu0 %1208
      %1210 = vrot.lane.b32.xlu0 %v1146, 16
      %v1211 = vpop.permute.xlu0 %1210
      %v1212 = vsel %vm549, %v1207, %v1209
      %v1213 = vsel %vm549, %v1209, %v1211
      %v1217 = vsel %vm1157, %v1205, 0
      %1219 = vmatprep.subr.bf16.mxu0 0
      %1220 = vmatpush1.bf16.msra.mxu0 0
      %1221 = vmatprep.subr.bf16.mxu0 0
      %1222 = vmatpush1.bf16.msra.mxu0 0
      %1223 = vmatprep.subr.bf16.mxu0 0
      %1224 = vmatpush1.bf16.msra.mxu0 0
      %1225 = vmatprep.subr.bf16.mxu0 0
      %1226 = vmatpush1.bf16.msra.mxu0 0
      %1227 = vmatprep.subr.bf16.mxu0 0
      %1228 = vmatpush1.bf16.msra.mxu0 0
      %1229 = vmatprep.subr.bf16.mxu0 0
      %1230 = vmatpush1.bf16.msra.mxu0 0
      %1231 = vmatprep.subr.bf16.mxu0 0
      %1232 = vmatpush1.bf16.msra.mxu0 0
      %1233 = vmatprep.subr.bf16.mxu0 %v1213
      %1234 = vmatpush1.bf16.msra.mxu0 %v1212
      %1235 = vmatprep.subr.bf16.mxu0 0
      %1236 = vmatpush2.bf16.msra.mxu0 0
      %1237 = vmatprep.subr.bf16.mxu0 0
      %1238 = vmatpush2.bf16.msra.mxu0 0
      %1239 = vmatprep.subr.bf16.mxu0 0
      %1240 = vmatpush2.bf16.msra.mxu0 0
      %1241 = vmatprep.subr.bf16.mxu0 0
      %1242 = vmatpush2.bf16.msra.mxu0 0
      %1243 = vmatprep.subr.bf16.mxu0 0
      %1244 = vmatpush2.bf16.msra.mxu0 0
      %1245 = vmatprep.subr.bf16.mxu0 0
      %1246 = vmatpush2.bf16.msra.mxu0 0
      %1247 = vmatprep.subr.bf16.mxu0 0
      %1248 = vmatpush2.bf16.msra.mxu0 0
      %1249 = vmatprep.subr.bf16.mxu0 0
      %1250 = vmatpush2.bf16.msra.mxu0 0
      %1251 = vmatprep.mubr.bf16.mxu0 0
      %1252 = vmatmul.mubr.bf16.gmra.mxu0 %v1217
      %v1253 = vpop.f32.mrf.mxu0
      %v1254 = vadd.f32 0.0, %v1253
      %v1255 = vpop.f32.mrf.mxu0
      %v1256 = vadd.f32 0.0, %v1255
      %v1257 = vpop.f32.mrf.mxu0
      %v1258 = vpop.f32.mrf.mxu0
      %1259 = vdwg.mxu0
      %v1260 = vadd.f32 %v1202, %v1254
      %v1261 = vadd.f32 %v1203, %v1256
      %s1262 = scalar_lea.vmem %s8, 8
      %v1263 = vld [vmem:[%s1262] sm:$0xf]
      %1264 = vrot.lane.b32.xlu0 %v1144, 15
      %v1265 = vpop.permute.xlu0 %1264
      %1266 = vrot.lane.b32.xlu0 %v1145, 15
      %v1267 = vpop.permute.xlu0 %1266
      %1268 = vrot.lane.b32.xlu0 %v1146, 15
      %v1269 = vpop.permute.xlu0 %1268
      %v1270 = vsel %vm612, %v1265, %v1267
      %v1271 = vsel %vm612, %v1267, %v1269
      %v1275 = vsel %vm1157, %v1263, 0
      %1277 = vmatprep.subr.bf16.mxu0 0
      %1278 = vmatpush1.bf16.msra.mxu0 0
      %1279 = vmatprep.subr.bf16.mxu0 0
      %1280 = vmatpush1.bf16.msra.mxu0 0
      %1281 = vmatprep.subr.bf16.mxu0 0
      %1282 = vmatpush1.bf16.msra.mxu0 0
      %1283 = vmatprep.subr.bf16.mxu0 0
      %1284 = vmatpush1.bf16.msra.mxu0 0
      %1285 = vmatprep.subr.bf16.mxu0 0
      %1286 = vmatpush1.bf16.msra.mxu0 0
      %1287 = vmatprep.subr.bf16.mxu0 0
      %1288 = vmatpush1.bf16.msra.mxu0 0
      %1289 = vmatprep.subr.bf16.mxu0 0
      %1290 = vmatpush1.bf16.msra.mxu0 0
      %1291 = vmatprep.subr.bf16.mxu0 %v1271
      %1292 = vmatpush1.bf16.msra.mxu0 %v1270
      %1293 = vmatprep.subr.bf16.mxu0 0
      %1294 = vmatpush2.bf16.msra.mxu0 0
      %1295 = vmatprep.subr.bf16.mxu0 0
      %1296 = vmatpush2.bf16.msra.mxu0 0
      %1297 = vmatprep.subr.bf16.mxu0 0
      %1298 = vmatpush2.bf16.msra.mxu0 0
      %1299 = vmatprep.subr.bf16.mxu0 0
      %1300 = vmatpush2.bf16.msra.mxu0 0
      %1301 = vmatprep.subr.bf16.mxu0 0
      %1302 = vmatpush2.bf16.msra.mxu0 0
      %1303 = vmatprep.subr.bf16.mxu0 0
      %1304 = vmatpush2.bf16.msra.mxu0 0
      %1305 = vmatprep.subr.bf16.mxu0 0
      %1306 = vmatpush2.bf16.msra.mxu0 0
      %1307 = vmatprep.subr.bf16.mxu0 0
      %1308 = vmatpush2.bf16.msra.mxu0 0
      %1309 = vmatprep.mubr.bf16.mxu0 0
      %1310 = vmatmul.mubr.bf16.gmra.mxu0 %v1275
      %v1311 = vpop.f32.mrf.mxu0
      %v1312 = vadd.f32 0.0, %v1311
      %v1313 = vpop.f32.mrf.mxu0
      %v1314 = vadd.f32 0.0, %v1313
      %v1315 = vpop.f32.mrf.mxu0
      %v1316 = vpop.f32.mrf.mxu0
      %1317 = vdwg.mxu0
      %v1318 = vmul.f32 %v1312, %v669
      %v1319 = vmul.f32 %v1314, %v673
      %v1320 = vadd.f32 %v1260, %v1318
      %v1321 = vadd.f32 %v1261, %v1319
      %s1322 = scalar_lea.vmem %s8, 12
      %v1323 = vld [vmem:[%s1322] sm:$0xf]
      %1324 = vrot.lane.b32.xlu0 %v1144, 1
      %v1325 = vpop.permute.xlu0 %1324
      %1326 = vrot.lane.b32.xlu0 %v1145, 1
      %v1327 = vpop.permute.xlu0 %1326
      %1328 = vrot.lane.b32.xlu0 %v1146, 1
      %v1329 = vpop.permute.xlu0 %1328
      %v1330 = vsel %vm688, %v1325, %v1327
      %v1331 = vsel %vm688, %v1327, %v1329
      %v1335 = vsel %vm1157, %v1323, 0
      %1337 = vmatprep.subr.bf16.mxu0 0
      %1338 = vmatpush1.bf16.msra.mxu0 0
      %1339 = vmatprep.subr.bf16.mxu0 0
      %1340 = vmatpush1.bf16.msra.mxu0 0
      %1341 = vmatprep.subr.bf16.mxu0 0
      %1342 = vmatpush1.bf16.msra.mxu0 0
      %1343 = vmatprep.subr.bf16.mxu0 0
      %1344 = vmatpush1.bf16.msra.mxu0 0
      %1345 = vmatprep.subr.bf16.mxu0 0
      %1346 = vmatpush1.bf16.msra.mxu0 0
      %1347 = vmatprep.subr.bf16.mxu0 0
      %1348 = vmatpush1.bf16.msra.mxu0 0
      %1349 = vmatprep.subr.bf16.mxu0 0
      %1350 = vmatpush1.bf16.msra.mxu0 0
      %1351 = vmatprep.subr.bf16.mxu0 %v1331
      %1352 = vmatpush1.bf16.msra.mxu0 %v1330
      %1353 = vmatprep.subr.bf16.mxu0 0
      %1354 = vmatpush2.bf16.msra.mxu0 0
      %1355 = vmatprep.subr.bf16.mxu0 0
      %1356 = vmatpush2.bf16.msra.mxu0 0
      %1357 = vmatprep.subr.bf16.mxu0 0
      %1358 = vmatpush2.bf16.msra.mxu0 0
      %1359 = vmatprep.subr.bf16.mxu0 0
      %1360 = vmatpush2.bf16.msra.mxu0 0
      %1361 = vmatprep.subr.bf16.mxu0 0
      %1362 = vmatpush2.bf16.msra.mxu0 0
      %1363 = vmatprep.subr.bf16.mxu0 0
      %1364 = vmatpush2.bf16.msra.mxu0 0
      %1365 = vmatprep.subr.bf16.mxu0 0
      %1366 = vmatpush2.bf16.msra.mxu0 0
      %1367 = vmatprep.subr.bf16.mxu0 0
      %1368 = vmatpush2.bf16.msra.mxu0 0
      %1369 = vmatprep.mubr.bf16.mxu0 0
      %1370 = vmatmul.mubr.bf16.gmra.mxu0 %v1335
      %v1371 = vpop.f32.mrf.mxu0
      %v1372 = vadd.f32 0.0, %v1371
      %v1373 = vpop.f32.mrf.mxu0
      %v1374 = vadd.f32 0.0, %v1373
      %v1375 = vpop.f32.mrf.mxu0
      %v1376 = vpop.f32.mrf.mxu0
      %1377 = vdwg.mxu0
      %v1378 = vmul.f32 %v1372, %v532
      %v1379 = vmul.f32 %v1374, %v536
      %v1380 = vadd.f32 %v1320, %v1378
      %v1381 = vadd.f32 %v1321, %v1379
      %v1382 = vld [vmem:[#allocation2 + $0x4] sm:$0xff]
      %v1383 = vld [vmem:[#allocation2 + $0x14] sm:$0xff]
      %s1384 = scalar_lea.vmem %s8, 16
      %v1385 = vld [vmem:[%s1384] sm:$0xf]
      %v1388 = vunpack.c.l.b16 %v1382
      %v1389 = vunpack.c.h.b16 %v1382
      %v1390 = vunpack.c.l.b16 %v1383
      %v1391 = vunpack.c.h.b16 %v1383
      %v1392 = vpack.c.b16 %v1390, %v1388
      %v1393 = vpack.c.b16 %v1391, %v1389
      %v1397 = vsel %vm1157, %v1385, 0
      %1399 = vmatprep.subr.bf16.mxu0 0
      %1400 = vmatpush1.bf16.msra.mxu0 0
      %1401 = vmatprep.subr.bf16.mxu0 0
      %1402 = vmatpush1.bf16.msra.mxu0 0
      %1403 = vmatprep.subr.bf16.mxu0 0
      %1404 = vmatpush1.bf16.msra.mxu0 0
      %1405 = vmatprep.subr.bf16.mxu0 0
      %1406 = vmatpush1.bf16.msra.mxu0 0
      %1407 = vmatprep.subr.bf16.mxu0 0
      %1408 = vmatpush1.bf16.msra.mxu0 0
      %1409 = vmatprep.subr.bf16.mxu0 0
      %1410 = vmatpush1.bf16.msra.mxu0 0
      %1411 = vmatprep.subr.bf16.mxu0 0
      %1412 = vmatpush1.bf16.msra.mxu0 0
      %1413 = vmatprep.subr.bf16.mxu0 %v1393
      %1414 = vmatpush1.bf16.msra.mxu0 %v1392
      %1415 = vmatprep.subr.bf16.mxu0 0
      %1416 = vmatpush2.bf16.msra.mxu0 0
      %1417 = vmatprep.subr.bf16.mxu0 0
      %1418 = vmatpush2.bf16.msra.mxu0 0
      %1419 = vmatprep.subr.bf16.mxu0 0
      %1420 = vmatpush2.bf16.msra.mxu0 0
      %1421 = vmatprep.subr.bf16.mxu0 0
      %1422 = vmatpush2.bf16.msra.mxu0 0
      %1423 = vmatprep.subr.bf16.mxu0 0
      %1424 = vmatpush2.bf16.msra.mxu0 0
      %1425 = vmatprep.subr.bf16.mxu0 0
      %1426 = vmatpush2.bf16.msra.mxu0 0
      %1427 = vmatprep.subr.bf16.mxu0 0
      %1428 = vmatpush2.bf16.msra.mxu0 0
      %1429 = vmatprep.subr.bf16.mxu0 0
      %1430 = vmatpush2.bf16.msra.mxu0 0
      %1431 = vmatprep.mubr.bf16.mxu0 0
      %1432 = vmatmul.mubr.bf16.gmra.mxu0 %v1397
      %v1433 = vpop.f32.mrf.mxu0
      %v1434 = vadd.f32 0.0, %v1433
      %v1435 = vpop.f32.mrf.mxu0
      %v1436 = vadd.f32 0.0, %v1435
      %v1437 = vpop.f32.mrf.mxu0
      %v1438 = vpop.f32.mrf.mxu0
      %1439 = vdwg.mxu0
      %v1440 = vadd.f32 %v1380, %v1434
      %v1441 = vadd.f32 %v1381, %v1436
      %v1442 = vld [vmem:[#allocation2 + $0x4] sm:$0xff]
      %v1443 = vld [vmem:[#allocation2 + $0xc] sm:$0xf]
      %v1444 = vld [vmem:[#allocation2 + $0x14] sm:$0xff]
      %v1445 = vld [vmem:[#allocation2 + $0x1c] sm:$0xf]
      %s1446 = scalar_lea.vmem %s8, 20
      %v1447 = vld [vmem:[%s1446] sm:$0xf]
      %v1452 = vunpack.c.l.b16 %v1442
      %v1453 = vunpack.c.h.b16 %v1442
      %v1454 = vunpack.c.l.b16 %v1443
      %v1455 = vunpack.c.l.b16 %v1444
      %v1456 = vunpack.c.h.b16 %v1444
      %v1457 = vunpack.c.l.b16 %v1445
      %v1458 = vpack.c.b16 %v1455, %v1452
      %v1459 = vpack.c.b16 %v1456, %v1453
      %v1460 = vpack.c.b16 %v1457, %v1454
      %1461 = vrot.lane.b32.xlu0 %v1458, 127
      %v1462 = vpop.permute.xlu0 %1461
      %1463 = vrot.lane.b32.xlu0 %v1459, 127
      %v1464 = vpop.permute.xlu0 %1463
      %1465 = vrot.lane.b32.xlu0 %v1460, 127
      %v1466 = vpop.permute.xlu0 %1465
      %v1467 = vsel %vm823, %v1462, %v1464
      %v1468 = vsel %vm823, %v1464, %v1466
      %v1472 = vsel %vm1157, %v1447, 0
      %1474 = vmatprep.subr.bf16.mxu0 0
      %1475 = vmatpush1.bf16.msra.mxu0 0
      %1476 = vmatprep.subr.bf16.mxu0 0
      %1477 = vmatpush1.bf16.msra.mxu0 0
      %1478 = vmatprep.subr.bf16.mxu0 0
      %1479 = vmatpush1.bf16.msra.mxu0 0
      %1480 = vmatprep.subr.bf16.mxu0 0
      %1481 = vmatpush1.bf16.msra.mxu0 0
      %1482 = vmatprep.subr.bf16.mxu0 0
      %1483 = vmatpush1.bf16.msra.mxu0 0
      %1484 = vmatprep.subr.bf16.mxu0 0
      %1485 = vmatpush1.bf16.msra.mxu0 0
      %1486 = vmatprep.subr.bf16.mxu0 0
      %1487 = vmatpush1.bf16.msra.mxu0 0
      %1488 = vmatprep.subr.bf16.mxu0 %v1468
      %1489 = vmatpush1.bf16.msra.mxu0 %v1467
      %1490 = vmatprep.subr.bf16.mxu0 0
      %1491 = vmatpush2.bf16.msra.mxu0 0
      %1492 = vmatprep.subr.bf16.mxu0 0
      %1493 = vmatpush2.bf16.msra.mxu0 0
      %1494 = vmatprep.subr.bf16.mxu0 0
      %1495 = vmatpush2.bf16.msra.mxu0 0
      %1496 = vmatprep.subr.bf16.mxu0 0
      %1497 = vmatpush2.bf16.msra.mxu0 0
      %1498 = vmatprep.subr.bf16.mxu0 0
      %1499 = vmatpush2.bf16.msra.mxu0 0
      %1500 = vmatprep.subr.bf16.mxu0 0
      %1501 = vmatpush2.bf16.msra.mxu0 0
      %1502 = vmatprep.subr.bf16.mxu0 0
      %1503 = vmatpush2.bf16.msra.mxu0 0
      %1504 = vmatprep.subr.bf16.mxu0 0
      %1505 = vmatpush2.bf16.msra.mxu0 0
      %1506 = vmatprep.mubr.bf16.mxu0 0
      %1507 = vmatmul.mubr.bf16.gmra.mxu0 %v1472
      %v1508 = vpop.f32.mrf.mxu0
      %v1509 = vadd.f32 0.0, %v1508
      %v1510 = vpop.f32.mrf.mxu0
      %v1511 = vadd.f32 0.0, %v1510
      %v1512 = vpop.f32.mrf.mxu0
      %v1513 = vpop.f32.mrf.mxu0
      %1514 = vdwg.mxu0
      %v1515 = vmul.f32 %v1509, %v669
      %v1516 = vmul.f32 %v1511, %v673
      %v1517 = vadd.f32 %v1440, %v1515
      %v1518 = vadd.f32 %v1441, %v1516
      %s1519 = scalar_lea.vmem %s8, 24
      %v1520 = vld [vmem:[%s1519] sm:$0xf]
      %1521 = vrot.lane.b32.xlu0 %v1458, 113
      %v1522 = vpop.permute.xlu0 %1521
      %1523 = vrot.lane.b32.xlu0 %v1459, 113
      %v1524 = vpop.permute.xlu0 %1523
      %1525 = vrot.lane.b32.xlu0 %v1460, 113
      %v1526 = vpop.permute.xlu0 %1525
      %v1527 = vsel %vm888, %v1522, %v1524
      %v1528 = vsel %vm888, %v1524, %v1526
      %v1532 = vsel %vm1157, %v1520, 0
      %1534 = vmatprep.subr.bf16.mxu0 0
      %1535 = vmatpush1.bf16.msra.mxu0 0
      %1536 = vmatprep.subr.bf16.mxu0 0
      %1537 = vmatpush1.bf16.msra.mxu0 0
      %1538 = vmatprep.subr.bf16.mxu0 0
      %1539 = vmatpush1.bf16.msra.mxu0 0
      %1540 = vmatprep.subr.bf16.mxu0 0
      %1541 = vmatpush1.bf16.msra.mxu0 0
      %1542 = vmatprep.subr.bf16.mxu0 0
      %1543 = vmatpush1.bf16.msra.mxu0 0
      %1544 = vmatprep.subr.bf16.mxu0 0
      %1545 = vmatpush1.bf16.msra.mxu0 0
      %1546 = vmatprep.subr.bf16.mxu0 0
      %1547 = vmatpush1.bf16.msra.mxu0 0
      %1548 = vmatprep.subr.bf16.mxu0 %v1528
      %1549 = vmatpush1.bf16.msra.mxu0 %v1527
      %1550 = vmatprep.subr.bf16.mxu0 0
      %1551 = vmatpush2.bf16.msra.mxu0 0
      %1552 = vmatprep.subr.bf16.mxu0 0
      %1553 = vmatpush2.bf16.msra.mxu0 0
      %1554 = vmatprep.subr.bf16.mxu0 0
      %1555 = vmatpush2.bf16.msra.mxu0 0
      %1556 = vmatprep.subr.bf16.mxu0 0
      %1557 = vmatpush2.bf16.msra.mxu0 0
      %1558 = vmatprep.subr.bf16.mxu0 0
      %1559 = vmatpush2.bf16.msra.mxu0 0
      %1560 = vmatprep.subr.bf16.mxu0 0
      %1561 = vmatpush2.bf16.msra.mxu0 0
      %1562 = vmatprep.subr.bf16.mxu0 0
      %1563 = vmatpush2.bf16.msra.mxu0 0
      %1564 = vmatprep.subr.bf16.mxu0 0
      %1565 = vmatpush2.bf16.msra.mxu0 0
      %1566 = vmatprep.mubr.bf16.mxu0 0
      %1567 = vmatmul.mubr.bf16.gmra.mxu0 %v1532
      %v1568 = vpop.f32.mrf.mxu0
      %v1569 = vadd.f32 0.0, %v1568
      %v1570 = vpop.f32.mrf.mxu0
      %v1571 = vadd.f32 0.0, %v1570
      %v1572 = vpop.f32.mrf.mxu0
      %v1573 = vpop.f32.mrf.mxu0
      %1574 = vdwg.mxu0
      %v1575 = vmul.f32 %v1569, %v532
      %v1576 = vmul.f32 %v1571, %v536
      %v1577 = vadd.f32 %v1517, %v1575
      %v1578 = vadd.f32 %v1518, %v1576
      %s1579 = scalar_lea.vmem %s8, 28
      %v1580 = vld [vmem:[%s1579] sm:$0xf]
      %1581 = vrot.lane.b32.xlu0 %v1458, 112
      %v1582 = vpop.permute.xlu0 %1581
      %1583 = vrot.lane.b32.xlu0 %v1459, 112
      %v1584 = vpop.permute.xlu0 %1583
      %1585 = vrot.lane.b32.xlu0 %v1460, 112
      %v1586 = vpop.permute.xlu0 %1585
      %v1587 = vsel %vm953, %v1582, %v1584
      %v1588 = vsel %vm953, %v1584, %v1586
      %v1592 = vsel %vm1157, %v1580, 0
      %1594 = vmatprep.subr.bf16.mxu0 0
      %1595 = vmatpush1.bf16.msra.mxu0 0
      %1596 = vmatprep.subr.bf16.mxu0 0
      %1597 = vmatpush1.bf16.msra.mxu0 0
      %1598 = vmatprep.subr.bf16.mxu0 0
      %1599 = vmatpush1.bf16.msra.mxu0 0
      %1600 = vmatprep.subr.bf16.mxu0 0
      %1601 = vmatpush1.bf16.msra.mxu0 0
      %1602 = vmatprep.subr.bf16.mxu0 0
      %1603 = vmatpush1.bf16.msra.mxu0 0
      %1604 = vmatprep.subr.bf16.mxu0 0
      %1605 = vmatpush1.bf16.msra.mxu0 0
      %1606 = vmatprep.subr.bf16.mxu0 0
      %1607 = vmatpush1.bf16.msra.mxu0 0
      %1608 = vmatprep.subr.bf16.mxu0 %v1588
      %1609 = vmatpush1.bf16.msra.mxu0 %v1587
      %1610 = vmatprep.subr.bf16.mxu0 0
      %1611 = vmatpush2.bf16.msra.mxu0 0
      %1612 = vmatprep.subr.bf16.mxu0 0
      %1613 = vmatpush2.bf16.msra.mxu0 0
      %1614 = vmatprep.subr.bf16.mxu0 0
      %1615 = vmatpush2.bf16.msra.mxu0 0
      %1616 = vmatprep.subr.bf16.mxu0 0
      %1617 = vmatpush2.bf16.msra.mxu0 0
      %1618 = vmatprep.subr.bf16.mxu0 0
      %1619 = vmatpush2.bf16.msra.mxu0 0
      %1620 = vmatprep.subr.bf16.mxu0 0
      %1621 = vmatpush2.bf16.msra.mxu0 0
      %1622 = vmatprep.subr.bf16.mxu0 0
      %1623 = vmatpush2.bf16.msra.mxu0 0
      %1624 = vmatprep.subr.bf16.mxu0 0
      %1625 = vmatpush2.bf16.msra.mxu0 0
      %1626 = vmatprep.mubr.bf16.mxu0 0
      %1627 = vmatmul.mubr.bf16.gmra.mxu0 %v1592
      %v1628 = vpop.f32.mrf.mxu0
      %v1629 = vadd.f32 0.0, %v1628
      %v1630 = vpop.f32.mrf.mxu0
      %v1631 = vadd.f32 0.0, %v1630
      %v1632 = vpop.f32.mrf.mxu0
      %v1633 = vpop.f32.mrf.mxu0
      %1634 = vdwg.mxu0
      %v1635 = vadd.f32 %v1577, %v1629
      %v1636 = vadd.f32 %v1578, %v1631
      %s1637 = scalar_lea.vmem %s8, 32
      %v1638 = vld [vmem:[%s1637] sm:$0xf]
      %1639 = vrot.lane.b32.xlu0 %v1458, 111
      %v1640 = vpop.permute.xlu0 %1639
      %1641 = vrot.lane.b32.xlu0 %v1459, 111
      %v1642 = vpop.permute.xlu0 %1641
      %1643 = vrot.lane.b32.xlu0 %v1460, 111
      %v1644 = vpop.permute.xlu0 %1643
      %v1645 = vsel %vm1016, %v1640, %v1642
      %v1646 = vsel %vm1016, %v1642, %v1644
      %v1650 = vsel %vm1157, %v1638, 0
      %1652 = vmatprep.subr.bf16.mxu0 0
      %1653 = vmatpush1.bf16.msra.mxu0 0
      %1654 = vmatprep.subr.bf16.mxu0 0
      %1655 = vmatpush1.bf16.msra.mxu0 0
      %1656 = vmatprep.subr.bf16.mxu0 0
      %1657 = vmatpush1.bf16.msra.mxu0 0
      %1658 = vmatprep.subr.bf16.mxu0 0
      %1659 = vmatpush1.bf16.msra.mxu0 0
      %1660 = vmatprep.subr.bf16.mxu0 0
      %1661 = vmatpush1.bf16.msra.mxu0 0
      %1662 = vmatprep.subr.bf16.mxu0 0
      %1663 = vmatpush1.bf16.msra.mxu0 0
      %1664 = vmatprep.subr.bf16.mxu0 0
      %1665 = vmatpush1.bf16.msra.mxu0 0
      %1666 = vmatprep.subr.bf16.mxu0 %v1646
      %1667 = vmatpush1.bf16.msra.mxu0 %v1645
      %1668 = vmatprep.subr.bf16.mxu0 0
      %1669 = vmatpush2.bf16.msra.mxu0 0
      %1670 = vmatprep.subr.bf16.mxu0 0
      %1671 = vmatpush2.bf16.msra.mxu0 0
      %1672 = vmatprep.subr.bf16.mxu0 0
      %1673 = vmatpush2.bf16.msra.mxu0 0
      %1674 = vmatprep.subr.bf16.mxu0 0
      %1675 = vmatpush2.bf16.msra.mxu0 0
      %1676 = vmatprep.subr.bf16.mxu0 0
      %1677 = vmatpush2.bf16.msra.mxu0 0
      %1678 = vmatprep.subr.bf16.mxu0 0
      %1679 = vmatpush2.bf16.msra.mxu0 0
      %1680 = vmatprep.subr.bf16.mxu0 0
      %1681 = vmatpush2.bf16.msra.mxu0 0
      %1682 = vmatprep.subr.bf16.mxu0 0
      %1683 = vmatpush2.bf16.msra.mxu0 0
      %1684 = vmatprep.mubr.bf16.mxu0 0
      %1685 = vmatmul.mubr.bf16.gmra.mxu0 %v1650
      %v1686 = vpop.f32.mrf.mxu0
      %v1687 = vadd.f32 0.0, %v1686
      %v1688 = vpop.f32.mrf.mxu0
      %v1689 = vadd.f32 0.0, %v1688
      %v1690 = vpop.f32.mrf.mxu0
      %v1691 = vpop.f32.mrf.mxu0
      %1692 = vdwg.mxu0
      %v1693 = vmul.f32 %v1687, %v669
      %v1694 = vmul.f32 %v1689, %v673
      %v1695 = vadd.f32 %v1635, %v1693
      %v1696 = vadd.f32 %v1636, %v1694
      %1697 = vst [vmem:[%s413 + $0x20] sm:$0xff] %v1695
      %1698 = vst [vmem:[%s413 + $0x28] sm:$0xff] %v1696
      %v1699 = vld [vmem:[%s9] sm:$0xff]
      %v1700 = vld [vmem:[%s9 + $0x8] sm:$0xff]
      %v1701 = vld [vmem:[%s9 + $0x10] sm:$0xff]
      %v1702 = vld [vmem:[%s10] sm:$0xff]
      %v1703 = vld [vmem:[%s10 + $0x8] sm:$0xff]
      %v1704 = vld [vmem:[%s10 + $0x10] sm:$0xff]
      %v1705 = vld [vmem:[%s413] sm:$0xff]
      %v1706 = vld [vmem:[%s413 + $0x8] sm:$0xff]
      %v1707 = vld [vmem:[%s413 + $0x10] sm:$0xff]
      %v1708 = vld [vmem:[%s413 + $0x18] sm:$0xff]
      %v1709 = vld [vmem:[%s413 + $0x20] sm:$0xff]
      %v1710 = vld [vmem:[%s413 + $0x28] sm:$0xff]
      %1712 = vset.pattern.permute.xlu0 0
      %1713 = vperm.xlu0 %1712, %v1699
      %v1714 = vpop.permute.xlu0 %1713
      %1717 = vset.pattern.permute.xlu0 0
      %1718 = vperm.xlu0 %1717, %v1700
      %v1719 = vpop.permute.xlu0 %1718
      %1722 = vset.pattern.permute.xlu0 0
      %1723 = vperm.xlu0 %1722, %v1701
      %v1724 = vpop.permute.xlu0 %1723
      %v1726 = vmul.f32 %v1705, %v1714
      %v1727 = vmul.f32 %v1706, %v1714
      %v1728 = vmul.f32 %v1707, %v1719
      %v1729 = vmul.f32 %v1708, %v1719
      %v1730 = vmul.f32 %v1709, %v1724
      %v1731 = vmul.f32 %v1710, %v1724
      %1733 = vset.pattern.permute.xlu0 0
      %1734 = vperm.xlu0 %1733, %v1702
      %v1735 = vpop.permute.xlu0 %1734
      %1738 = vset.pattern.permute.xlu0 0
      %1739 = vperm.xlu0 %1738, %v1703
      %v1740 = vpop.permute.xlu0 %1739
      %1743 = vset.pattern.permute.xlu0 0
      %1744 = vperm.xlu0 %1743, %v1704
      %v1745 = vpop.permute.xlu0 %1744
      %v1747 = vadd.f32 %v1726, %v1735
      %v1748 = vadd.f32 %v1727, %v1735
      %v1749 = vadd.f32 %v1728, %v1740
      %v1750 = vadd.f32 %v1729, %v1740
      %v1751 = vadd.f32 %v1730, %v1745
      %v1752 = vadd.f32 %v1731, %v1745
      %v1753 = vmax.f32 %v1747, 0.0
      %v1754 = vmax.f32 %v1748, 0.0
      %v1755 = vmax.f32 %v1749, 0.0
      %v1756 = vmax.f32 %v1750, 0.0
      %v1757 = vmax.f32 %v1751, 0.0
      %v1758 = vmax.f32 %v1752, 0.0
      %v1759 = vpack.c.bf16 %v1755, %v1753
      %v1760 = vpack.c.bf16 %v1756, %v1754
      %v1761 = vpack.c.bf16 %v1757, %v1757
      %v1762 = vpack.c.bf16 %v1758, %v1758
      %v1767 = vunpack.c.l.b16 %v1759
      %v1768 = vunpack.c.l.b16 %v1760
      %v1769 = vunpack.c.h.b16 %v1759
      %v1770 = vunpack.c.h.b16 %v1760
      %v1771 = vunpack.c.l.b16 %v1761
      %v1772 = vunpack.c.l.b16 %v1762
      %v1773 = vpack.c.b16 %v1768, %v1767
      %v1774 = vpack.c.b16 %v1770, %v1769
      %v1775 = vpack.c.b16 %v1772, %v1771
      %1779 = vst [vmem:[#allocation2 + $0x4] sm:$0xff] %v1773
      %1780 = vst [vmem:[#allocation2 + $0x14] sm:$0xff] %v1774
      %1781 = vst [vmem:[#allocation2 + $0x24] sm:$0xff] %v1775
      %v1782 = vld [vmem:[#allocation2] sm:$0xff]
      %v1783 = vld [vmem:[#allocation2 + $0x8] sm:$0xf]
      %v1784 = vld [vmem:[#allocation2 + $0x10] sm:$0xff]
      %v1785 = vld [vmem:[#allocation2 + $0x18] sm:$0xf]
      %v1786 = vld [vmem:[#allocation2 + $0x20] sm:$0xff]
      %v1787 = vld [vmem:[#allocation2 + $0x28] sm:$0xf]
      %v1788 = vld [vmem:[%s11] sm:$0xf]
      %v1795 = vunpack.c.l.b16 %v1782
      %v1796 = vunpack.c.h.b16 %v1782
      %v1797 = vunpack.c.l.b16 %v1783
      %v1798 = vunpack.c.l.b16 %v1784
      %v1799 = vunpack.c.h.b16 %v1784
      %v1800 = vunpack.c.l.b16 %v1785
      %v1801 = vunpack.c.l.b16 %v1786
      %v1802 = vunpack.c.h.b16 %v1786
      %v1803 = vunpack.c.l.b16 %v1787
      %v1804 = vpack.c.b16 %v1798, %v1795
      %v1805 = vpack.c.b16 %v1799, %v1796
      %v1806 = vpack.c.b16 %v1800, %v1797
      %v1807 = vpack.c.b16 %v1801, %v1801
      %v1808 = vpack.c.b16 %v1802, %v1802
      %v1809 = vpack.c.b16 %v1803, %v1803
      %1810 = vrot.lane.b32.xlu0 %v1804, 17
      %v1811 = vpop.permute.xlu0 %1810
      %1812 = vrot.lane.b32.xlu0 %v1805, 17
      %v1813 = vpop.permute.xlu0 %1812
      %1814 = vrot.lane.b32.xlu0 %v1806, 17
      %v1815 = vpop.permute.xlu0 %1814
      %1816 = vrot.lane.b32.xlu0 %v1807, 17
      %v1817 = vpop.permute.xlu0 %1816
      %1818 = vrot.lane.b32.xlu0 %v1808, 17
      %v1819 = vpop.permute.xlu0 %1818
      %1820 = vrot.lane.b32.xlu0 %v1809, 17
      %v1821 = vpop.permute.xlu0 %1820
      %v1822 = vsel %vm473, %v1811, %v1813
      %v1823 = vsel %vm473, %v1813, %v1815
      %v1824 = vsel %vm473, %v1817, %v1819
      %v1825 = vsel %vm473, %v1819, %v1821
      %vm1828 = vcmask 195584
      %v1830 = vsel %vm1828, %v1788, 0
      %v1833 = vsel %vm480, %v1824, 0
      %v1836 = vsel %vm480, %v1825, 0
      %1838 = vmatprep.subr.bf16.mxu0 0
      %1839 = vmatpush1.bf16.msra.mxu0 0
      %1840 = vmatprep.subr.bf16.mxu0 0
      %1841 = vmatpush1.bf16.msra.mxu0 0
      %1842 = vmatprep.subr.bf16.mxu0 0
      %1843 = vmatpush1.bf16.msra.mxu0 0
      %1844 = vmatprep.subr.bf16.mxu0 0
      %1845 = vmatpush1.bf16.msra.mxu0 0
      %1846 = vmatprep.subr.bf16.mxu0 0
      %1847 = vmatpush1.bf16.msra.mxu0 0
      %1848 = vmatprep.subr.bf16.mxu0 0
      %1849 = vmatpush1.bf16.msra.mxu0 0
      %1850 = vmatprep.subr.bf16.mxu0 %v1836
      %1851 = vmatpush1.bf16.msra.mxu0 %v1833
      %1852 = vmatprep.subr.bf16.mxu0 %v1823
      %1853 = vmatpush1.bf16.msra.mxu0 %v1822
      %1854 = vmatprep.subr.bf16.mxu0 0
      %1855 = vmatpush2.bf16.msra.mxu0 0
      %1856 = vmatprep.subr.bf16.mxu0 0
      %1857 = vmatpush2.bf16.msra.mxu0 0
      %1858 = vmatprep.subr.bf16.mxu0 0
      %1859 = vmatpush2.bf16.msra.mxu0 0
      %1860 = vmatprep.subr.bf16.mxu0 0
      %1861 = vmatpush2.bf16.msra.mxu0 0
      %1862 = vmatprep.subr.bf16.mxu0 0
      %1863 = vmatpush2.bf16.msra.mxu0 0
      %1864 = vmatprep.subr.bf16.mxu0 0
      %1865 = vmatpush2.bf16.msra.mxu0 0
      %1866 = vmatprep.subr.bf16.mxu0 0
      %1867 = vmatpush2.bf16.msra.mxu0 0
      %1868 = vmatprep.subr.bf16.mxu0 0
      %1869 = vmatpush2.bf16.msra.mxu0 0
      %1870 = vmatprep.mubr.bf16.mxu0 0
      %1871 = vmatmul.mubr.bf16.gmra.mxu0 %v1830
      %v1872 = vpop.f32.mrf.mxu0
      %v1873 = vadd.f32 0.0, %v1872
      %v1874 = vpop.f32.mrf.mxu0
      %v1875 = vadd.f32 0.0, %v1874
      %v1876 = vpop.f32.mrf.mxu0
      %v1877 = vpop.f32.mrf.mxu0
      %1878 = vdwg.mxu0
      %v1879 = vmul.f32 %v1873, %v532
      %v1880 = vmul.f32 %v1875, %v536
      %s1881 = scalar_lea.vmem %s11, 4
      %v1882 = vld [vmem:[%s1881] sm:$0xf]
      %1883 = vrot.lane.b32.xlu0 %v1804, 16
      %v1884 = vpop.permute.xlu0 %1883
      %1885 = vrot.lane.b32.xlu0 %v1805, 16
      %v1886 = vpop.permute.xlu0 %1885
      %1887 = vrot.lane.b32.xlu0 %v1806, 16
      %v1888 = vpop.permute.xlu0 %1887
      %1889 = vrot.lane.b32.xlu0 %v1807, 16
      %v1890 = vpop.permute.xlu0 %1889
      %1891 = vrot.lane.b32.xlu0 %v1808, 16
      %v1892 = vpop.permute.xlu0 %1891
      %1893 = vrot.lane.b32.xlu0 %v1809, 16
      %v1894 = vpop.permute.xlu0 %1893
      %v1895 = vsel %vm549, %v1884, %v1886
      %v1896 = vsel %vm549, %v1886, %v1888
      %v1897 = vsel %vm549, %v1890, %v1892
      %v1898 = vsel %vm549, %v1892, %v1894
      %v1902 = vsel %vm1828, %v1882, 0
      %v1905 = vsel %vm480, %v1897, 0
      %v1908 = vsel %vm480, %v1898, 0
      %1910 = vmatprep.subr.bf16.mxu0 0
      %1911 = vmatpush1.bf16.msra.mxu0 0
      %1912 = vmatprep.subr.bf16.mxu0 0
      %1913 = vmatpush1.bf16.msra.mxu0 0
      %1914 = vmatprep.subr.bf16.mxu0 0
      %1915 = vmatpush1.bf16.msra.mxu0 0
      %1916 = vmatprep.subr.bf16.mxu0 0
      %1917 = vmatpush1.bf16.msra.mxu0 0
      %1918 = vmatprep.subr.bf16.mxu0 0
      %1919 = vmatpush1.bf16.msra.mxu0 0
      %1920 = vmatprep.subr.bf16.mxu0 0
      %1921 = vmatpush1.bf16.msra.mxu0 0
      %1922 = vmatprep.subr.bf16.mxu0 %v1908
      %1923 = vmatpush1.bf16.msra.mxu0 %v1905
      %1924 = vmatprep.subr.bf16.mxu0 %v1896
      %1925 = vmatpush1.bf16.msra.mxu0 %v1895
      %1926 = vmatprep.subr.bf16.mxu0 0
      %1927 = vmatpush2.bf16.msra.mxu0 0
      %1928 = vmatprep.subr.bf16.mxu0 0
      %1929 = vmatpush2.bf16.msra.mxu0 0
      %1930 = vmatprep.subr.bf16.mxu0 0
      %1931 = vmatpush2.bf16.msra.mxu0 0
      %1932 = vmatprep.subr.bf16.mxu0 0
      %1933 = vmatpush2.bf16.msra.mxu0 0
      %1934 = vmatprep.subr.bf16.mxu0 0
      %1935 = vmatpush2.bf16.msra.mxu0 0
      %1936 = vmatprep.subr.bf16.mxu0 0
      %1937 = vmatpush2.bf16.msra.mxu0 0
      %1938 = vmatprep.subr.bf16.mxu0 0
      %1939 = vmatpush2.bf16.msra.mxu0 0
      %1940 = vmatprep.subr.bf16.mxu0 0
      %1941 = vmatpush2.bf16.msra.mxu0 0
      %1942 = vmatprep.mubr.bf16.mxu0 0
      %1943 = vmatmul.mubr.bf16.gmra.mxu0 %v1902
      %v1944 = vpop.f32.mrf.mxu0
      %v1945 = vadd.f32 0.0, %v1944
      %v1946 = vpop.f32.mrf.mxu0
      %v1947 = vadd.f32 0.0, %v1946
      %v1948 = vpop.f32.mrf.mxu0
      %v1949 = vpop.f32.mrf.mxu0
      %1950 = vdwg.mxu0
      %v1951 = vadd.f32 %v1879, %v1945
      %v1952 = vadd.f32 %v1880, %v1947
      %s1953 = scalar_lea.vmem %s11, 8
      %v1954 = vld [vmem:[%s1953] sm:$0xf]
      %1955 = vrot.lane.b32.xlu0 %v1804, 15
      %v1956 = vpop.permute.xlu0 %1955
      %1957 = vrot.lane.b32.xlu0 %v1805, 15
      %v1958 = vpop.permute.xlu0 %1957
      %1959 = vrot.lane.b32.xlu0 %v1806, 15
      %v1960 = vpop.permute.xlu0 %1959
      %1961 = vrot.lane.b32.xlu0 %v1807, 15
      %v1962 = vpop.permute.xlu0 %1961
      %1963 = vrot.lane.b32.xlu0 %v1808, 15
      %v1964 = vpop.permute.xlu0 %1963
      %1965 = vrot.lane.b32.xlu0 %v1809, 15
      %v1966 = vpop.permute.xlu0 %1965
      %v1967 = vsel %vm612, %v1956, %v1958
      %v1968 = vsel %vm612, %v1958, %v1960
      %v1969 = vsel %vm612, %v1962, %v1964
      %v1970 = vsel %vm612, %v1964, %v1966
      %v1974 = vsel %vm1828, %v1954, 0
      %v1977 = vsel %vm480, %v1969, 0
      %v1980 = vsel %vm480, %v1970, 0
      %1982 = vmatprep.subr.bf16.mxu0 0
      %1983 = vmatpush1.bf16.msra.mxu0 0
      %1984 = vmatprep.subr.bf16.mxu0 0
      %1985 = vmatpush1.bf16.msra.mxu0 0
      %1986 = vmatprep.subr.bf16.mxu0 0
      %1987 = vmatpush1.bf16.msra.mxu0 0
      %1988 = vmatprep.subr.bf16.mxu0 0
      %1989 = vmatpush1.bf16.msra.mxu0 0
      %1990 = vmatprep.subr.bf16.mxu0 0
      %1991 = vmatpush1.bf16.msra.mxu0 0
      %1992 = vmatprep.subr.bf16.mxu0 0
      %1993 = vmatpush1.bf16.msra.mxu0 0
      %1994 = vmatprep.subr.bf16.mxu0 %v1980
      %1995 = vmatpush1.bf16.msra.mxu0 %v1977
      %1996 = vmatprep.subr.bf16.mxu0 %v1968
      %1997 = vmatpush1.bf16.msra.mxu0 %v1967
      %1998 = vmatprep.subr.bf16.mxu0 0
      %1999 = vmatpush2.bf16.msra.mxu0 0
      %2000 = vmatprep.subr.bf16.mxu0 0
      %2001 = vmatpush2.bf16.msra.mxu0 0
      %2002 = vmatprep.subr.bf16.mxu0 0
      %2003 = vmatpush2.bf16.msra.mxu0 0
      %2004 = vmatprep.subr.bf16.mxu0 0
      %2005 = vmatpush2.bf16.msra.mxu0 0
      %2006 = vmatprep.subr.bf16.mxu0 0
      %2007 = vmatpush2.bf16.msra.mxu0 0
      %2008 = vmatprep.subr.bf16.mxu0 0
      %2009 = vmatpush2.bf16.msra.mxu0 0
      %2010 = vmatprep.subr.bf16.mxu0 0
      %2011 = vmatpush2.bf16.msra.mxu0 0
      %2012 = vmatprep.subr.bf16.mxu0 0
      %2013 = vmatpush2.bf16.msra.mxu0 0
      %2014 = vmatprep.mubr.bf16.mxu0 0
      %2015 = vmatmul.mubr.bf16.gmra.mxu0 %v1974
      %v2016 = vpop.f32.mrf.mxu0
      %v2017 = vadd.f32 0.0, %v2016
      %v2018 = vpop.f32.mrf.mxu0
      %v2019 = vadd.f32 0.0, %v2018
      %v2020 = vpop.f32.mrf.mxu0
      %v2021 = vpop.f32.mrf.mxu0
      %2022 = vdwg.mxu0
      %v2023 = vmul.f32 %v2017, %v669
      %v2024 = vmul.f32 %v2019, %v673
      %v2025 = vadd.f32 %v1951, %v2023
      %v2026 = vadd.f32 %v1952, %v2024
      %s2027 = scalar_lea.vmem %s11, 12
      %v2028 = vld [vmem:[%s2027] sm:$0xf]
      %2029 = vrot.lane.b32.xlu0 %v1804, 1
      %v2030 = vpop.permute.xlu0 %2029
      %2031 = vrot.lane.b32.xlu0 %v1805, 1
      %v2032 = vpop.permute.xlu0 %2031
      %2033 = vrot.lane.b32.xlu0 %v1806, 1
      %v2034 = vpop.permute.xlu0 %2033
      %2035 = vrot.lane.b32.xlu0 %v1807, 1
      %v2036 = vpop.permute.xlu0 %2035
      %2037 = vrot.lane.b32.xlu0 %v1808, 1
      %v2038 = vpop.permute.xlu0 %2037
      %2039 = vrot.lane.b32.xlu0 %v1809, 1
      %v2040 = vpop.permute.xlu0 %2039
      %v2041 = vsel %vm688, %v2030, %v2032
      %v2042 = vsel %vm688, %v2032, %v2034
      %v2043 = vsel %vm688, %v2036, %v2038
      %v2044 = vsel %vm688, %v2038, %v2040
      %v2048 = vsel %vm1828, %v2028, 0
      %v2051 = vsel %vm480, %v2043, 0
      %v2054 = vsel %vm480, %v2044, 0
      %2056 = vmatprep.subr.bf16.mxu0 0
      %2057 = vmatpush1.bf16.msra.mxu0 0
      %2058 = vmatprep.subr.bf16.mxu0 0
      %2059 = vmatpush1.bf16.msra.mxu0 0
      %2060 = vmatprep.subr.bf16.mxu0 0
      %2061 = vmatpush1.bf16.msra.mxu0 0
      %2062 = vmatprep.subr.bf16.mxu0 0
      %2063 = vmatpush1.bf16.msra.mxu0 0
      %2064 = vmatprep.subr.bf16.mxu0 0
      %2065 = vmatpush1.bf16.msra.mxu0 0
      %2066 = vmatprep.subr.bf16.mxu0 0
      %2067 = vmatpush1.bf16.msra.mxu0 0
      %2068 = vmatprep.subr.bf16.mxu0 %v2054
      %2069 = vmatpush1.bf16.msra.mxu0 %v2051
      %2070 = vmatprep.subr.bf16.mxu0 %v2042
      %2071 = vmatpush1.bf16.msra.mxu0 %v2041
      %2072 = vmatprep.subr.bf16.mxu0 0
      %2073 = vmatpush2.bf16.msra.mxu0 0
      %2074 = vmatprep.subr.bf16.mxu0 0
      %2075 = vmatpush2.bf16.msra.mxu0 0
      %2076 = vmatprep.subr.bf16.mxu0 0
      %2077 = vmatpush2.bf16.msra.mxu0 0
      %2078 = vmatprep.subr.bf16.mxu0 0
      %2079 = vmatpush2.bf16.msra.mxu0 0
      %2080 = vmatprep.subr.bf16.mxu0 0
      %2081 = vmatpush2.bf16.msra.mxu0 0
      %2082 = vmatprep.subr.bf16.mxu0 0
      %2083 = vmatpush2.bf16.msra.mxu0 0
      %2084 = vmatprep.subr.bf16.mxu0 0
      %2085 = vmatpush2.bf16.msra.mxu0 0
      %2086 = vmatprep.subr.bf16.mxu0 0
      %2087 = vmatpush2.bf16.msra.mxu0 0
      %2088 = vmatprep.mubr.bf16.mxu0 0
      %2089 = vmatmul.mubr.bf16.gmra.mxu0 %v2048
      %v2090 = vpop.f32.mrf.mxu0
      %v2091 = vadd.f32 0.0, %v2090
      %v2092 = vpop.f32.mrf.mxu0
      %v2093 = vadd.f32 0.0, %v2092
      %v2094 = vpop.f32.mrf.mxu0
      %v2095 = vpop.f32.mrf.mxu0
      %2096 = vdwg.mxu0
      %v2097 = vmul.f32 %v2091, %v532
      %v2098 = vmul.f32 %v2093, %v536
      %v2099 = vadd.f32 %v2025, %v2097
      %v2100 = vadd.f32 %v2026, %v2098
      %v2101 = vld [vmem:[#allocation2 + $0x4] sm:$0xff]
      %v2102 = vld [vmem:[#allocation2 + $0x14] sm:$0xff]
      %v2103 = vld [vmem:[#allocation2 + $0x24] sm:$0xff]
      %s2104 = scalar_lea.vmem %s11, 16
      %v2105 = vld [vmem:[%s2104] sm:$0xf]
      %v2109 = vunpack.c.l.b16 %v2101
      %v2110 = vunpack.c.h.b16 %v2101
      %v2111 = vunpack.c.l.b16 %v2102
      %v2112 = vunpack.c.h.b16 %v2102
      %v2113 = vunpack.c.l.b16 %v2103
      %v2114 = vunpack.c.h.b16 %v2103
      %v2115 = vpack.c.b16 %v2111, %v2109
      %v2116 = vpack.c.b16 %v2112, %v2110
      %v2117 = vpack.c.b16 %v2113, %v2113
      %v2118 = vpack.c.b16 %v2114, %v2114
      %v2122 = vsel %vm1828, %v2105, 0
      %v2125 = vsel %vm480, %v2117, 0
      %v2128 = vsel %vm480, %v2118, 0
      %2130 = vmatprep.subr.bf16.mxu0 0
      %2131 = vmatpush1.bf16.msra.mxu0 0
      %2132 = vmatprep.subr.bf16.mxu0 0
      %2133 = vmatpush1.bf16.msra.mxu0 0
      %2134 = vmatprep.subr.bf16.mxu0 0
      %2135 = vmatpush1.bf16.msra.mxu0 0
      %2136 = vmatprep.subr.bf16.mxu0 0
      %2137 = vmatpush1.bf16.msra.mxu0 0
      %2138 = vmatprep.subr.bf16.mxu0 0
      %2139 = vmatpush1.bf16.msra.mxu0 0
      %2140 = vmatprep.subr.bf16.mxu0 0
      %2141 = vmatpush1.bf16.msra.mxu0 0
      %2142 = vmatprep.subr.bf16.mxu0 %v2128
      %2143 = vmatpush1.bf16.msra.mxu0 %v2125
      %2144 = vmatprep.subr.bf16.mxu0 %v2116
      %2145 = vmatpush1.bf16.msra.mxu0 %v2115
      %2146 = vmatprep.subr.bf16.mxu0 0
      %2147 = vmatpush2.bf16.msra.mxu0 0
      %2148 = vmatprep.subr.bf16.mxu0 0
      %2149 = vmatpush2.bf16.msra.mxu0 0
      %2150 = vmatprep.subr.bf16.mxu0 0
      %2151 = vmatpush2.bf16.msra.mxu0 0
      %2152 = vmatprep.subr.bf16.mxu0 0
      %2153 = vmatpush2.bf16.msra.mxu0 0
      %2154 = vmatprep.subr.bf16.mxu0 0
      %2155 = vmatpush2.bf16.msra.mxu0 0
      %2156 = vmatprep.subr.bf16.mxu0 0
      %2157 = vmatpush2.bf16.msra.mxu0 0
      %2158 = vmatprep.subr.bf16.mxu0 0
      %2159 = vmatpush2.bf16.msra.mxu0 0
      %2160 = vmatprep.subr.bf16.mxu0 0
      %2161 = vmatpush2.bf16.msra.mxu0 0
      %2162 = vmatprep.mubr.bf16.mxu0 0
      %2163 = vmatmul.mubr.bf16.gmra.mxu0 %v2122
      %v2164 = vpop.f32.mrf.mxu0
      %v2165 = vadd.f32 0.0, %v2164
      %v2166 = vpop.f32.mrf.mxu0
      %v2167 = vadd.f32 0.0, %v2166
      %v2168 = vpop.f32.mrf.mxu0
      %v2169 = vpop.f32.mrf.mxu0
      %2170 = vdwg.mxu0
      %v2171 = vadd.f32 %v2099, %v2165
      %v2172 = vadd.f32 %v2100, %v2167
      %v2173 = vld [vmem:[#allocation2 + $0x4] sm:$0xff]
      %v2174 = vld [vmem:[#allocation2 + $0xc] sm:$0xf]
      %v2175 = vld [vmem:[#allocation2 + $0x14] sm:$0xff]
      %v2176 = vld [vmem:[#allocation2 + $0x1c] sm:$0xf]
      %v2177 = vld [vmem:[#allocation2 + $0x24] sm:$0xff]
      %v2178 = vld [vmem:[#allocation2 + $0x2c] sm:$0xf]
      %s2179 = scalar_lea.vmem %s11, 20
      %v2180 = vld [vmem:[%s2179] sm:$0xf]
      %v2187 = vunpack.c.l.b16 %v2173
      %v2188 = vunpack.c.h.b16 %v2173
      %v2189 = vunpack.c.l.b16 %v2174
      %v2190 = vunpack.c.l.b16 %v2175
      %v2191 = vunpack.c.h.b16 %v2175
      %v2192 = vunpack.c.l.b16 %v2176
      %v2193 = vunpack.c.l.b16 %v2177
      %v2194 = vunpack.c.h.b16 %v2177
      %v2195 = vunpack.c.l.b16 %v2178
      %v2196 = vpack.c.b16 %v2190, %v2187
      %v2197 = vpack.c.b16 %v2191, %v2188
      %v2198 = vpack.c.b16 %v2192, %v2189
      %v2199 = vpack.c.b16 %v2193, %v2193
      %v2200 = vpack.c.b16 %v2194, %v2194
      %v2201 = vpack.c.b16 %v2195, %v2195
      %2202 = vrot.lane.b32.xlu0 %v2196, 127
      %v2203 = vpop.permute.xlu0 %2202
      %2204 = vrot.lane.b32.xlu0 %v2197, 127
      %v2205 = vpop.permute.xlu0 %2204
      %2206 = vrot.lane.b32.xlu0 %v2198, 127
      %v2207 = vpop.permute.xlu0 %2206
      %2208 = vrot.lane.b32.xlu0 %v2199, 127
      %v2209 = vpop.permute.xlu0 %2208
      %2210 = vrot.lane.b32.xlu0 %v2200, 127
      %v2211 = vpop.permute.xlu0 %2210
      %2212 = vrot.lane.b32.xlu0 %v2201, 127
      %v2213 = vpop.permute.xlu0 %2212
      %v2214 = vsel %vm823, %v2203, %v2205
      %v2215 = vsel %vm823, %v2205, %v2207
      %v2216 = vsel %vm823, %v2209, %v2211
      %v2217 = vsel %vm823, %v2211, %v2213
      %v2221 = vsel %vm1828, %v2180, 0
      %v2224 = vsel %vm480, %v2216, 0
      %v2227 = vsel %vm480, %v2217, 0
      %2229 = vmatprep.subr.bf16.mxu0 0
      %2230 = vmatpush1.bf16.msra.mxu0 0
      %2231 = vmatprep.subr.bf16.mxu0 0
      %2232 = vmatpush1.bf16.msra.mxu0 0
      %2233 = vmatprep.subr.bf16.mxu0 0
      %2234 = vmatpush1.bf16.msra.mxu0 0
      %2235 = vmatprep.subr.bf16.mxu0 0
      %2236 = vmatpush1.bf16.msra.mxu0 0
      %2237 = vmatprep.subr.bf16.mxu0 0
      %2238 = vmatpush1.bf16.msra.mxu0 0
      %2239 = vmatprep.subr.bf16.mxu0 0
      %2240 = vmatpush1.bf16.msra.mxu0 0
      %2241 = vmatprep.subr.bf16.mxu0 %v2227
      %2242 = vmatpush1.bf16.msra.mxu0 %v2224
      %2243 = vmatprep.subr.bf16.mxu0 %v2215
      %2244 = vmatpush1.bf16.msra.mxu0 %v2214
      %2245 = vmatprep.subr.bf16.mxu0 0
      %2246 = vmatpush2.bf16.msra.mxu0 0
      %2247 = vmatprep.subr.bf16.mxu0 0
      %2248 = vmatpush2.bf16.msra.mxu0 0
      %2249 = vmatprep.subr.bf16.mxu0 0
      %2250 = vmatpush2.bf16.msra.mxu0 0
      %2251 = vmatprep.subr.bf16.mxu0 0
      %2252 = vmatpush2.bf16.msra.mxu0 0
      %2253 = vmatprep.subr.bf16.mxu0 0
      %2254 = vmatpush2.bf16.msra.mxu0 0
      %2255 = vmatprep.subr.bf16.mxu0 0
      %2256 = vmatpush2.bf16.msra.mxu0 0
      %2257 = vmatprep.subr.bf16.mxu0 0
      %2258 = vmatpush2.bf16.msra.mxu0 0
      %2259 = vmatprep.subr.bf16.mxu0 0
      %2260 = vmatpush2.bf16.msra.mxu0 0
      %2261 = vmatprep.mubr.bf16.mxu0 0
      %2262 = vmatmul.mubr.bf16.gmra.mxu0 %v2221
      %v2263 = vpop.f32.mrf.mxu0
      %v2264 = vadd.f32 0.0, %v2263
      %v2265 = vpop.f32.mrf.mxu0
      %v2266 = vadd.f32 0.0, %v2265
      %v2267 = vpop.f32.mrf.mxu0
      %v2268 = vpop.f32.mrf.mxu0
      %2269 = vdwg.mxu0
      %v2270 = vmul.f32 %v2264, %v669
      %v2271 = vmul.f32 %v2266, %v673
      %v2272 = vadd.f32 %v2171, %v2270
      %v2273 = vadd.f32 %v2172, %v2271
      %s2274 = scalar_lea.vmem %s11, 24
      %v2275 = vld [vmem:[%s2274] sm:$0xf]
      %2276 = vrot.lane.b32.xlu0 %v2196, 113
      %v2277 = vpop.permute.xlu0 %2276
      %2278 = vrot.lane.b32.xlu0 %v2197, 113
      %v2279 = vpop.permute.xlu0 %2278
      %2280 = vrot.lane.b32.xlu0 %v2198, 113
      %v2281 = vpop.permute.xlu0 %2280
      %2282 = vrot.lane.b32.xlu0 %v2199, 113
      %v2283 = vpop.permute.xlu0 %2282
      %2284 = vrot.lane.b32.xlu0 %v2200, 113
      %v2285 = vpop.permute.xlu0 %2284
      %2286 = vrot.lane.b32.xlu0 %v2201, 113
      %v2287 = vpop.permute.xlu0 %2286
      %v2288 = vsel %vm888, %v2277, %v2279
      %v2289 = vsel %vm888, %v2279, %v2281
      %v2290 = vsel %vm888, %v2283, %v2285
      %v2291 = vsel %vm888, %v2285, %v2287
      %v2295 = vsel %vm1828, %v2275, 0
      %v2298 = vsel %vm480, %v2290, 0
      %v2301 = vsel %vm480, %v2291, 0
      %2303 = vmatprep.subr.bf16.mxu0 0
      %2304 = vmatpush1.bf16.msra.mxu0 0
      %2305 = vmatprep.subr.bf16.mxu0 0
      %2306 = vmatpush1.bf16.msra.mxu0 0
      %2307 = vmatprep.subr.bf16.mxu0 0
      %2308 = vmatpush1.bf16.msra.mxu0 0
      %2309 = vmatprep.subr.bf16.mxu0 0
      %2310 = vmatpush1.bf16.msra.mxu0 0
      %2311 = vmatprep.subr.bf16.mxu0 0
      %2312 = vmatpush1.bf16.msra.mxu0 0
      %2313 = vmatprep.subr.bf16.mxu0 0
      %2314 = vmatpush1.bf16.msra.mxu0 0
      %2315 = vmatprep.subr.bf16.mxu0 %v2301
      %2316 = vmatpush1.bf16.msra.mxu0 %v2298
      %2317 = vmatprep.subr.bf16.mxu0 %v2289
      %2318 = vmatpush1.bf16.msra.mxu0 %v2288
      %2319 = vmatprep.subr.bf16.mxu0 0
      %2320 = vmatpush2.bf16.msra.mxu0 0
      %2321 = vmatprep.subr.bf16.mxu0 0
      %2322 = vmatpush2.bf16.msra.mxu0 0
      %2323 = vmatprep.subr.bf16.mxu0 0
      %2324 = vmatpush2.bf16.msra.mxu0 0
      %2325 = vmatprep.subr.bf16.mxu0 0
      %2326 = vmatpush2.bf16.msra.mxu0 0
      %2327 = vmatprep.subr.bf16.mxu0 0
      %2328 = vmatpush2.bf16.msra.mxu0 0
      %2329 = vmatprep.subr.bf16.mxu0 0
      %2330 = vmatpush2.bf16.msra.mxu0 0
      %2331 = vmatprep.subr.bf16.mxu0 0
      %2332 = vmatpush2.bf16.msra.mxu0 0
      %2333 = vmatprep.subr.bf16.mxu0 0
      %2334 = vmatpush2.bf16.msra.mxu0 0
      %2335 = vmatprep.mubr.bf16.mxu0 0
      %2336 = vmatmul.mubr.bf16.gmra.mxu0 %v2295
      %v2337 = vpop.f32.mrf.mxu0
      %v2338 = vadd.f32 0.0, %v2337
      %v2339 = vpop.f32.mrf.mxu0
      %v2340 = vadd.f32 0.0, %v2339
      %v2341 = vpop.f32.mrf.mxu0
      %v2342 = vpop.f32.mrf.mxu0
      %2343 = vdwg.mxu0
      %v2344 = vmul.f32 %v2338, %v532
      %v2345 = vmul.f32 %v2340, %v536
      %v2346 = vadd.f32 %v2272, %v2344
      %v2347 = vadd.f32 %v2273, %v2345
      %s2348 = scalar_lea.vmem %s11, 28
      %v2349 = vld [vmem:[%s2348] sm:$0xf]
      %2350 = vrot.lane.b32.xlu0 %v2196, 112
      %v2351 = vpop.permute.xlu0 %2350
      %2352 = vrot.lane.b32.xlu0 %v2197, 112
      %v2353 = vpop.permute.xlu0 %2352
      %2354 = vrot.lane.b32.xlu0 %v2198, 112
      %v2355 = vpop.permute.xlu0 %2354
      %2356 = vrot.lane.b32.xlu0 %v2199, 112
      %v2357 = vpop.permute.xlu0 %2356
      %2358 = vrot.lane.b32.xlu0 %v2200, 112
      %v2359 = vpop.permute.xlu0 %2358
      %2360 = vrot.lane.b32.xlu0 %v2201, 112
      %v2361 = vpop.permute.xlu0 %2360
      %v2362 = vsel %vm953, %v2351, %v2353
      %v2363 = vsel %vm953, %v2353, %v2355
      %v2364 = vsel %vm953, %v2357, %v2359
      %v2365 = vsel %vm953, %v2359, %v2361
      %v2369 = vsel %vm1828, %v2349, 0
      %v2372 = vsel %vm480, %v2364, 0
      %v2375 = vsel %vm480, %v2365, 0
      %2377 = vmatprep.subr.bf16.mxu0 0
      %2378 = vmatpush1.bf16.msra.mxu0 0
      %2379 = vmatprep.subr.bf16.mxu0 0
      %2380 = vmatpush1.bf16.msra.mxu0 0
      %2381 = vmatprep.subr.bf16.mxu0 0
      %2382 = vmatpush1.bf16.msra.mxu0 0
      %2383 = vmatprep.subr.bf16.mxu0 0
      %2384 = vmatpush1.bf16.msra.mxu0 0
      %2385 = vmatprep.subr.bf16.mxu0 0
      %2386 = vmatpush1.bf16.msra.mxu0 0
      %2387 = vmatprep.subr.bf16.mxu0 0
      %2388 = vmatpush1.bf16.msra.mxu0 0
      %2389 = vmatprep.subr.bf16.mxu0 %v2375
      %2390 = vmatpush1.bf16.msra.mxu0 %v2372
      %2391 = vmatprep.subr.bf16.mxu0 %v2363
      %2392 = vmatpush1.bf16.msra.mxu0 %v2362
      %2393 = vmatprep.subr.bf16.mxu0 0
      %2394 = vmatpush2.bf16.msra.mxu0 0
      %2395 = vmatprep.subr.bf16.mxu0 0
      %2396 = vmatpush2.bf16.msra.mxu0 0
      %2397 = vmatprep.subr.bf16.mxu0 0
      %2398 = vmatpush2.bf16.msra.mxu0 0
      %2399 = vmatprep.subr.bf16.mxu0 0
      %2400 = vmatpush2.bf16.msra.mxu0 0
      %2401 = vmatprep.subr.bf16.mxu0 0
      %2402 = vmatpush2.bf16.msra.mxu0 0
      %2403 = vmatprep.subr.bf16.mxu0 0
      %2404 = vmatpush2.bf16.msra.mxu0 0
      %2405 = vmatprep.subr.bf16.mxu0 0
      %2406 = vmatpush2.bf16.msra.mxu0 0
      %2407 = vmatprep.subr.bf16.mxu0 0
      %2408 = vmatpush2.bf16.msra.mxu0 0
      %2409 = vmatprep.mubr.bf16.mxu0 0
      %2410 = vmatmul.mubr.bf16.gmra.mxu0 %v2369
      %v2411 = vpop.f32.mrf.mxu0
      %v2412 = vadd.f32 0.0, %v2411
      %v2413 = vpop.f32.mrf.mxu0
      %v2414 = vadd.f32 0.0, %v2413
      %v2415 = vpop.f32.mrf.mxu0
      %v2416 = vpop.f32.mrf.mxu0
      %2417 = vdwg.mxu0
      %v2418 = vadd.f32 %v2346, %v2412
      %v2419 = vadd.f32 %v2347, %v2414
      %s2420 = scalar_lea.vmem %s11, 32
      %v2421 = vld [vmem:[%s2420] sm:$0xf]
      %2422 = vrot.lane.b32.xlu0 %v2196, 111
      %v2423 = vpop.permute.xlu0 %2422
      %2424 = vrot.lane.b32.xlu0 %v2197, 111
      %v2425 = vpop.permute.xlu0 %2424
      %2426 = vrot.lane.b32.xlu0 %v2198, 111
      %v2427 = vpop.permute.xlu0 %2426
      %2428 = vrot.lane.b32.xlu0 %v2199, 111
      %v2429 = vpop.permute.xlu0 %2428
      %2430 = vrot.lane.b32.xlu0 %v2200, 111
      %v2431 = vpop.permute.xlu0 %2430
      %2432 = vrot.lane.b32.xlu0 %v2201, 111
      %v2433 = vpop.permute.xlu0 %2432
      %v2434 = vsel %vm1016, %v2423, %v2425
      %v2435 = vsel %vm1016, %v2425, %v2427
      %v2436 = vsel %vm1016, %v2429, %v2431
      %v2437 = vsel %vm1016, %v2431, %v2433
      %v2441 = vsel %vm1828, %v2421, 0
      %v2444 = vsel %vm480, %v2436, 0
      %v2447 = vsel %vm480, %v2437, 0
      %2449 = vmatprep.subr.bf16.mxu0 0
      %2450 = vmatpush1.bf16.msra.mxu0 0
      %2451 = vmatprep.subr.bf16.mxu0 0
      %2452 = vmatpush1.bf16.msra.mxu0 0
      %2453 = vmatprep.subr.bf16.mxu0 0
      %2454 = vmatpush1.bf16.msra.mxu0 0
      %2455 = vmatprep.subr.bf16.mxu0 0
      %2456 = vmatpush1.bf16.msra.mxu0 0
      %2457 = vmatprep.subr.bf16.mxu0 0
      %2458 = vmatpush1.bf16.msra.mxu0 0
      %2459 = vmatprep.subr.bf16.mxu0 0
      %2460 = vmatpush1.bf16.msra.mxu0 0
      %2461 = vmatprep.subr.bf16.mxu0 %v2447
      %2462 = vmatpush1.bf16.msra.mxu0 %v2444
      %2463 = vmatprep.subr.bf16.mxu0 %v2435
      %2464 = vmatpush1.bf16.msra.mxu0 %v2434
      %2465 = vmatprep.subr.bf16.mxu0 0
      %2466 = vmatpush2.bf16.msra.mxu0 0
      %2467 = vmatprep.subr.bf16.mxu0 0
      %2468 = vmatpush2.bf16.msra.mxu0 0
      %2469 = vmatprep.subr.bf16.mxu0 0
      %2470 = vmatpush2.bf16.msra.mxu0 0
      %2471 = vmatprep.subr.bf16.mxu0 0
      %2472 = vmatpush2.bf16.msra.mxu0 0
      %2473 = vmatprep.subr.bf16.mxu0 0
      %2474 = vmatpush2.bf16.msra.mxu0 0
      %2475 = vmatprep.subr.bf16.mxu0 0
      %2476 = vmatpush2.bf16.msra.mxu0 0
      %2477 = vmatprep.subr.bf16.mxu0 0
      %2478 = vmatpush2.bf16.msra.mxu0 0
      %2479 = vmatprep.subr.bf16.mxu0 0
      %2480 = vmatpush2.bf16.msra.mxu0 0
      %2481 = vmatprep.mubr.bf16.mxu0 0
      %2482 = vmatmul.mubr.bf16.gmra.mxu0 %v2441
      %v2483 = vpop.f32.mrf.mxu0
      %v2484 = vadd.f32 0.0, %v2483
      %v2485 = vpop.f32.mrf.mxu0
      %v2486 = vadd.f32 0.0, %v2485
      %v2487 = vpop.f32.mrf.mxu0
      %v2488 = vpop.f32.mrf.mxu0
      %2489 = vdwg.mxu0
      %v2490 = vmul.f32 %v2484, %v669
      %v2491 = vmul.f32 %v2486, %v673
      %v2492 = vadd.f32 %v2418, %v2490
      %v2493 = vadd.f32 %v2419, %v2491
      %2494 = vst [vmem:[%s413 + $0x30] sm:$0xff] %v2492
      %2495 = vst [vmem:[%s413 + $0x38] sm:$0xff] %v2493
      %p2496 = scmp.lt.s32.totalorder %s23, 1
      %s2497 = scalar_select %p2496, %s23, 1
      %s2498 = smul.addr %s2497, 8
      %s2499 = smul.addr %s2498, 8
      %s2500 = scalar_lea.vmem %s12, %s2499
      // Predicated region
      $region69: #{dense_block_forward.1} parent=67 // pred_check
        %p2501 = pneg %p298
      $region70: #{dense_block_forward.1} parent=67 // pred_check_branch
        %2503 = sbr.rel (%p2501) target = $region72
      $region71: #{dense_block_forward.1} parent=67 // pred_region
        _
      $region72: #{dense_block_forward.1} parent=67 // pred_fallthru
        _
    $region68: #{dense_block_forward.1} parent=5 // pred_fallthru
      _
    %p2504 = scmp.le.s32.totalorder 2, %s18
    // Predicated region
    $region73: #{dense_block_forward.1} parent=5 // pred_check
      %p2505 = pneg %p2504
    $region74: #{dense_block_forward.1} parent=5 // pred_check_branch
      %2507 = sbr.rel (%p2505) target = $region76
    $region75: #{dense_block_forward.1} parent=5 // pred_region
      %s2508 = ssub.s32 %s18, 2
      // Predicated region
      $region77: #{dense_block_forward.1} parent=75 // pred_check
        %p2509 = pneg %p304
      $region78: #{dense_block_forward.1} parent=75 // pred_check_branch
        %2511 = sbr.rel (%p2509) target = $region80
      $region79: #{dense_block_forward.1} parent=75 // pred_region
        %p2512 = scmp.lt.s32.totalorder %s24, 1
        %s2513 = scalar_select %p2512, %s24, 1
        %s2514 = smul.addr %s2513, 8
        %s2515 = smul.addr %s2514, 8
        %s2516 = scalar_lea.vmem %s12, %s2515
      $region80: #{dense_block_forward.1} parent=75 // pred_fallthru
        _
    $region76: #{dense_block_forward.1} parent=5 // pred_fallthru
      _
  $region6: #{dense_block_forward.1} parent=0 // loop_footer
    %s22 = sadd.s32 1, %s18
  $region7: #{dense_block_forward.1} parent=0 // loop_footer_branch
    %17 = sbr.rel target = $region3
  $region8: #{dense_block_forward.1} parent=0 // loop_exit
    _

</llo_original>
